<compile_context>
chip_gen: v6e
topology: v6e:2x2x1
jax: 0.10.0
libtpu: 0.0.40
codegen_flags: <defaults>
</compile_context>

<pallas_src>
import functools

import jax
import jax.numpy as jnp
from jax import lax
from jax.experimental import pallas as pl
from jax.experimental.pallas import tpu as pltpu

BN_EPS = 1e-5


# ----------------------------------------------------------------------------
# Hardware-aware budgets
# ----------------------------------------------------------------------------
@functools.lru_cache(maxsize=None)
def _vmem_limit_bytes():
    """Scoped-VMEM limit: ~3/4 of physical VMEM, capped at 100 MiB."""
    cap = 64 * 1024 * 1024  # conservative default (v7x per-TensorCore)
    try:
        info = pltpu.get_tpu_info()
        for attr in ("vmem_capacity_bytes", "vmem_bytes", "vmem_size_bytes"):
            v = getattr(info, attr, None)
            if v:
                cap = int(v)
                break
    except Exception:
        pass
    return int(min(cap * 3 // 4, 100 * 1024 * 1024))


def _pick_tile(s, bytes_per_token):
    """Largest multiple of 128 dividing s whose double-buffered working set
    fits in ~half the scoped VMEM budget."""
    budget = _vmem_limit_bytes() // 2
    cap = max(128, (budget // max(bytes_per_token, 1)) // 128 * 128)
    best = None
    t = 128
    limit = min(s, cap)
    while t <= limit:
        if s % t == 0:
            best = t
        t += 128
    return best if best is not None else s


# ----------------------------------------------------------------------------
# Kernels (channels-first tiles: (C, tile_s), tokens on lanes)
# ----------------------------------------------------------------------------
def _stats1_kernel(x_ref, w1_ref, s0_ref, s1_ref):
    """Accumulate per-hidden-channel Sum(h) and Sum(h^2), h = W1 @ x."""
    @pl.when(pl.program_id(2) == 0)
    def _init():
        s0_ref[...] = jnp.zeros_like(s0_ref)
        s1_ref[...] = jnp.zeros_like(s1_ref)

    x = x_ref[0].astype(jnp.float32)                          # (C_in, ts)
    h = lax.dot_general(w1_ref[...], x, (((1,), (0,)), ((), ())),
                        preferred_element_type=jnp.float32)   # (hidden, ts)
    s0_ref[0] = s0_ref[0] + jnp.sum(h, axis=1, keepdims=True)
    s1_ref[0] = s1_ref[0] + jnp.sum(h * h, axis=1, keepdims=True)


def _fused_kernel(x_ref, w1_ref, scale1_ref, shift1_ref, alpha_ref, w2_ref,
                  y_ref, sy_ref, syy_ref):
    """y_raw = W2 @ PReLU(BN1(W1 @ x)); stream y_raw out lane-dense and
    accumulate per-output-channel Sum(y), Sum(y^2) for BN2."""
    @pl.when(pl.program_id(2) == 0)
    def _init():
        sy_ref[...] = jnp.zeros_like(sy_ref)
        syy_ref[...] = jnp.zeros_like(syy_ref)

    x = x_ref[0].astype(jnp.float32)                          # (C_in, ts)
    h = lax.dot_general(w1_ref[...], x, (((1,), (0,)), ((), ())),
                        preferred_element_type=jnp.float32)   # (hidden, ts)
    a = scale1_ref[...] * h + shift1_ref[...]
    a = jnp.where(a > 0, a, alpha_ref[...] * a)               # PReLU
    y = lax.dot_general(w2_ref[...], a, (((1,), (0,)), ((), ())),
                        preferred_element_type=jnp.float32)   # (C_out, ts)
    y_ref[0] = y.astype(y_ref.dtype)                          # lane-dense store
    sy_ref[0] = sy_ref[0] + jnp.sum(y, axis=1, keepdims=True)
    syy_ref[0] = syy_ref[0] + jnp.sum(y * y, axis=1, keepdims=True)


def _fixup_kernel(y_ref, scale2_ref, shift2_ref, o_ref):
    """out = scale2 * y_raw + shift2 (BN2 affine), in-place on y_raw."""
    y = y_ref[0].astype(jnp.float32)
    o_ref[0] = (scale2_ref[...] * y + shift2_ref[...]).astype(o_ref.dtype)


# ----------------------------------------------------------------------------
# pallas_call wrappers
# ----------------------------------------------------------------------------
def _stats1_call(x3, w1, tile_s, nsplit):
    b, c_in, s = x3.shape
    hidden = w1.shape[0]
    tps = (s // tile_s) // nsplit
    return pl.pallas_call(
        _stats1_kernel,
        out_shape=(jax.ShapeDtypeStruct((nsplit * b, hidden, 1), jnp.float32),
                   jax.ShapeDtypeStruct((nsplit * b, hidden, 1), jnp.float32)),
        grid=(nsplit, b, tps),
        in_specs=[
            pl.BlockSpec((1, c_in, tile_s), lambda c, i, t: (i, 0, c * tps + t)),
            pl.BlockSpec((hidden, c_in), lambda c, i, t: (0, 0)),
        ],
        out_specs=(
            pl.BlockSpec((1, hidden, 1), lambda c, i, t: (c * b + i, 0, 0)),
            pl.BlockSpec((1, hidden, 1), lambda c, i, t: (c * b + i, 0, 0)),
        ),
        compiler_params=pltpu.CompilerParams(
            dimension_semantics=("parallel", "parallel", "arbitrary"),
            vmem_limit_bytes=_vmem_limit_bytes()),
    )(x3, w1)


def _fused_call(x3, w1, scale1, shift1, alpha, w2, tile_s, nsplit):
    b, c_in, s = x3.shape
    hidden = w1.shape[0]
    c_out = w2.shape[0]
    tps = (s // tile_s) // nsplit
    return pl.pallas_call(
        _fused_kernel,
        out_shape=(jax.ShapeDtypeStruct((b, c_out, s), jnp.float32),
                   jax.ShapeDtypeStruct((nsplit * b, c_out, 1), jnp.float32),
                   jax.ShapeDtypeStruct((nsplit * b, c_out, 1), jnp.float32)),
        grid=(nsplit, b, tps),
        in_specs=[
            pl.BlockSpec((1, c_in, tile_s), lambda c, i, t: (i, 0, c * tps + t)),
            pl.BlockSpec((hidden, c_in), lambda c, i, t: (0, 0)),
            pl.BlockSpec((hidden, 1), lambda c, i, t: (0, 0)),
            pl.BlockSpec((hidden, 1), lambda c, i, t: (0, 0)),
            pl.BlockSpec((hidden, 1), lambda c, i, t: (0, 0)),
            pl.BlockSpec((c_out, hidden), lambda c, i, t: (0, 0)),
        ],
        out_specs=(
            pl.BlockSpec((1, c_out, tile_s), lambda c, i, t: (i, 0, c * tps + t)),
            pl.BlockSpec((1, c_out, 1), lambda c, i, t: (c * b + i, 0, 0)),
            pl.BlockSpec((1, c_out, 1), lambda c, i, t: (c * b + i, 0, 0)),
        ),
        compiler_params=pltpu.CompilerParams(
            dimension_semantics=("parallel", "parallel", "arbitrary"),
            vmem_limit_bytes=_vmem_limit_bytes()),
    )(x3, w1, scale1, shift1, alpha, w2)


def _fixup_call(y_raw, scale2, shift2, tile_s):
    b, c_out, s = y_raw.shape
    return pl.pallas_call(
        _fixup_kernel,
        out_shape=jax.ShapeDtypeStruct((b, c_out, s), y_raw.dtype),
        grid=(b, s // tile_s),
        in_specs=[
            pl.BlockSpec((1, c_out, tile_s), lambda i, t: (i, 0, t)),
            pl.BlockSpec((c_out, 1), lambda i, t: (0, 0)),
            pl.BlockSpec((c_out, 1), lambda i, t: (0, 0)),
        ],
        out_specs=pl.BlockSpec((1, c_out, tile_s), lambda i, t: (i, 0, t)),
        input_output_aliases={0: 0},   # rewrite y_raw in place
        compiler_params=pltpu.CompilerParams(
            dimension_semantics=("parallel", "parallel"),
            vmem_limit_bytes=_vmem_limit_bytes()),
    )(y_raw, scale2, shift2)


# ----------------------------------------------------------------------------
# Forward pass (channels-first end to end; no transposes)
# ----------------------------------------------------------------------------
@functools.partial(jax.jit, static_argnames=("tile_s",))
def mlp_forward(x_bchwd, params, tile_s=None):
    """x_bchwd: (B, C, H, W, D) -- PyTorch layout. Returns same layout.
    x may be stored in bf16 in HBM; in-kernel math stays f32."""
    b, c_in, h, w, d = x_bchwd.shape
    s = h * w * d
    w1 = params["w1"]          # (hidden, C_in)
    w2 = params["w2"]          # (C_out, hidden)
    c_out = w2.shape[0]

    x_item = jnp.dtype(x_bchwd.dtype).itemsize
    if tile_s is None:
        # double-buffered x tile + y tile (fused pass) / y in+out (fixup pass)
        bpt = max(2 * (c_in * x_item + c_out * 4), 4 * c_out * 4)
        tile_s = _pick_tile(s, bpt)
    assert s % tile_s == 0, "token count must be divisible by tile_s"
    n_tiles = s // tile_s
    nsplit = 2 if (n_tiles >= 2 and n_tiles % 2 == 0) else 1
    n_tok = b * s

    x3 = x_bchwd.reshape(b, c_in, s)   # free reshape, channels-first kept

    # ---- pass A: BN1 batch statistics (biased variance, train mode) ----
    s0, s1 = _stats1_call(x3, w1, tile_s, nsplit)
    sum_h = jnp.sum(s0, axis=0)[:, 0]
    sum_hh = jnp.sum(s1, axis=0)[:, 0]
    mu1 = sum_h / n_tok
    var1 = jnp.maximum(sum_hh / n_tok - mu1 * mu1, 0.0)
    scale1 = params["g1"] * lax.rsqrt(var1 + BN_EPS)
    shift1 = params["be1"] - scale1 * mu1
    # (conv bias b1 omitted: exactly cancelled by the BN mean subtraction)

    # ---- pass B (fused): y_raw = W2 @ PReLU(BN1(h)), plus BN2 moments ----
    y_raw, sy, syy = _fused_call(
        x3, w1, scale1[:, None], shift1[:, None], params["alpha"][:, None],
        w2, tile_s, nsplit)
    sum_y = jnp.sum(sy, axis=0)[:, 0]
    sum_yy = jnp.sum(syy, axis=0)[:, 0]
    mu_y = sum_y / n_tok
    var_y = jnp.maximum(sum_yy / n_tok - mu_y * mu_y, 0.0)
    scale2 = params["g2"] * lax.rsqrt(var_y + BN_EPS)
    shift2 = params["be2"] - scale2 * mu_y
    # (conv bias b2 omitted: cancelled by the BN2 mean subtraction)

    # ---- pass C: per-channel BN2 affine fixup, in place on y_raw ----
    y3 = _fixup_call(y_raw, scale2[:, None], shift2[:, None], tile_s)
    return y3.reshape(b, c_out, h, w, d)


# ----------------------------------------------------------------------------
# Params + pure-JAX reference (faithful to the PyTorch forward, train-mode BN)
# ----------------------------------------------------------------------------
def init_params(key, in_features, hidden_features, out_features):
    k1, k2 = jax.random.split(key)
    # trunc_normal_(std=0.02): truncate at +/- 2 std
    w1 = jax.random.truncated_normal(
        k1, -2.0, 2.0, (hidden_features, in_features), jnp.float32) * 0.02
    w2 = jax.random.truncated_normal(
        k2, -2.0, 2.0, (out_features, hidden_features), jnp.float32) * 0.02
    return {
        "w1": w1,
        "b1": jnp.zeros((hidden_features,), jnp.float32),
        "g1": jnp.ones((hidden_features,), jnp.float32),
        "be1": jnp.zeros((hidden_features,), jnp.float32),
        "alpha": jnp.full((hidden_features,), 0.25, jnp.float32),
        "w2": w2,
        "b2": jnp.zeros((out_features,), jnp.float32),
        "g2": jnp.ones((out_features,), jnp.float32),
        "be2": jnp.zeros((out_features,), jnp.float32),
    }


def _reference(x_bchwd, p):
    b, c, h, w, d = x_bchwd.shape
    xt = jnp.transpose(x_bchwd, (0, 2, 3, 4, 1)).reshape(-1, c)   # (N, C_in)
    hdd = xt @ p["w1"].T + p["b1"]
    mu = hdd.mean(0)
    var = ((hdd - mu) ** 2).mean(0)
    hdd = (hdd - mu) / jnp.sqrt(var + BN_EPS) * p["g1"] + p["be1"]
    hdd = jnp.where(hdd > 0, hdd, p["alpha"] * hdd)
    y = hdd @ p["w2"].T + p["b2"]
    mu2 = y.mean(0)
    var2 = ((y - mu2) ** 2).mean(0)
    y = (y - mu2) / jnp.sqrt(var2 + BN_EPS) * p["g2"] + p["be2"]
    c_out = p["w2"].shape[0]
    y = y.reshape(b, h, w, d, c_out)
    return jnp.transpose(y, (0, 4, 1, 2, 3))


if __name__ == "__main__":
    key = jax.random.PRNGKey(0)
    kx, kp = jax.random.split(key)

    B, C, H, W, D = 2, 4, 16, 16, 8     # S = 2048 tokens per batch element
    HIDDEN, OUT = 8, 4

    x = jax.random.normal(kx, (B, C, H, W, D), jnp.float32)
    params = init_params(kp, C, HIDDEN, OUT)
    ref = _reference(x, params)

    # Auto (VMEM-budgeted) tile: whole token axis fits in one tile here.
    out = jax.block_until_ready(mlp_forward(x, params))
    assert out.shape == (B, OUT, H, W, D)
    err = float(jnp.max(jnp.abs(out - ref)))
    assert jnp.allclose(out, ref, atol=1e-4, rtol=1e-4), \
        f"auto-tile mismatch, max err {err}"

    # Small explicit tile: exercises the token grid, cross-tile moment
    # accumulation and the size-2 core-split ("parallel") axis.
    out2 = jax.block_until_ready(mlp_forward(x, params, tile_s=256))
    err2 = float(jnp.max(jnp.abs(out2 - ref)))
    assert jnp.allclose(out2, ref, atol=1e-4, rtol=1e-4), \
        f"tiled mismatch, max err {err2}"

    print("KERNEL_OK")
</pallas_src>

<mosaic_0001>
module attributes {stable_mosaic.version = 11 : i64} {
  func.func @_stats1_kernel(%arg0: i32, %arg1: i32, %arg2: i32, %arg3: memref<1x4x2048xf32, #tpu.memory_space<vmem>>, %arg4: memref<8x4xf32, #tpu.memory_space<vmem>>, %arg5: memref<1x8x1xf32, #tpu.memory_space<vmem>>, %arg6: memref<1x8x1xf32, #tpu.memory_space<vmem>>) attributes {dimension_semantics = [#tpu.dimension_semantics<parallel>, #tpu.dimension_semantics<parallel>, #tpu.dimension_semantics<arbitrary>], iteration_bounds = array<i64: 1, 2, 1>, scalar_prefetch = 0 : i64, scratch_operands = 0 : i64, tpu.core_type = #tpu.core_type<tc>, window_params = [{transform_indices = @transform_0, window_bounds = array<i64: 1, 4, 2048>}, {pipeline_mode = #tpu.pipeline_mode<synchronous>, transform_indices = @transform_1, window_bounds = array<i64: 8, 4>}, {transform_indices = @transform_2, window_bounds = array<i64: 1, 8, 1>}, {transform_indices = @transform_3, window_bounds = array<i64: 1, 8, 1>}]} {
    %c0_i32 = arith.constant 0 : i32
    %0 = arith.cmpi eq, %arg2, %c0_i32 : i32
    %1 = arith.extui %0 : i1 to i32
    %c0_i32_0 = arith.constant 0 : i32
    %2 = arith.cmpi ne, %1, %c0_i32_0 : i32
    scf.if %2 {
      %cst_19 = arith.constant 0.000000e+00 : f32
      %24 = vector.broadcast %cst_19 : f32 to vector<1x8x1xf32>
      %c0_20 = arith.constant 0 : index
      %c0_21 = arith.constant 0 : index
      %c0_22 = arith.constant 0 : index
      %25 = vector.load %arg5[%c0_20, %c0_21, %c0_22] : memref<1x8x1xf32, #tpu.memory_space<vmem>>, vector<1x8x1xf32>
      tpu.vector_store %arg5[%c0_20, %c0_21, %c0_22], %24 {strides = array<i32>} : memref<1x8x1xf32, #tpu.memory_space<vmem>>, vector<1x8x1xf32>,
      %cst_23 = arith.constant 0.000000e+00 : f32
      %26 = vector.broadcast %cst_23 : f32 to vector<1x8x1xf32>
      %c0_24 = arith.constant 0 : index
      %c0_25 = arith.constant 0 : index
      %c0_26 = arith.constant 0 : index
      %27 = vector.load %arg6[%c0_24, %c0_25, %c0_26] : memref<1x8x1xf32, #tpu.memory_space<vmem>>, vector<1x8x1xf32>
      tpu.vector_store %arg6[%c0_24, %c0_25, %c0_26], %26 {strides = array<i32>} : memref<1x8x1xf32, #tpu.memory_space<vmem>>, vector<1x8x1xf32>,
    } else {
    }
    %c0 = arith.constant 0 : index
    %c0_1 = arith.constant 0 : index
    %c0_2 = arith.constant 0 : index
    %3 = vector.load %arg3[%c0, %c0_1, %c0_2] : memref<1x4x2048xf32, #tpu.memory_space<vmem>>, vector<1x4x2048xf32>
    %4 = vector.shape_cast %3 : vector<1x4x2048xf32> to vector<4x2048xf32>
    %c0_3 = arith.constant 0 : index
    %c0_4 = arith.constant 0 : index
    %5 = vector.load %arg4[%c0_3, %c0_4] : memref<8x4xf32, #tpu.memory_space<vmem>>, vector<8x4xf32>
    %cst = arith.constant dense<0.000000e+00> : vector<8x2048xf32>
    %6 = tpu.matmul %5, %4, %cst {dimension_numbers = #tpu.dot_dimension_numbers<[1], [0], [0], [1], [0, 0, 1, 1], [], []>} : vector<8x4xf32>, vector<4x2048xf32>, vector<8x2048xf32> -> vector<8x2048xf32>
    %c0_5 = arith.constant 0 : index
    %c0_6 = arith.constant 0 : index
    %c0_7 = arith.constant 0 : index
    %7 = vector.load %arg5[%c0_5, %c0_6, %c0_7] : memref<1x8x1xf32, #tpu.memory_space<vmem>>, vector<1x8x1xf32>
    %8 = vector.shape_cast %7 : vector<1x8x1xf32> to vector<8x1xf32>
    %cst_8 = arith.constant dense<0.000000e+00> : vector<8xf32>
    %9 = vector.multi_reduction <add>, %6, %cst_8 [1] : vector<8x2048xf32> to vector<8xf32>
    %10 = vector.shape_cast %9 : vector<8xf32> to vector<8x1xf32>
    %11 = arith.addf %8, %10 : vector<8x1xf32>
    %c0_9 = arith.constant 0 : index
    %c0_10 = arith.constant 0 : index
    %c0_11 = arith.constant 0 : index
    %12 = vector.load %arg5[%c0_9, %c0_10, %c0_11] : memref<1x8x1xf32, #tpu.memory_space<vmem>>, vector<1x8x1xf32>
    %13 = vector.shape_cast %12 : vector<1x8x1xf32> to vector<8x1xf32>
    %14 = vector.shape_cast %11 : vector<8x1xf32> to vector<1x8x1xf32>
    tpu.vector_store %arg5[%c0_9, %c0_10, %c0_11], %14 {strides = array<i32>} : memref<1x8x1xf32, #tpu.memory_space<vmem>>, vector<1x8x1xf32>,
    %c0_12 = arith.constant 0 : index
    %c0_13 = arith.constant 0 : index
    %c0_14 = arith.constant 0 : index
    %15 = vector.load %arg6[%c0_12, %c0_13, %c0_14] : memref<1x8x1xf32, #tpu.memory_space<vmem>>, vector<1x8x1xf32>
    %16 = vector.shape_cast %15 : vector<1x8x1xf32> to vector<8x1xf32>
    %17 = arith.mulf %6, %6 : vector<8x2048xf32>
    %cst_15 = arith.constant dense<0.000000e+00> : vector<8xf32>
    %18 = vector.multi_reduction <add>, %17, %cst_15 [1] : vector<8x2048xf32> to vector<8xf32>
    %19 = vector.shape_cast %18 : vector<8xf32> to vector<8x1xf32>
    %20 = arith.addf %16, %19 : vector<8x1xf32>
    %c0_16 = arith.constant 0 : index
    %c0_17 = arith.constant 0 : index
    %c0_18 = arith.constant 0 : index
    %21 = vector.load %arg6[%c0_16, %c0_17, %c0_18] : memref<1x8x1xf32, #tpu.memory_space<vmem>>, vector<1x8x1xf32>
    %22 = vector.shape_cast %21 : vector<1x8x1xf32> to vector<8x1xf32>
    %23 = vector.shape_cast %20 : vector<8x1xf32> to vector<1x8x1xf32>
    tpu.vector_store %arg6[%c0_16, %c0_17, %c0_18], %23 {strides = array<i32>} : memref<1x8x1xf32, #tpu.memory_space<vmem>>, vector<1x8x1xf32>,
    return
  }
  func.func @transform_0(%arg0: i32, %arg1: i32, %arg2: i32) -> (i32, i32, i32) {
    %c1_i32 = arith.constant 1 : i32
    %0 = arith.muli %arg0, %c1_i32 : i32
    %1 = arith.addi %0, %arg2 : i32
    %c0_i32 = arith.constant 0 : i32
    %c0_i32_0 = arith.constant 0 : i32
    return %arg1, %c0_i32, %1 : i32, i32, i32
  }
  func.func @transform_1(%arg0: i32, %arg1: i32, %arg2: i32) -> (i32, i32) {
    %c0_i32 = arith.constant 0 : i32
    %c0_i32_0 = arith.constant 0 : i32
    %c0_i32_1 = arith.constant 0 : i32
    return %c0_i32, %c0_i32_0 : i32, i32
  }
  func.func @transform_2(%arg0: i32, %arg1: i32, %arg2: i32) -> (i32, i32, i32) {
    %c2_i32 = arith.constant 2 : i32
    %0 = arith.muli %arg0, %c2_i32 : i32
    %1 = arith.addi %0, %arg1 : i32
    %c0_i32 = arith.constant 0 : i32
    %c0_i32_0 = arith.constant 0 : i32
    %c0_i32_1 = arith.constant 0 : i32
    return %1, %c0_i32, %c0_i32_0 : i32, i32, i32
  }
  func.func @transform_3(%arg0: i32, %arg1: i32, %arg2: i32) -> (i32, i32, i32) {
    %c2_i32 = arith.constant 2 : i32
    %0 = arith.muli %arg0, %c2_i32 : i32
    %1 = arith.addi %0, %arg1 : i32
    %c0_i32 = arith.constant 0 : i32
    %c0_i32_0 = arith.constant 0 : i32
    %c0_i32_1 = arith.constant 0 : i32
    return %1, %c0_i32, %c0_i32_0 : i32, i32, i32
  }
}

module attributes {stable_mosaic.version = 11 : i64} {
  func.func @_fused_kernel(%arg0: i32, %arg1: i32, %arg2: i32, %arg3: memref<1x4x2048xf32, #tpu.memory_space<vmem>>, %arg4: memref<8x4xf32, #tpu.memory_space<vmem>>, %arg5: memref<8x1xf32, #tpu.memory_space<vmem>>, %arg6: memref<8x1xf32, #tpu.memory_space<vmem>>, %arg7: memref<8x1xf32, #tpu.memory_space<vmem>>, %arg8: memref<4x8xf32, #tpu.memory_space<vmem>>, %arg9: memref<1x4x2048xf32, #tpu.memory_space<vmem>>, %arg10: memref<1x4x1xf32, #tpu.memory_space<vmem>>, %arg11: memref<1x4x1xf32, #tpu.memory_space<vmem>>) attributes {dimension_semantics = [#tpu.dimension_semantics<parallel>, #tpu.dimension_semantics<parallel>, #tpu.dimension_semantics<arbitrary>], iteration_bounds = array<i64: 1, 2, 1>, scalar_prefetch = 0 : i64, scratch_operands = 0 : i64, tpu.core_type = #tpu.core_type<tc>, window_params = [{transform_indices = @transform_0, window_bounds = array<i64: 1, 4, 2048>}, {pipeline_mode = #tpu.pipeline_mode<synchronous>, transform_indices = @transform_1, window_bounds = array<i64: 8, 4>}, {pipeline_mode = #tpu.pipeline_mode<synchronous>, transform_indices = @transform_2, window_bounds = array<i64: 8, 1>}, {pipeline_mode = #tpu.pipeline_mode<synchronous>, transform_indices = @transform_3, window_bounds = array<i64: 8, 1>}, {pipeline_mode = #tpu.pipeline_mode<synchronous>, transform_indices = @transform_4, window_bounds = array<i64: 8, 1>}, {pipeline_mode = #tpu.pipeline_mode<synchronous>, transform_indices = @transform_5, window_bounds = array<i64: 4, 8>}, {transform_indices = @transform_6, window_bounds = array<i64: 1, 4, 2048>}, {transform_indices = @transform_7, window_bounds = array<i64: 1, 4, 1>}, {transform_indices = @transform_8, window_bounds = array<i64: 1, 4, 1>}]} {
    %c0_i32 = arith.constant 0 : i32
    %0 = arith.cmpi eq, %arg2, %c0_i32 : i32
    %1 = arith.extui %0 : i1 to i32
    %c0_i32_0 = arith.constant 0 : i32
    %2 = arith.cmpi ne, %1, %c0_i32_0 : i32
    scf.if %2 {
      %cst_32 = arith.constant 0.000000e+00 : f32
      %41 = vector.broadcast %cst_32 : f32 to vector<1x4x1xf32>
      %c0_33 = arith.constant 0 : index
      %c0_34 = arith.constant 0 : index
      %c0_35 = arith.constant 0 : index
      %42 = vector.load %arg10[%c0_33, %c0_34, %c0_35] : memref<1x4x1xf32, #tpu.memory_space<vmem>>, vector<1x4x1xf32>
      tpu.vector_store %arg10[%c0_33, %c0_34, %c0_35], %41 {strides = array<i32>} : memref<1x4x1xf32, #tpu.memory_space<vmem>>, vector<1x4x1xf32>,
      %cst_36 = arith.constant 0.000000e+00 : f32
      %43 = vector.broadcast %cst_36 : f32 to vector<1x4x1xf32>
      %c0_37 = arith.constant 0 : index
      %c0_38 = arith.constant 0 : index
      %c0_39 = arith.constant 0 : index
      %44 = vector.load %arg11[%c0_37, %c0_38, %c0_39] : memref<1x4x1xf32, #tpu.memory_space<vmem>>, vector<1x4x1xf32>
      tpu.vector_store %arg11[%c0_37, %c0_38, %c0_39], %43 {strides = array<i32>} : memref<1x4x1xf32, #tpu.memory_space<vmem>>, vector<1x4x1xf32>,
    } else {
    }
    %c0 = arith.constant 0 : index
    %c0_1 = arith.constant 0 : index
    %c0_2 = arith.constant 0 : index
    %3 = vector.load %arg3[%c0, %c0_1, %c0_2] : memref<1x4x2048xf32, #tpu.memory_space<vmem>>, vector<1x4x2048xf32>
    %4 = vector.shape_cast %3 : vector<1x4x2048xf32> to vector<4x2048xf32>
    %c0_3 = arith.constant 0 : index
    %c0_4 = arith.constant 0 : index
    %5 = vector.load %arg4[%c0_3, %c0_4] : memref<8x4xf32, #tpu.memory_space<vmem>>, vector<8x4xf32>
    %cst = arith.constant dense<0.000000e+00> : vector<8x2048xf32>
    %6 = tpu.matmul %5, %4, %cst {dimension_numbers = #tpu.dot_dimension_numbers<[1], [0], [0], [1], [0, 0, 1, 1], [], []>} : vector<8x4xf32>, vector<4x2048xf32>, vector<8x2048xf32> -> vector<8x2048xf32>
    %c0_5 = arith.constant 0 : index
    %c0_6 = arith.constant 0 : index
    %7 = vector.load %arg5[%c0_5, %c0_6] : memref<8x1xf32, #tpu.memory_space<vmem>>, vector<8x1xf32>
    %8 = vector.broadcast %7 : vector<8x1xf32> to vector<8x2048xf32>
    %9 = arith.mulf %8, %6 : vector<8x2048xf32>
    %c0_7 = arith.constant 0 : index
    %c0_8 = arith.constant 0 : index
    %10 = vector.load %arg6[%c0_7, %c0_8] : memref<8x1xf32, #tpu.memory_space<vmem>>, vector<8x1xf32>
    %11 = vector.broadcast %10 : vector<8x1xf32> to vector<8x2048xf32>
    %12 = arith.addf %9, %11 : vector<8x2048xf32>
    %cst_9 = arith.constant 0.000000e+00 : f32
    %13 = vector.broadcast %cst_9 : f32 to vector<8x2048xf32>
    %14 = arith.cmpf ogt, %12, %13 : vector<8x2048xf32>
    %c0_10 = arith.constant 0 : index
    %c0_11 = arith.constant 0 : index
    %15 = vector.load %arg7[%c0_10, %c0_11] : memref<8x1xf32, #tpu.memory_space<vmem>>, vector<8x1xf32>
    %16 = vector.broadcast %15 : vector<8x1xf32> to vector<8x2048xf32>
    %17 = arith.mulf %16, %12 : vector<8x2048xf32>
    %18 = arith.select %14, %12, %17 : vector<8x2048xi1>, vector<8x2048xf32>
    %c0_12 = arith.constant 0 : index
    %c0_13 = arith.constant 0 : index
    %19 = vector.load %arg8[%c0_12, %c0_13] : memref<4x8xf32, #tpu.memory_space<vmem>>, vector<4x8xf32>
    %cst_14 = arith.constant dense<0.000000e+00> : vector<4x2048xf32>
    %20 = tpu.matmul %19, %18, %cst_14 {dimension_numbers = #tpu.dot_dimension_numbers<[1], [0], [0], [1], [0, 0, 1, 1], [], []>} : vector<4x8xf32>, vector<8x2048xf32>, vector<4x2048xf32> -> vector<4x2048xf32>
    %c0_15 = arith.constant 0 : index
    %c0_16 = arith.constant 0 : index
    %c0_17 = arith.constant 0 : index
    %21 = vector.load %arg9[%c0_15, %c0_16, %c0_17] : memref<1x4x2048xf32, #tpu.memory_space<vmem>>, vector<1x4x2048xf32>
    %22 = vector.shape_cast %21 : vector<1x4x2048xf32> to vector<4x2048xf32>
    %23 = vector.shape_cast %20 : vector<4x2048xf32> to vector<1x4x2048xf32>
    tpu.vector_store %arg9[%c0_15, %c0_16, %c0_17], %23 {strides = array<i32>} : memref<1x4x2048xf32, #tpu.memory_space<vmem>>, vector<1x4x2048xf32>,
    %c0_18 = arith.constant 0 : index
    %c0_19 = arith.constant 0 : index
    %c0_20 = arith.constant 0 : index
    %24 = vector.load %arg10[%c0_18, %c0_19, %c0_20] : memref<1x4x1xf32, #tpu.memory_space<vmem>>, vector<1x4x1xf32>
    %25 = vector.shape_cast %24 : vector<1x4x1xf32> to vector<4x1xf32>
    %cst_21 = arith.constant dense<0.000000e+00> : vector<4xf32>
    %26 = vector.multi_reduction <add>, %20, %cst_21 [1] : vector<4x2048xf32> to vector<4xf32>
    %27 = vector.shape_cast %26 : vector<4xf32> to vector<4x1xf32>
    %28 = arith.addf %25, %27 : vector<4x1xf32>
    %c0_22 = arith.constant 0 : index
    %c0_23 = arith.constant 0 : index
    %c0_24 = arith.constant 0 : index
    %29 = vector.load %arg10[%c0_22, %c0_23, %c0_24] : memref<1x4x1xf32, #tpu.memory_space<vmem>>, vector<1x4x1xf32>
    %30 = vector.shape_cast %29 : vector<1x4x1xf32> to vector<4x1xf32>
    %31 = vector.shape_cast %28 : vector<4x1xf32> to vector<1x4x1xf32>
    tpu.vector_store %arg10[%c0_22, %c0_23, %c0_24], %31 {strides = array<i32>} : memref<1x4x1xf32, #tpu.memory_space<vmem>>, vector<1x4x1xf32>,
    %c0_25 = arith.constant 0 : index
    %c0_26 = arith.constant 0 : index
    %c0_27 = arith.constant 0 : index
    %32 = vector.load %arg11[%c0_25, %c0_26, %c0_27] : memref<1x4x1xf32, #tpu.memory_space<vmem>>, vector<1x4x1xf32>
    %33 = vector.shape_cast %32 : vector<1x4x1xf32> to vector<4x1xf32>
    %34 = arith.mulf %20, %20 : vector<4x2048xf32>
    %cst_28 = arith.constant dense<0.000000e+00> : vector<4xf32>
    %35 = vector.multi_reduction <add>, %34, %cst_28 [1] : vector<4x2048xf32> to vector<4xf32>
    %36 = vector.shape_cast %35 : vector<4xf32> to vector<4x1xf32>
    %37 = arith.addf %33, %36 : vector<4x1xf32>
    %c0_29 = arith.constant 0 : index
    %c0_30 = arith.constant 0 : index
    %c0_31 = arith.constant 0 : index
    %38 = vector.load %arg11[%c0_29, %c0_30, %c0_31] : memref<1x4x1xf32, #tpu.memory_space<vmem>>, vector<1x4x1xf32>
    %39 = vector.shape_cast %38 : vector<1x4x1xf32> to vector<4x1xf32>
    %40 = vector.shape_cast %37 : vector<4x1xf32> to vector<1x4x1xf32>
    tpu.vector_store %arg11[%c0_29, %c0_30, %c0_31], %40 {strides = array<i32>} : memref<1x4x1xf32, #tpu.memory_space<vmem>>, vector<1x4x1xf32>,
    return
  }
  func.func @transform_0(%arg0: i32, %arg1: i32, %arg2: i32) -> (i32, i32, i32) {
    %c1_i32 = arith.constant 1 : i32
    %0 = arith.muli %arg0, %c1_i32 : i32
    %1 = arith.addi %0, %arg2 : i32
    %c0_i32 = arith.constant 0 : i32
    %c0_i32_0 = arith.constant 0 : i32
    return %arg1, %c0_i32, %1 : i32, i32, i32
  }
  func.func @transform_1(%arg0: i32, %arg1: i32, %arg2: i32) -> (i32, i32) {
    %c0_i32 = arith.constant 0 : i32
    %c0_i32_0 = arith.constant 0 : i32
    %c0_i32_1 = arith.constant 0 : i32
    return %c0_i32, %c0_i32_0 : i32, i32
  }
  func.func @transform_2(%arg0: i32, %arg1: i32, %arg2: i32) -> (i32, i32) {
    %c0_i32 = arith.constant 0 : i32
    %c0_i32_0 = arith.constant 0 : i32
    %c0_i32_1 = arith.constant 0 : i32
    return %c0_i32, %c0_i32_0 : i32, i32
  }
  func.func @transform_3(%arg0: i32, %arg1: i32, %arg2: i32) -> (i32, i32) {
    %c0_i32 = arith.constant 0 : i32
    %c0_i32_0 = arith.constant 0 : i32
    %c0_i32_1 = arith.constant 0 : i32
    return %c0_i32, %c0_i32_0 : i32, i32
  }
  func.func @transform_4(%arg0: i32, %arg1: i32, %arg2: i32) -> (i32, i32) {
    %c0_i32 = arith.constant 0 : i32
    %c0_i32_0 = arith.constant 0 : i32
    %c0_i32_1 = arith.constant 0 : i32
    return %c0_i32, %c0_i32_0 : i32, i32
  }
  func.func @transform_5(%arg0: i32, %arg1: i32, %arg2: i32) -> (i32, i32) {
    %c0_i32 = arith.constant 0 : i32
    %c0_i32_0 = arith.constant 0 : i32
    %c0_i32_1 = arith.constant 0 : i32
    return %c0_i32, %c0_i32_0 : i32, i32
  }
  func.func @transform_6(%arg0: i32, %arg1: i32, %arg2: i32) -> (i32, i32, i32) {
    %c1_i32 = arith.constant 1 : i32
    %0 = arith.muli %arg0, %c1_i32 : i32
    %1 = arith.addi %0, %arg2 : i32
    %c0_i32 = arith.constant 0 : i32
    %c0_i32_0 = arith.constant 0 : i32
    return %arg1, %c0_i32, %1 : i32, i32, i32
  }
  func.func @transform_7(%arg0: i32, %arg1: i32, %arg2: i32) -> (i32, i32, i32) {
    %c2_i32 = arith.constant 2 : i32
    %0 = arith.muli %arg0, %c2_i32 : i32
    %1 = arith.addi %0, %arg1 : i32
    %c0_i32 = arith.constant 0 : i32
    %c0_i32_0 = arith.constant 0 : i32
    %c0_i32_1 = arith.constant 0 : i32
    return %1, %c0_i32, %c0_i32_0 : i32, i32, i32
  }
  func.func @transform_8(%arg0: i32, %arg1: i32, %arg2: i32) -> (i32, i32, i32) {
    %c2_i32 = arith.constant 2 : i32
    %0 = arith.muli %arg0, %c2_i32 : i32
    %1 = arith.addi %0, %arg1 : i32
    %c0_i32 = arith.constant 0 : i32
    %c0_i32_0 = arith.constant 0 : i32
    %c0_i32_1 = arith.constant 0 : i32
    return %1, %c0_i32, %c0_i32_0 : i32, i32, i32
  }
}

module attributes {stable_mosaic.version = 11 : i64} {
  func.func @_fixup_kernel(%arg0: i32, %arg1: i32, %arg2: memref<1x4x2048xf32, #tpu.memory_space<vmem>>, %arg3: memref<4x1xf32, #tpu.memory_space<vmem>>, %arg4: memref<4x1xf32, #tpu.memory_space<vmem>>, %arg5: memref<1x4x2048xf32, #tpu.memory_space<vmem>>) attributes {dimension_semantics = [#tpu.dimension_semantics<parallel>, #tpu.dimension_semantics<parallel>], iteration_bounds = array<i64: 2, 1>, scalar_prefetch = 0 : i64, scratch_operands = 0 : i64, tpu.core_type = #tpu.core_type<tc>, window_params = [{transform_indices = @transform_0, window_bounds = array<i64: 1, 4, 2048>}, {pipeline_mode = #tpu.pipeline_mode<synchronous>, transform_indices = @transform_1, window_bounds = array<i64: 4, 1>}, {pipeline_mode = #tpu.pipeline_mode<synchronous>, transform_indices = @transform_2, window_bounds = array<i64: 4, 1>}, {transform_indices = @transform_3, window_bounds = array<i64: 1, 4, 2048>}]} {
    %c0 = arith.constant 0 : index
    %c0_0 = arith.constant 0 : index
    %c0_1 = arith.constant 0 : index
    %0 = vector.load %arg2[%c0, %c0_0, %c0_1] : memref<1x4x2048xf32, #tpu.memory_space<vmem>>, vector<1x4x2048xf32>
    %1 = vector.shape_cast %0 : vector<1x4x2048xf32> to vector<4x2048xf32>
    %c0_2 = arith.constant 0 : index
    %c0_3 = arith.constant 0 : index
    %2 = vector.load %arg3[%c0_2, %c0_3] : memref<4x1xf32, #tpu.memory_space<vmem>>, vector<4x1xf32>
    %3 = vector.broadcast %2 : vector<4x1xf32> to vector<4x2048xf32>
    %4 = arith.mulf %3, %1 : vector<4x2048xf32>
    %c0_4 = arith.constant 0 : index
    %c0_5 = arith.constant 0 : index
    %5 = vector.load %arg4[%c0_4, %c0_5] : memref<4x1xf32, #tpu.memory_space<vmem>>, vector<4x1xf32>
    %6 = vector.broadcast %5 : vector<4x1xf32> to vector<4x2048xf32>
    %7 = arith.addf %4, %6 : vector<4x2048xf32>
    %c0_6 = arith.constant 0 : index
    %c0_7 = arith.constant 0 : index
    %c0_8 = arith.constant 0 : index
    %8 = vector.load %arg5[%c0_6, %c0_7, %c0_8] : memref<1x4x2048xf32, #tpu.memory_space<vmem>>, vector<1x4x2048xf32>
    %9 = vector.shape_cast %8 : vector<1x4x2048xf32> to vector<4x2048xf32>
    %10 = vector.shape_cast %7 : vector<4x2048xf32> to vector<1x4x2048xf32>
    tpu.vector_store %arg5[%c0_6, %c0_7, %c0_8], %10 {strides = array<i32>} : memref<1x4x2048xf32, #tpu.memory_space<vmem>>, vector<1x4x2048xf32>,
    return
  }
  func.func @transform_0(%arg0: i32, %arg1: i32) -> (i32, i32, i32) {
    %c0_i32 = arith.constant 0 : i32
    %c0_i32_0 = arith.constant 0 : i32
    return %arg0, %c0_i32, %arg1 : i32, i32, i32
  }
  func.func @transform_1(%arg0: i32, %arg1: i32) -> (i32, i32) {
    %c0_i32 = arith.constant 0 : i32
    %c0_i32_0 = arith.constant 0 : i32
    %c0_i32_1 = arith.constant 0 : i32
    return %c0_i32, %c0_i32_0 : i32, i32
  }
  func.func @transform_2(%arg0: i32, %arg1: i32) -> (i32, i32) {
    %c0_i32 = arith.constant 0 : i32
    %c0_i32_0 = arith.constant 0 : i32
    %c0_i32_1 = arith.constant 0 : i32
    return %c0_i32, %c0_i32_0 : i32, i32
  }
  func.func @transform_3(%arg0: i32, %arg1: i32) -> (i32, i32, i32) {
    %c0_i32 = arith.constant 0 : i32
    %c0_i32_0 = arith.constant 0 : i32
    return %arg0, %c0_i32, %arg1 : i32, i32, i32
  }
}

</mosaic_0001>

<llo_original>
// kernel: mlp_forward.3
$region0: #{mlp_forward.3}
  #allocation0 [shape = 'u32[]', space=smem, size = 0x4, offset = 0x4, fixed_abs, tag = 'smem constant byte address 0x4 - core index']
  #allocation1 [shape = 'u32[144,128]{1,0:T(1,128)}', space=vmem, size = 0x12000, scoped, tag = 'internal scratch']
  %s0 = inlined_call_operand.vmem [shape: f32[2,4,2048], index: 0, kind: input, shape index: {}]
  %s1 = inlined_call_operand.vmem [shape: f32[8,4], index: 1, kind: input, shape index: {}]
  %s2 = inlined_call_operand.vmem [shape: f32[2,8,1], index: 2, kind: output, shape index: {0}]
  %s3 = inlined_call_operand.vmem [shape: f32[2,8,1], index: 3, kind: output, shape index: {1}]
  %4 = xla_tuple %s2, %s3
  %s5 = sld [smem:[#allocation0]]
  $region53: #{mlp_forward.3} parent=0
    _
  %s7 = ssub.s32 1, %s5
  %s8 = scalar_select 0, %s7, %s5
  loop: start=0, step=1, limit=4
  $region2: #{mlp_forward.3} parent=0 // loop_pre_header
    _
  $region3: #{mlp_forward.3} parent=0 // loop_header
    %s10 = sphi 0, %s14
    %p11 = scmp.ge.s32.totalorder %s10, 4
    %s17 = sphi 0, %s36
    %s18 = sphi 0, %s32
    %s19 = sphi 0, %s28
    %s20 = sphi 0, %s17
    %s21 = sphi 0, %s18
    %s22 = sphi 0, %s19
    %s23 = sphi 0, %s20
    %s24 = sphi 0, %s21
    %s25 = sphi 0, %s22
    %s43 = sphi 0, %s45
    %s46 = sphi 0, %s43
    %s47 = sphi 0, %s46
    %s63 = sphi 0, %s47
    %s67 = sphi 0, %s67
    %s69 = sphi 0, %s67
    %s70 = sphi 0, %s69
    %s84 = sphi 0, %s70
    %s94 = sphi 0, %s96
    %s97 = sphi 0, %s94
    %s98 = sphi 0, %s97
    %s114 = sphi 0, %s98
    %s124 = sphi 0, %s126
    %s127 = sphi 0, %s124
    %s128 = sphi 0, %s127
    %s144 = sphi 0, %s128
  $region4: #{mlp_forward.3} parent=0 // loop_header_branch
    %13 = sbr.rel (%p11) target = $region8
  $region5: #{mlp_forward.3} parent=0 // loop_body
    %s15 = ssub.s32 %s10, 1
    %s16 = ssub.s32 %s10, 2
    %s26 = sadd.s32 1, %s19
    %p27 = scmp.ge.s32.totalorder %s26, 1
    %s28 = scalar_select %p27, 0, %s26
    %s29 = sadd.s32 1, %s18
    %s30 = scalar_select %p27, %s29, %s18
    %p31 = scmp.ge.s32.totalorder %s30, 2
    %s32 = scalar_select %p31, 0, %s30
    %s33 = sadd.s32 1, %s17
    %s34 = scalar_select %p31, %s33, %s17
    %p35 = scmp.ge.s32.totalorder %s34, 1
    %s36 = scalar_select %p35, 0, %s34
    %s37 = sadd.s32 %s17, %s19
    %s38 = sadd.s32 %s36, %s28
    %s39 = ssub.s32 %s18, %s32
    %s40 = ssub.s32 %s37, %s38
    %s41 = sor.u32 %s39, %s40
    %p42 = scmp.eq.s32.totalorder %s41, 0
    %s44 = sadd.s32 %s43, 1
    %s45 = scalar_select %p42, %s43, %s44
    %p48 = pneg %p42
    %p49 = scmp.eq.s32.totalorder %s10, 1
    %p50 = por %p48, %p49
    %p51 = scmp.ne.s32.totalorder %s43, %s46
    %p52 = scmp.eq.s32.totalorder %s10, 0
    %p53 = por %p51, %p52
    %p54 = scmp.ne.s32.totalorder %s43, %s46
    %p55 = scmp.eq.s32.totalorder %s15, 1
    %p56 = por %p54, %p55
    %p57 = scmp.ne.s32.totalorder %s46, %s47
    %p58 = scmp.eq.s32.totalorder %s15, 0
    %p59 = por %p57, %p58
    %p60 = scmp.ne.s32.totalorder %s46, %s47
    %p61 = scmp.eq.s32.totalorder %s16, 1
    %p62 = por %p60, %p61
    %p64 = scmp.ne.s32.totalorder %s47, %s63
    %p65 = scmp.eq.s32.totalorder %s16, 0
    %p66 = por %p64, %p65
    %s68 = sadd.s32 %s67, 1
    %p71 = scmp.eq.s32.totalorder %s10, 1
    %p72 = scmp.ne.s32.totalorder %s67, %s69
    %p73 = scmp.eq.s32.totalorder %s10, 0
    %p74 = por %p72, %p73
    %p75 = scmp.ne.s32.totalorder %s67, %s69
    %p76 = scmp.eq.s32.totalorder %s15, 1
    %p77 = por %p75, %p76
    %p78 = scmp.ne.s32.totalorder %s69, %s70
    %p79 = scmp.eq.s32.totalorder %s15, 0
    %p80 = por %p78, %p79
    %p81 = scmp.ne.s32.totalorder %s69, %s70
    %p82 = scmp.eq.s32.totalorder %s16, 1
    %p83 = por %p81, %p82
    %p85 = scmp.ne.s32.totalorder %s70, %s84
    %p86 = scmp.eq.s32.totalorder %s16, 0
    %p87 = por %p85, %p86
    %s88 = smul.u32 %s17, 2
    %s89 = sadd.s32 %s88, %s18
    %s90 = smul.u32 %s36, 2
    %s91 = sadd.s32 %s90, %s32
    %s92 = ssub.s32 %s89, %s91
    %p93 = scmp.eq.s32.totalorder %s92, 0
    %s95 = sadd.s32 %s94, 1
    %s96 = scalar_select %p93, %s94, %s95
    %p99 = pneg %p93
    %p100 = scmp.eq.s32.totalorder %s10, 1
    %p101 = por %p99, %p100
    %p102 = scmp.ne.s32.totalorder %s94, %s97
    %p103 = scmp.eq.s32.totalorder %s10, 0
    %p104 = por %p102, %p103
    %p105 = scmp.ne.s32.totalorder %s94, %s97
    %p106 = scmp.eq.s32.totalorder %s15, 1
    %p107 = por %p105, %p106
    %p108 = scmp.ne.s32.totalorder %s97, %s98
    %p109 = scmp.eq.s32.totalorder %s15, 0
    %p110 = por %p108, %p109
    %p111 = scmp.ne.s32.totalorder %s97, %s98
    %p112 = scmp.eq.s32.totalorder %s16, 1
    %p113 = por %p111, %p112
    %p115 = scmp.ne.s32.totalorder %s98, %s114
    %p116 = scmp.eq.s32.totalorder %s16, 0
    %p117 = por %p115, %p116
    %s118 = smul.u32 %s17, 2
    %s119 = sadd.s32 %s118, %s18
    %s120 = smul.u32 %s36, 2
    %s121 = sadd.s32 %s120, %s32
    %s122 = ssub.s32 %s119, %s121
    %p123 = scmp.eq.s32.totalorder %s122, 0
    %s125 = sadd.s32 %s124, 1
    %s126 = scalar_select %p123, %s124, %s125
    %p129 = pneg %p123
    %p130 = scmp.eq.s32.totalorder %s10, 1
    %p131 = por %p129, %p130
    %p132 = scmp.ne.s32.totalorder %s124, %s127
    %p133 = scmp.eq.s32.totalorder %s10, 0
    %p134 = por %p132, %p133
    %p135 = scmp.ne.s32.totalorder %s124, %s127
    %p136 = scmp.eq.s32.totalorder %s15, 1
    %p137 = por %p135, %p136
    %p138 = scmp.ne.s32.totalorder %s127, %s128
    %p139 = scmp.eq.s32.totalorder %s15, 0
    %p140 = por %p138, %p139
    %p141 = scmp.ne.s32.totalorder %s127, %s128
    %p142 = scmp.eq.s32.totalorder %s16, 1
    %p143 = por %p141, %p142
    %p145 = scmp.ne.s32.totalorder %s128, %s144
    %p146 = scmp.eq.s32.totalorder %s16, 0
    %p147 = por %p145, %p146
    %p148 = scmp.le.s32.totalorder 1, %s10
    %p149 = scmp.lt.s32.totalorder %s10, 3
    %p150 = pnand %p148, %p149
    %p151 = pneg %p150
    // Predicated region
    $region9: #{mlp_forward.3} parent=5 // pred_check
      _
    $region10: #{mlp_forward.3} parent=5 // pred_check_branch
      %153 = sbr.rel (%p150) target = $region12
    $region11: #{mlp_forward.3} parent=5 // pred_region
      %s154 = ssub.s32 %s10, 1
      // Predicated region
      $region13: #{mlp_forward.3} parent=11 // pred_check
        %p155 = pneg %p80
      $region14: #{mlp_forward.3} parent=11 // pred_check_branch
        %157 = sbr.rel (%p155) target = $region16
      $region15: #{mlp_forward.3} parent=11 // pred_region
        _
      $region16: #{mlp_forward.3} parent=11 // pred_fallthru
        _
    $region12: #{mlp_forward.3} parent=5 // pred_fallthru
      _
    %p158 = scmp.lt.s32.totalorder %s10, 2
    // Predicated region
    $region17: #{mlp_forward.3} parent=5 // pred_check
      %p159 = pneg %p158
    $region18: #{mlp_forward.3} parent=5 // pred_check_branch
      %161 = sbr.rel (%p159) target = $region20
    $region19: #{mlp_forward.3} parent=5 // pred_region
      // Predicated region
      $region21: #{mlp_forward.3} parent=19 // pred_check
        %p162 = pneg %p53
      $region22: #{mlp_forward.3} parent=19 // pred_check_branch
        %164 = sbr.rel (%p162) target = $region24
      $region23: #{mlp_forward.3} parent=19 // pred_region
        %s165 = sadd.s32 %s17, %s19
        %s166 = smul.u32 16, %s165
        %p167 = scmp.lt.s32.totalorder %s18, 1
        %s168 = scalar_select %p167, %s18, 1
        %p169 = scmp.lt.s32.totalorder %s166, 15
        %s170 = scalar_select %p169, %s166, 15
        %s171 = smul.addr %s168, 16
        %s172 = sadd.s32 %s170, %s171
        %s173 = smul.addr %s172, 4
        %s174 = scalar_lea.vmem %s0, %s173
        %s175 = sadd.s32 %s17, %s19
        %s176 = smul.u32 16, %s175
      $region24: #{mlp_forward.3} parent=19 // pred_fallthru
        _
    $region20: #{mlp_forward.3} parent=5 // pred_fallthru
      _
    %p177 = scmp.le.s32.totalorder 1, %s10
    %p178 = scmp.lt.s32.totalorder %s10, 3
    %p179 = pnand %p177, %p178
    %p180 = pneg %p179
    // Predicated region
    $region25: #{mlp_forward.3} parent=5 // pred_check
      _
    $region26: #{mlp_forward.3} parent=5 // pred_check_branch
      %182 = sbr.rel (%p179) target = $region28
    $region27: #{mlp_forward.3} parent=5 // pred_region
      %s183 = ssub.s32 %s10, 1
      %s184 = sadd.s32 %s20, %s22
      %s185 = smul.u32 16, %s184
      %p186 = scmp.lt.s32.totalorder %s21, 1
      %s187 = scalar_select %p186, %s21, 1
      %p188 = scmp.lt.s32.totalorder %s185, 15
      %s189 = scalar_select %p188, %s185, 15
      %s190 = smul.addr %s187, 16
      %s191 = sadd.s32 %s189, %s190
      %s192 = smul.addr %s191, 4
      %s193 = scalar_lea.vmem %s0, %s192
      %p194 = pneg %p59
      %p195 = pneg %p56
      %p196 = pneg %p80
      %p197 = pneg %p77
      %p198 = pneg %p110
      %p199 = pneg %p107
      %s200 = smul.u32 %s20, 2
      %s201 = sadd.s32 %s200, %s21
      %p202 = scmp.lt.s32.totalorder %s201, 1
      %s203 = scalar_select %p202, %s201, 1
      %s204 = smul.addr %s203, 8
      %s205 = scalar_lea.vmem %s2, %s204
      %p206 = pneg %p140
      %p207 = pneg %p137
      %s208 = smul.u32 %s20, 2
      %s209 = sadd.s32 %s208, %s21
      %p210 = scmp.lt.s32.totalorder %s209, 1
      %s211 = scalar_select %p210, %s209, 1
      %s212 = smul.addr %s211, 8
      %s213 = scalar_lea.vmem %s3, %s212
      %s214 = sadd.s32 %s20, %s22
      %s215 = smul.u32 16, %s214
      %p216 = scmp.lt.s32.totalorder %s21, 1
      %s217 = scalar_select %p216, %s21, 1
      %p218 = scmp.lt.s32.totalorder %s215, 15
      %s219 = scalar_select %p218, %s215, 15
      %s220 = smul.addr %s217, 16
      %s221 = sadd.s32 %s219, %s220
      %s222 = smul.addr %s221, 4
      %s223 = scalar_lea.vmem %s0, %s222
      %s224 = sadd.s32 %s20, %s22
      %s225 = smul.u32 16, %s224
      %s226 = smul.u32 %s20, 2
      %s227 = sadd.s32 %s226, %s21
      %p228 = scmp.lt.s32.totalorder %s227, 1
      %s229 = scalar_select %p228, %s227, 1
      %s230 = smul.addr %s229, 8
      %s231 = scalar_lea.vmem %s2, %s230
      %s232 = smul.u32 %s20, 2
      %s233 = sadd.s32 %s232, %s21
      %s234 = smul.u32 %s20, 2
      %s235 = sadd.s32 %s234, %s21
      %p236 = scmp.lt.s32.totalorder %s235, 1
      %s237 = scalar_select %p236, %s235, 1
      %s238 = smul.addr %s237, 8
      %s239 = scalar_lea.vmem %s3, %s238
      %s240 = smul.u32 %s20, 2
      %s241 = sadd.s32 %s240, %s21
      %p242 = scmp.eq.s32.totalorder %s22, 0
      // Predicated region
      $region29: #{mlp_forward.3} parent=27 // pred_check
        %p243 = pneg %p242
      $region30: #{mlp_forward.3} parent=27 // pred_check_branch
        %245 = sbr.rel (%p243) target = $region32
      $region31: #{mlp_forward.3} parent=27 // pred_region
        %vm246 = vcmask 7168
        %247 = vst.msk [vmem:[%s231] sm:$0xff] %vm246, 0.0
        %248 = vst.msk [vmem:[%s239] sm:$0xff] %vm246, 0.0
      $region32: #{mlp_forward.3} parent=27 // pred_fallthru
        _
      %v249 = vld [vmem:[%s223] sm:$0xff]
      %v250 = vld [vmem:[%s223 + $0x8] sm:$0xff]
      %v251 = vld [vmem:[%s223 + $0x10] sm:$0xff]
      %v252 = vld [vmem:[%s223 + $0x18] sm:$0xff]
      %v253 = vld [vmem:[%s223 + $0x20] sm:$0xff]
      %v254 = vld [vmem:[%s223 + $0x28] sm:$0xff]
      %v255 = vld [vmem:[%s223 + $0x30] sm:$0xff]
      %v256 = vld [vmem:[%s223 + $0x38] sm:$0xff]
      %v257 = vld [vmem:[%s1] sm:$0xff]
      %v266 = vcombine.high %v249, %v249
      %v267 = vcombine.high %v250, %v250
      %v268 = vcombine.high %v251, %v251
      %v269 = vcombine.high %v252, %v252
      %v270 = vcombine.high %v253, %v253
      %v271 = vcombine.high %v254, %v254
      %v272 = vcombine.high %v255, %v255
      %v273 = vcombine.high %v256, %v256
      %vm274 = vcmask 31744
      %v276 = vsel %vm274, %v257, 0
      %vm278 = vcmask 1043456
      %v279 = vsel %vm278, %v249, 0
      %v281 = vsel %vm278, %v266, 0
      %v283 = vsel %vm278, %v250, 0
      %v285 = vsel %vm278, %v267, 0
      %v287 = vsel %vm278, %v251, 0
      %v289 = vsel %vm278, %v268, 0
      %v291 = vsel %vm278, %v252, 0
      %v293 = vsel %vm278, %v269, 0
      %v295 = vsel %vm278, %v253, 0
      %v297 = vsel %vm278, %v270, 0
      %v299 = vsel %vm278, %v254, 0
      %v301 = vsel %vm278, %v271, 0
      %v303 = vsel %vm278, %v255, 0
      %v305 = vsel %vm278, %v272, 0
      %v307 = vsel %vm278, %v256, 0
      %v309 = vsel %vm278, %v273, 0
      %311 = vmatprep.subr.mxu0 0.0
      %312 = vmatpush1.msra.mxu0 0.0
      %313 = vmatprep.subr.mxu0 0.0
      %314 = vmatpush1.msra.mxu0 0.0
      %315 = vmatprep.subr.mxu0 0.0
      %316 = vmatpush1.msra.mxu0 0.0
      %317 = vmatprep.subr.mxu0 0.0
      %318 = vmatpush1.msra.mxu0 0.0
      %319 = vmatprep.subr.mxu0 0.0
      %320 = vmatpush1.msra.mxu0 0.0
      %321 = vmatprep.subr.mxu0 0.0
      %322 = vmatpush1.msra.mxu0 0.0
      %323 = vmatprep.subr.mxu0 0.0
      %324 = vmatpush1.msra.mxu0 0.0
      %325 = vmatprep.subr.mxu0 0.0
      %326 = vmatpush1.msra.mxu0 0.0
      %327 = vmatprep.subr.mxu0 0.0
      %328 = vmatpush1.msra.mxu0 0.0
      %329 = vmatprep.subr.mxu0 0.0
      %330 = vmatpush1.msra.mxu0 0.0
      %331 = vmatprep.subr.mxu0 0.0
      %332 = vmatpush1.msra.mxu0 0.0
      %333 = vmatprep.subr.mxu0 0.0
      %334 = vmatpush1.msra.mxu0 0.0
      %335 = vmatprep.subr.mxu0 0.0
      %336 = vmatpush1.msra.mxu0 0.0
      %337 = vmatprep.subr.mxu0 0.0
      %338 = vmatpush1.msra.mxu0 0.0
      %339 = vmatprep.subr.mxu0 0.0
      %340 = vmatpush1.msra.mxu0 0.0
      %341 = vmatprep.subr.mxu0 %v281
      %342 = vmatpush1.msra.mxu0 %v279
      %343 = vmatprep.subr.mxu0 0.0
      %344 = vmatpush2.msra.mxu0 0.0
      %345 = vmatprep.subr.mxu0 0.0
      %346 = vmatpush2.msra.mxu0 0.0
      %347 = vmatprep.subr.mxu0 0.0
      %348 = vmatpush2.msra.mxu0 0.0
      %349 = vmatprep.subr.mxu0 0.0
      %350 = vmatpush2.msra.mxu0 0.0
      %351 = vmatprep.subr.mxu0 0.0
      %352 = vmatpush2.msra.mxu0 0.0
      %353 = vmatprep.subr.mxu0 0.0
      %354 = vmatpush2.msra.mxu0 0.0
      %355 = vmatprep.subr.mxu0 0.0
      %356 = vmatpush2.msra.mxu0 0.0
      %357 = vmatprep.subr.mxu0 0.0
      %358 = vmatpush2.msra.mxu0 0.0
      %359 = vmatprep.subr.mxu0 0.0
      %360 = vmatpush2.msra.mxu0 0.0
      %361 = vmatprep.subr.mxu0 0.0
      %362 = vmatpush2.msra.mxu0 0.0
      %363 = vmatprep.subr.mxu0 0.0
      %364 = vmatpush2.msra.mxu0 0.0
      %365 = vmatprep.subr.mxu0 0.0
      %366 = vmatpush2.msra.mxu0 0.0
      %367 = vmatprep.subr.mxu0 0.0
      %368 = vmatpush2.msra.mxu0 0.0
      %369 = vmatprep.subr.mxu0 0.0
      %370 = vmatpush2.msra.mxu0 0.0
      %371 = vmatprep.subr.mxu0 0.0
      %372 = vmatpush2.msra.mxu0 0.0
      %373 = vmatprep.subr.mxu0 0.0
      %374 = vmatpush2.msra.mxu0 0.0
      %375 = vmatprep.mubr.f32.mxu0 0.0
      %376 = vmatmul.mubr.f32.gmra.mxu0 %v276
      %v377 = vpop.f32.mrf.mxu0
      %v378 = vadd.f32 0.0, %v377
      %v379 = vpop.f32.mrf.mxu0
      %v380 = vadd.f32 0.0, %v379
      %381 = vdwg.mxu0
      %382 = vmatprep.subr.mxu0 0.0
      %383 = vmatpush1.msra.mxu0 0.0
      %384 = vmatprep.subr.mxu0 0.0
      %385 = vmatpush1.msra.mxu0 0.0
      %386 = vmatprep.subr.mxu0 0.0
      %387 = vmatpush1.msra.mxu0 0.0
      %388 = vmatprep.subr.mxu0 0.0
      %389 = vmatpush1.msra.mxu0 0.0
      %390 = vmatprep.subr.mxu0 0.0
      %391 = vmatpush1.msra.mxu0 0.0
      %392 = vmatprep.subr.mxu0 0.0
      %393 = vmatpush1.msra.mxu0 0.0
      %394 = vmatprep.subr.mxu0 0.0
      %395 = vmatpush1.msra.mxu0 0.0
      %396 = vmatprep.subr.mxu0 0.0
      %397 = vmatpush1.msra.mxu0 0.0
      %398 = vmatprep.subr.mxu0 0.0
      %399 = vmatpush1.msra.mxu0 0.0
      %400 = vmatprep.subr.mxu0 0.0
      %401 = vmatpush1.msra.mxu0 0.0
      %402 = vmatprep.subr.mxu0 0.0
      %403 = vmatpush1.msra.mxu0 0.0
      %404 = vmatprep.subr.mxu0 0.0
      %405 = vmatpush1.msra.mxu0 0.0
      %406 = vmatprep.subr.mxu0 0.0
      %407 = vmatpush1.msra.mxu0 0.0
      %408 = vmatprep.subr.mxu0 0.0
      %409 = vmatpush1.msra.mxu0 0.0
      %410 = vmatprep.subr.mxu0 0.0
      %411 = vmatpush1.msra.mxu0 0.0
      %412 = vmatprep.subr.mxu0 %v285
      %413 = vmatpush1.msra.mxu0 %v283
      %414 = vmatprep.subr.mxu0 0.0
      %415 = vmatpush2.msra.mxu0 0.0
      %416 = vmatprep.subr.mxu0 0.0
      %417 = vmatpush2.msra.mxu0 0.0
      %418 = vmatprep.subr.mxu0 0.0
      %419 = vmatpush2.msra.mxu0 0.0
      %420 = vmatprep.subr.mxu0 0.0
      %421 = vmatpush2.msra.mxu0 0.0
      %422 = vmatprep.subr.mxu0 0.0
      %423 = vmatpush2.msra.mxu0 0.0
      %424 = vmatprep.subr.mxu0 0.0
      %425 = vmatpush2.msra.mxu0 0.0
      %426 = vmatprep.subr.mxu0 0.0
      %427 = vmatpush2.msra.mxu0 0.0
      %428 = vmatprep.subr.mxu0 0.0
      %429 = vmatpush2.msra.mxu0 0.0
      %430 = vmatprep.subr.mxu0 0.0
      %431 = vmatpush2.msra.mxu0 0.0
      %432 = vmatprep.subr.mxu0 0.0
      %433 = vmatpush2.msra.mxu0 0.0
      %434 = vmatprep.subr.mxu0 0.0
      %435 = vmatpush2.msra.mxu0 0.0
      %436 = vmatprep.subr.mxu0 0.0
      %437 = vmatpush2.msra.mxu0 0.0
      %438 = vmatprep.subr.mxu0 0.0
      %439 = vmatpush2.msra.mxu0 0.0
      %440 = vmatprep.subr.mxu0 0.0
      %441 = vmatpush2.msra.mxu0 0.0
      %442 = vmatprep.subr.mxu0 0.0
      %443 = vmatpush2.msra.mxu0 0.0
      %444 = vmatprep.subr.mxu0 0.0
      %445 = vmatpush2.msra.mxu0 0.0
      %446 = vmatprep.mubr.f32.mxu0 0.0
      %447 = vmatmul.mubr.f32.gmra.mxu0 %v276
      %v448 = vpop.f32.mrf.mxu0
      %v449 = vadd.f32 0.0, %v448
      %v450 = vpop.f32.mrf.mxu0
      %v451 = vadd.f32 0.0, %v450
      %452 = vdwg.mxu0
      %453 = vmatprep.subr.mxu0 0.0
      %454 = vmatpush1.msra.mxu0 0.0
      %455 = vmatprep.subr.mxu0 0.0
      %456 = vmatpush1.msra.mxu0 0.0
      %457 = vmatprep.subr.mxu0 0.0
      %458 = vmatpush1.msra.mxu0 0.0
      %459 = vmatprep.subr.mxu0 0.0
      %460 = vmatpush1.msra.mxu0 0.0
      %461 = vmatprep.subr.mxu0 0.0
      %462 = vmatpush1.msra.mxu0 0.0
      %463 = vmatprep.subr.mxu0 0.0
      %464 = vmatpush1.msra.mxu0 0.0
      %465 = vmatprep.subr.mxu0 0.0
      %466 = vmatpush1.msra.mxu0 0.0
      %467 = vmatprep.subr.mxu0 0.0
      %468 = vmatpush1.msra.mxu0 0.0
      %469 = vmatprep.subr.mxu0 0.0
      %470 = vmatpush1.msra.mxu0 0.0
      %471 = vmatprep.subr.mxu0 0.0
      %472 = vmatpush1.msra.mxu0 0.0
      %473 = vmatprep.subr.mxu0 0.0
      %474 = vmatpush1.msra.mxu0 0.0
      %475 = vmatprep.subr.mxu0 0.0
      %476 = vmatpush1.msra.mxu0 0.0
      %477 = vmatprep.subr.mxu0 0.0
      %478 = vmatpush1.msra.mxu0 0.0
      %479 = vmatprep.subr.mxu0 0.0
      %480 = vmatpush1.msra.mxu0 0.0
      %481 = vmatprep.subr.mxu0 0.0
      %482 = vmatpush1.msra.mxu0 0.0
      %483 = vmatprep.subr.mxu0 %v289
      %484 = vmatpush1.msra.mxu0 %v287
      %485 = vmatprep.subr.mxu0 0.0
      %486 = vmatpush2.msra.mxu0 0.0
      %487 = vmatprep.subr.mxu0 0.0
      %488 = vmatpush2.msra.mxu0 0.0
      %489 = vmatprep.subr.mxu0 0.0
      %490 = vmatpush2.msra.mxu0 0.0
      %491 = vmatprep.subr.mxu0 0.0
      %492 = vmatpush2.msra.mxu0 0.0
      %493 = vmatprep.subr.mxu0 0.0
      %494 = vmatpush2.msra.mxu0 0.0
      %495 = vmatprep.subr.mxu0 0.0
      %496 = vmatpush2.msra.mxu0 0.0
      %497 = vmatprep.subr.mxu0 0.0
      %498 = vmatpush2.msra.mxu0 0.0
      %499 = vmatprep.subr.mxu0 0.0
      %500 = vmatpush2.msra.mxu0 0.0
      %501 = vmatprep.subr.mxu0 0.0
      %502 = vmatpush2.msra.mxu0 0.0
      %503 = vmatprep.subr.mxu0 0.0
      %504 = vmatpush2.msra.mxu0 0.0
      %505 = vmatprep.subr.mxu0 0.0
      %506 = vmatpush2.msra.mxu0 0.0
      %507 = vmatprep.subr.mxu0 0.0
      %508 = vmatpush2.msra.mxu0 0.0
      %509 = vmatprep.subr.mxu0 0.0
      %510 = vmatpush2.msra.mxu0 0.0
      %511 = vmatprep.subr.mxu0 0.0
      %512 = vmatpush2.msra.mxu0 0.0
      %513 = vmatprep.subr.mxu0 0.0
      %514 = vmatpush2.msra.mxu0 0.0
      %515 = vmatprep.subr.mxu0 0.0
      %516 = vmatpush2.msra.mxu0 0.0
      %517 = vmatprep.mubr.f32.mxu0 0.0
      %518 = vmatmul.mubr.f32.gmra.mxu0 %v276
      %v519 = vpop.f32.mrf.mxu0
      %v520 = vadd.f32 0.0, %v519
      %v521 = vpop.f32.mrf.mxu0
      %v522 = vadd.f32 0.0, %v521
      %523 = vdwg.mxu0
      %524 = vmatprep.subr.mxu0 0.0
      %525 = vmatpush1.msra.mxu0 0.0
      %526 = vmatprep.subr.mxu0 0.0
      %527 = vmatpush1.msra.mxu0 0.0
      %528 = vmatprep.subr.mxu0 0.0
      %529 = vmatpush1.msra.mxu0 0.0
      %530 = vmatprep.subr.mxu0 0.0
      %531 = vmatpush1.msra.mxu0 0.0
      %532 = vmatprep.subr.mxu0 0.0
      %533 = vmatpush1.msra.mxu0 0.0
      %534 = vmatprep.subr.mxu0 0.0
      %535 = vmatpush1.msra.mxu0 0.0
      %536 = vmatprep.subr.mxu0 0.0
      %537 = vmatpush1.msra.mxu0 0.0
      %538 = vmatprep.subr.mxu0 0.0
      %539 = vmatpush1.msra.mxu0 0.0
      %540 = vmatprep.subr.mxu0 0.0
      %541 = vmatpush1.msra.mxu0 0.0
      %542 = vmatprep.subr.mxu0 0.0
      %543 = vmatpush1.msra.mxu0 0.0
      %544 = vmatprep.subr.mxu0 0.0
      %545 = vmatpush1.msra.mxu0 0.0
      %546 = vmatprep.subr.mxu0 0.0
      %547 = vmatpush1.msra.mxu0 0.0
      %548 = vmatprep.subr.mxu0 0.0
      %549 = vmatpush1.msra.mxu0 0.0
      %550 = vmatprep.subr.mxu0 0.0
      %551 = vmatpush1.msra.mxu0 0.0
      %552 = vmatprep.subr.mxu0 0.0
      %553 = vmatpush1.msra.mxu0 0.0
      %554 = vmatprep.subr.mxu0 %v293
      %555 = vmatpush1.msra.mxu0 %v291
      %556 = vmatprep.subr.mxu0 0.0
      %557 = vmatpush2.msra.mxu0 0.0
      %558 = vmatprep.subr.mxu0 0.0
      %559 = vmatpush2.msra.mxu0 0.0
      %560 = vmatprep.subr.mxu0 0.0
      %561 = vmatpush2.msra.mxu0 0.0
      %562 = vmatprep.subr.mxu0 0.0
      %563 = vmatpush2.msra.mxu0 0.0
      %564 = vmatprep.subr.mxu0 0.0
      %565 = vmatpush2.msra.mxu0 0.0
      %566 = vmatprep.subr.mxu0 0.0
      %567 = vmatpush2.msra.mxu0 0.0
      %568 = vmatprep.subr.mxu0 0.0
      %569 = vmatpush2.msra.mxu0 0.0
      %570 = vmatprep.subr.mxu0 0.0
      %571 = vmatpush2.msra.mxu0 0.0
      %572 = vmatprep.subr.mxu0 0.0
      %573 = vmatpush2.msra.mxu0 0.0
      %574 = vmatprep.subr.mxu0 0.0
      %575 = vmatpush2.msra.mxu0 0.0
      %576 = vmatprep.subr.mxu0 0.0
      %577 = vmatpush2.msra.mxu0 0.0
      %578 = vmatprep.subr.mxu0 0.0
      %579 = vmatpush2.msra.mxu0 0.0
      %580 = vmatprep.subr.mxu0 0.0
      %581 = vmatpush2.msra.mxu0 0.0
      %582 = vmatprep.subr.mxu0 0.0
      %583 = vmatpush2.msra.mxu0 0.0
      %584 = vmatprep.subr.mxu0 0.0
      %585 = vmatpush2.msra.mxu0 0.0
      %586 = vmatprep.subr.mxu0 0.0
      %587 = vmatpush2.msra.mxu0 0.0
      %588 = vmatprep.mubr.f32.mxu0 0.0
      %589 = vmatmul.mubr.f32.gmra.mxu0 %v276
      %v590 = vpop.f32.mrf.mxu0
      %v591 = vadd.f32 0.0, %v590
      %v592 = vpop.f32.mrf.mxu0
      %v593 = vadd.f32 0.0, %v592
      %594 = vdwg.mxu0
      %595 = vmatprep.subr.mxu0 0.0
      %596 = vmatpush1.msra.mxu0 0.0
      %597 = vmatprep.subr.mxu0 0.0
      %598 = vmatpush1.msra.mxu0 0.0
      %599 = vmatprep.subr.mxu0 0.0
      %600 = vmatpush1.msra.mxu0 0.0
      %601 = vmatprep.subr.mxu0 0.0
      %602 = vmatpush1.msra.mxu0 0.0
      %603 = vmatprep.subr.mxu0 0.0
      %604 = vmatpush1.msra.mxu0 0.0
      %605 = vmatprep.subr.mxu0 0.0
      %606 = vmatpush1.msra.mxu0 0.0
      %607 = vmatprep.subr.mxu0 0.0
      %608 = vmatpush1.msra.mxu0 0.0
      %609 = vmatprep.subr.mxu0 0.0
      %610 = vmatpush1.msra.mxu0 0.0
      %611 = vmatprep.subr.mxu0 0.0
      %612 = vmatpush1.msra.mxu0 0.0
      %613 = vmatprep.subr.mxu0 0.0
      %614 = vmatpush1.msra.mxu0 0.0
      %615 = vmatprep.subr.mxu0 0.0
      %616 = vmatpush1.msra.mxu0 0.0
      %617 = vmatprep.subr.mxu0 0.0
      %618 = vmatpush1.msra.mxu0 0.0
      %619 = vmatprep.subr.mxu0 0.0
      %620 = vmatpush1.msra.mxu0 0.0
      %621 = vmatprep.subr.mxu0 0.0
      %622 = vmatpush1.msra.mxu0 0.0
      %623 = vmatprep.subr.mxu0 0.0
      %624 = vmatpush1.msra.mxu0 0.0
      %625 = vmatprep.subr.mxu0 %v297
      %626 = vmatpush1.msra.mxu0 %v295
      %627 = vmatprep.subr.mxu0 0.0
      %628 = vmatpush2.msra.mxu0 0.0
      %629 = vmatprep.subr.mxu0 0.0
      %630 = vmatpush2.msra.mxu0 0.0
      %631 = vmatprep.subr.mxu0 0.0
      %632 = vmatpush2.msra.mxu0 0.0
      %633 = vmatprep.subr.mxu0 0.0
      %634 = vmatpush2.msra.mxu0 0.0
      %635 = vmatprep.subr.mxu0 0.0
      %636 = vmatpush2.msra.mxu0 0.0
      %637 = vmatprep.subr.mxu0 0.0
      %638 = vmatpush2.msra.mxu0 0.0
      %639 = vmatprep.subr.mxu0 0.0
      %640 = vmatpush2.msra.mxu0 0.0
      %641 = vmatprep.subr.mxu0 0.0
      %642 = vmatpush2.msra.mxu0 0.0
      %643 = vmatprep.subr.mxu0 0.0
      %644 = vmatpush2.msra.mxu0 0.0
      %645 = vmatprep.subr.mxu0 0.0
      %646 = vmatpush2.msra.mxu0 0.0
      %647 = vmatprep.subr.mxu0 0.0
      %648 = vmatpush2.msra.mxu0 0.0
      %649 = vmatprep.subr.mxu0 0.0
      %650 = vmatpush2.msra.mxu0 0.0
      %651 = vmatprep.subr.mxu0 0.0
      %652 = vmatpush2.msra.mxu0 0.0
      %653 = vmatprep.subr.mxu0 0.0
      %654 = vmatpush2.msra.mxu0 0.0
      %655 = vmatprep.subr.mxu0 0.0
      %656 = vmatpush2.msra.mxu0 0.0
      %657 = vmatprep.subr.mxu0 0.0
      %658 = vmatpush2.msra.mxu0 0.0
      %659 = vmatprep.mubr.f32.mxu0 0.0
      %660 = vmatmul.mubr.f32.gmra.mxu0 %v276
      %v661 = vpop.f32.mrf.mxu0
      %v662 = vadd.f32 0.0, %v661
      %v663 = vpop.f32.mrf.mxu0
      %v664 = vadd.f32 0.0, %v663
      %665 = vdwg.mxu0
      %666 = vmatprep.subr.mxu0 0.0
      %667 = vmatpush1.msra.mxu0 0.0
      %668 = vmatprep.subr.mxu0 0.0
      %669 = vmatpush1.msra.mxu0 0.0
      %670 = vmatprep.subr.mxu0 0.0
      %671 = vmatpush1.msra.mxu0 0.0
      %672 = vmatprep.subr.mxu0 0.0
      %673 = vmatpush1.msra.mxu0 0.0
      %674 = vmatprep.subr.mxu0 0.0
      %675 = vmatpush1.msra.mxu0 0.0
      %676 = vmatprep.subr.mxu0 0.0
      %677 = vmatpush1.msra.mxu0 0.0
      %678 = vmatprep.subr.mxu0 0.0
      %679 = vmatpush1.msra.mxu0 0.0
      %680 = vmatprep.subr.mxu0 0.0
      %681 = vmatpush1.msra.mxu0 0.0
      %682 = vmatprep.subr.mxu0 0.0
      %683 = vmatpush1.msra.mxu0 0.0
      %684 = vmatprep.subr.mxu0 0.0
      %685 = vmatpush1.msra.mxu0 0.0
      %686 = vmatprep.subr.mxu0 0.0
      %687 = vmatpush1.msra.mxu0 0.0
      %688 = vmatprep.subr.mxu0 0.0
      %689 = vmatpush1.msra.mxu0 0.0
      %690 = vmatprep.subr.mxu0 0.0
      %691 = vmatpush1.msra.mxu0 0.0
      %692 = vmatprep.subr.mxu0 0.0
      %693 = vmatpush1.msra.mxu0 0.0
      %694 = vmatprep.subr.mxu0 0.0
      %695 = vmatpush1.msra.mxu0 0.0
      %696 = vmatprep.subr.mxu0 %v301
      %697 = vmatpush1.msra.mxu0 %v299
      %698 = vmatprep.subr.mxu0 0.0
      %699 = vmatpush2.msra.mxu0 0.0
      %700 = vmatprep.subr.mxu0 0.0
      %701 = vmatpush2.msra.mxu0 0.0
      %702 = vmatprep.subr.mxu0 0.0
      %703 = vmatpush2.msra.mxu0 0.0
      %704 = vmatprep.subr.mxu0 0.0
      %705 = vmatpush2.msra.mxu0 0.0
      %706 = vmatprep.subr.mxu0 0.0
      %707 = vmatpush2.msra.mxu0 0.0
      %708 = vmatprep.subr.mxu0 0.0
      %709 = vmatpush2.msra.mxu0 0.0
      %710 = vmatprep.subr.mxu0 0.0
      %711 = vmatpush2.msra.mxu0 0.0
      %712 = vmatprep.subr.mxu0 0.0
      %713 = vmatpush2.msra.mxu0 0.0
      %714 = vmatprep.subr.mxu0 0.0
      %715 = vmatpush2.msra.mxu0 0.0
      %716 = vmatprep.subr.mxu0 0.0
      %717 = vmatpush2.msra.mxu0 0.0
      %718 = vmatprep.subr.mxu0 0.0
      %719 = vmatpush2.msra.mxu0 0.0
      %720 = vmatprep.subr.mxu0 0.0
      %721 = vmatpush2.msra.mxu0 0.0
      %722 = vmatprep.subr.mxu0 0.0
      %723 = vmatpush2.msra.mxu0 0.0
      %724 = vmatprep.subr.mxu0 0.0
      %725 = vmatpush2.msra.mxu0 0.0
      %726 = vmatprep.subr.mxu0 0.0
      %727 = vmatpush2.msra.mxu0 0.0
      %728 = vmatprep.subr.mxu0 0.0
      %729 = vmatpush2.msra.mxu0 0.0
      %730 = vmatprep.mubr.f32.mxu0 0.0
      %731 = vmatmul.mubr.f32.gmra.mxu0 %v276
      %v732 = vpop.f32.mrf.mxu0
      %v733 = vadd.f32 0.0, %v732
      %v734 = vpop.f32.mrf.mxu0
      %v735 = vadd.f32 0.0, %v734
      %736 = vdwg.mxu0
      %737 = vmatprep.subr.mxu0 0.0
      %738 = vmatpush1.msra.mxu0 0.0
      %739 = vmatprep.subr.mxu0 0.0
      %740 = vmatpush1.msra.mxu0 0.0
      %741 = vmatprep.subr.mxu0 0.0
      %742 = vmatpush1.msra.mxu0 0.0
      %743 = vmatprep.subr.mxu0 0.0
      %744 = vmatpush1.msra.mxu0 0.0
      %745 = vmatprep.subr.mxu0 0.0
      %746 = vmatpush1.msra.mxu0 0.0
      %747 = vmatprep.subr.mxu0 0.0
      %748 = vmatpush1.msra.mxu0 0.0
      %749 = vmatprep.subr.mxu0 0.0
      %750 = vmatpush1.msra.mxu0 0.0
      %751 = vmatprep.subr.mxu0 0.0
      %752 = vmatpush1.msra.mxu0 0.0
      %753 = vmatprep.subr.mxu0 0.0
      %754 = vmatpush1.msra.mxu0 0.0
      %755 = vmatprep.subr.mxu0 0.0
      %756 = vmatpush1.msra.mxu0 0.0
      %757 = vmatprep.subr.mxu0 0.0
      %758 = vmatpush1.msra.mxu0 0.0
      %759 = vmatprep.subr.mxu0 0.0
      %760 = vmatpush1.msra.mxu0 0.0
      %761 = vmatprep.subr.mxu0 0.0
      %762 = vmatpush1.msra.mxu0 0.0
      %763 = vmatprep.subr.mxu0 0.0
      %764 = vmatpush1.msra.mxu0 0.0
      %765 = vmatprep.subr.mxu0 0.0
      %766 = vmatpush1.msra.mxu0 0.0
      %767 = vmatprep.subr.mxu0 %v305
      %768 = vmatpush1.msra.mxu0 %v303
      %769 = vmatprep.subr.mxu0 0.0
      %770 = vmatpush2.msra.mxu0 0.0
      %771 = vmatprep.subr.mxu0 0.0
      %772 = vmatpush2.msra.mxu0 0.0
      %773 = vmatprep.subr.mxu0 0.0
      %774 = vmatpush2.msra.mxu0 0.0
      %775 = vmatprep.subr.mxu0 0.0
      %776 = vmatpush2.msra.mxu0 0.0
      %777 = vmatprep.subr.mxu0 0.0
      %778 = vmatpush2.msra.mxu0 0.0
      %779 = vmatprep.subr.mxu0 0.0
      %780 = vmatpush2.msra.mxu0 0.0
      %781 = vmatprep.subr.mxu0 0.0
      %782 = vmatpush2.msra.mxu0 0.0
      %783 = vmatprep.subr.mxu0 0.0
      %784 = vmatpush2.msra.mxu0 0.0
      %785 = vmatprep.subr.mxu0 0.0
      %786 = vmatpush2.msra.mxu0 0.0
      %787 = vmatprep.subr.mxu0 0.0
      %788 = vmatpush2.msra.mxu0 0.0
      %789 = vmatprep.subr.mxu0 0.0
      %790 = vmatpush2.msra.mxu0 0.0
      %791 = vmatprep.subr.mxu0 0.0
      %792 = vmatpush2.msra.mxu0 0.0
      %793 = vmatprep.subr.mxu0 0.0
      %794 = vmatpush2.msra.mxu0 0.0
      %795 = vmatprep.subr.mxu0 0.0
      %796 = vmatpush2.msra.mxu0 0.0
      %797 = vmatprep.subr.mxu0 0.0
      %798 = vmatpush2.msra.mxu0 0.0
      %799 = vmatprep.subr.mxu0 0.0
      %800 = vmatpush2.msra.mxu0 0.0
      %801 = vmatprep.mubr.f32.mxu0 0.0
      %802 = vmatmul.mubr.f32.gmra.mxu0 %v276
      %v803 = vpop.f32.mrf.mxu0
      %v804 = vadd.f32 0.0, %v803
      %v805 = vpop.f32.mrf.mxu0
      %v806 = vadd.f32 0.0, %v805
      %807 = vdwg.mxu0
      %808 = vmatprep.subr.mxu0 0.0
      %809 = vmatpush1.msra.mxu0 0.0
      %810 = vmatprep.subr.mxu0 0.0
      %811 = vmatpush1.msra.mxu0 0.0
      %812 = vmatprep.subr.mxu0 0.0
      %813 = vmatpush1.msra.mxu0 0.0
      %814 = vmatprep.subr.mxu0 0.0
      %815 = vmatpush1.msra.mxu0 0.0
      %816 = vmatprep.subr.mxu0 0.0
      %817 = vmatpush1.msra.mxu0 0.0
      %818 = vmatprep.subr.mxu0 0.0
      %819 = vmatpush1.msra.mxu0 0.0
      %820 = vmatprep.subr.mxu0 0.0
      %821 = vmatpush1.msra.mxu0 0.0
      %822 = vmatprep.subr.mxu0 0.0
      %823 = vmatpush1.msra.mxu0 0.0
      %824 = vmatprep.subr.mxu0 0.0
      %825 = vmatpush1.msra.mxu0 0.0
      %826 = vmatprep.subr.mxu0 0.0
      %827 = vmatpush1.msra.mxu0 0.0
      %828 = vmatprep.subr.mxu0 0.0
      %829 = vmatpush1.msra.mxu0 0.0
      %830 = vmatprep.subr.mxu0 0.0
      %831 = vmatpush1.msra.mxu0 0.0
      %832 = vmatprep.subr.mxu0 0.0
      %833 = vmatpush1.msra.mxu0 0.0
      %834 = vmatprep.subr.mxu0 0.0
      %835 = vmatpush1.msra.mxu0 0.0
      %836 = vmatprep.subr.mxu0 0.0
      %837 = vmatpush1.msra.mxu0 0.0
      %838 = vmatprep.subr.mxu0 %v309
      %839 = vmatpush1.msra.mxu0 %v307
      %840 = vmatprep.subr.mxu0 0.0
      %841 = vmatpush2.msra.mxu0 0.0
      %842 = vmatprep.subr.mxu0 0.0
      %843 = vmatpush2.msra.mxu0 0.0
      %844 = vmatprep.subr.mxu0 0.0
      %845 = vmatpush2.msra.mxu0 0.0
      %846 = vmatprep.subr.mxu0 0.0
      %847 = vmatpush2.msra.mxu0 0.0
      %848 = vmatprep.subr.mxu0 0.0
      %849 = vmatpush2.msra.mxu0 0.0
      %850 = vmatprep.subr.mxu0 0.0
      %851 = vmatpush2.msra.mxu0 0.0
      %852 = vmatprep.subr.mxu0 0.0
      %853 = vmatpush2.msra.mxu0 0.0
      %854 = vmatprep.subr.mxu0 0.0
      %855 = vmatpush2.msra.mxu0 0.0
      %856 = vmatprep.subr.mxu0 0.0
      %857 = vmatpush2.msra.mxu0 0.0
      %858 = vmatprep.subr.mxu0 0.0
      %859 = vmatpush2.msra.mxu0 0.0
      %860 = vmatprep.subr.mxu0 0.0
      %861 = vmatpush2.msra.mxu0 0.0
      %862 = vmatprep.subr.mxu0 0.0
      %863 = vmatpush2.msra.mxu0 0.0
      %864 = vmatprep.subr.mxu0 0.0
      %865 = vmatpush2.msra.mxu0 0.0
      %866 = vmatprep.subr.mxu0 0.0
      %867 = vmatpush2.msra.mxu0 0.0
      %868 = vmatprep.subr.mxu0 0.0
      %869 = vmatpush2.msra.mxu0 0.0
      %870 = vmatprep.subr.mxu0 0.0
      %871 = vmatpush2.msra.mxu0 0.0
      %872 = vmatprep.mubr.f32.mxu0 0.0
      %873 = vmatmul.mubr.f32.gmra.mxu0 %v276
      %v874 = vpop.f32.mrf.mxu0
      %v875 = vadd.f32 0.0, %v874
      %v876 = vpop.f32.mrf.mxu0
      %v877 = vadd.f32 0.0, %v876
      %878 = vdwg.mxu0
      %v879 = vld [vmem:[%s231] sm:$0xff]
      %v880 = vadd.f32 %v378, %v380
      %v881 = vadd.f32 %v880, %v449
      %v882 = vadd.f32 %v881, %v451
      %v883 = vadd.f32 %v882, %v520
      %v884 = vadd.f32 %v883, %v522
      %v885 = vadd.f32 %v884, %v591
      %v886 = vadd.f32 %v885, %v593
      %v887 = vadd.f32 %v886, %v662
      %v888 = vadd.f32 %v887, %v664
      %v889 = vadd.f32 %v888, %v733
      %v890 = vadd.f32 %v889, %v735
      %v891 = vadd.f32 %v890, %v804
      %v892 = vadd.f32 %v891, %v806
      %v893 = vadd.f32 %v892, %v875
      %v894 = vadd.f32 %v893, %v877
      %895 = vadd.xlane.f32.xlu0 %v894
      %v896 = vpop.xlane.xlu0 %895
      %v897 = vadd.f32 %v879, %v896
      %vm898 = vcmask 7168
      %899 = vst.msk [vmem:[%s231] sm:$0xff] %vm898, %v897
      %v900 = vld [vmem:[%s239] sm:$0xff]
      %v901 = vmul.f32 %v378, %v378
      %v902 = vmul.f32 %v380, %v380
      %v903 = vmul.f32 %v449, %v449
      %v904 = vmul.f32 %v451, %v451
      %v905 = vmul.f32 %v520, %v520
      %v906 = vmul.f32 %v522, %v522
      %v907 = vmul.f32 %v591, %v591
      %v908 = vmul.f32 %v593, %v593
      %v909 = vmul.f32 %v662, %v662
      %v910 = vmul.f32 %v664, %v664
      %v911 = vmul.f32 %v733, %v733
      %v912 = vmul.f32 %v735, %v735
      %v913 = vmul.f32 %v804, %v804
      %v914 = vmul.f32 %v806, %v806
      %v915 = vmul.f32 %v875, %v875
      %v916 = vmul.f32 %v877, %v877
      %v917 = vadd.f32 %v901, %v902
      %v918 = vadd.f32 %v917, %v903
      %v919 = vadd.f32 %v918, %v904
      %v920 = vadd.f32 %v919, %v905
      %v921 = vadd.f32 %v920, %v906
      %v922 = vadd.f32 %v921, %v907
      %v923 = vadd.f32 %v922, %v908
      %v924 = vadd.f32 %v923, %v909
      %v925 = vadd.f32 %v924, %v910
      %v926 = vadd.f32 %v925, %v911
      %v927 = vadd.f32 %v926, %v912
      %v928 = vadd.f32 %v927, %v913
      %v929 = vadd.f32 %v928, %v914
      %v930 = vadd.f32 %v929, %v915
      %v931 = vadd.f32 %v930, %v916
      %932 = vadd.xlane.f32.xlu0 %v931
      %v933 = vpop.xlane.xlu0 %932
      %v934 = vadd.f32 %v900, %v933
      %935 = vst.msk [vmem:[%s239] sm:$0xff] %vm898, %v934
      %s936 = smul.u32 %s20, 2
      %s937 = sadd.s32 %s936, %s21
      %p938 = scmp.lt.s32.totalorder %s937, 1
      %s939 = scalar_select %p938, %s937, 1
      %s940 = smul.addr %s939, 8
      %s941 = scalar_lea.vmem %s2, %s940
      %s942 = smul.u32 %s20, 2
      %s943 = sadd.s32 %s942, %s21
      %p944 = scmp.lt.s32.totalorder %s943, 1
      %s945 = scalar_select %p944, %s943, 1
      %s946 = smul.addr %s945, 8
      %s947 = scalar_lea.vmem %s3, %s946
      // Predicated region
      $region33: #{mlp_forward.3} parent=27 // pred_check
        %p948 = pneg %p107
      $region34: #{mlp_forward.3} parent=27 // pred_check_branch
        %950 = sbr.rel (%p948) target = $region36
      $region35: #{mlp_forward.3} parent=27 // pred_region
        %s951 = smul.u32 %s20, 2
        %s952 = sadd.s32 %s951, %s21
      $region36: #{mlp_forward.3} parent=27 // pred_fallthru
        _
      // Predicated region
      $region37: #{mlp_forward.3} parent=27 // pred_check
        %p953 = pneg %p137
      $region38: #{mlp_forward.3} parent=27 // pred_check_branch
        %955 = sbr.rel (%p953) target = $region40
      $region39: #{mlp_forward.3} parent=27 // pred_region
        %s956 = smul.u32 %s20, 2
        %s957 = sadd.s32 %s956, %s21
      $region40: #{mlp_forward.3} parent=27 // pred_fallthru
        _
    $region28: #{mlp_forward.3} parent=5 // pred_fallthru
      _
    %p958 = scmp.le.s32.totalorder 2, %s10
    // Predicated region
    $region41: #{mlp_forward.3} parent=5 // pred_check
      %p959 = pneg %p958
    $region42: #{mlp_forward.3} parent=5 // pred_check_branch
      %961 = sbr.rel (%p959) target = $region44
    $region43: #{mlp_forward.3} parent=5 // pred_region
      %s962 = ssub.s32 %s10, 2
      // Predicated region
      $region45: #{mlp_forward.3} parent=43 // pred_check
        %p963 = pneg %p113
      $region46: #{mlp_forward.3} parent=43 // pred_check_branch
        %965 = sbr.rel (%p963) target = $region48
      $region47: #{mlp_forward.3} parent=43 // pred_region
        %s966 = smul.u32 %s23, 2
        %s967 = sadd.s32 %s966, %s24
        %p968 = scmp.lt.s32.totalorder %s967, 1
        %s969 = scalar_select %p968, %s967, 1
        %s970 = smul.addr %s969, 8
        %s971 = scalar_lea.vmem %s2, %s970
      $region48: #{mlp_forward.3} parent=43 // pred_fallthru
        _
      // Predicated region
      $region49: #{mlp_forward.3} parent=43 // pred_check
        %p972 = pneg %p143
      $region50: #{mlp_forward.3} parent=43 // pred_check_branch
        %974 = sbr.rel (%p972) target = $region52
      $region51: #{mlp_forward.3} parent=43 // pred_region
        %s975 = smul.u32 %s23, 2
        %s976 = sadd.s32 %s975, %s24
        %p977 = scmp.lt.s32.totalorder %s976, 1
        %s978 = scalar_select %p977, %s976, 1
        %s979 = smul.addr %s978, 8
        %s980 = scalar_lea.vmem %s3, %s979
      $region52: #{mlp_forward.3} parent=43 // pred_fallthru
        _
    $region44: #{mlp_forward.3} parent=5 // pred_fallthru
      _
  $region6: #{mlp_forward.3} parent=0 // loop_footer
    %s14 = sadd.s32 1, %s10
  $region7: #{mlp_forward.3} parent=0 // loop_footer_branch
    %9 = sbr.rel target = $region3
  $region8: #{mlp_forward.3} parent=0 // loop_exit
    _

// kernel: mlp_forward.4
$region0: #{mlp_forward.4}
  #allocation0 [shape = 'u32[]', space=smem, size = 0x4, offset = 0x4, fixed_abs, tag = 'smem constant byte address 0x4 - core index']
  #allocation1 [shape = 'u32[144,128]{1,0:T(1,128)}', space=vmem, size = 0x12000, scoped, tag = 'internal scratch']
  %s0 = inlined_call_operand.vmem [shape: f32[2,4,2048], index: 0, kind: input, shape index: {}]
  %s1 = inlined_call_operand.vmem [shape: f32[8,4], index: 1, kind: input, shape index: {}]
  %s2 = inlined_call_operand.vmem [shape: f32[8,1], index: 2, kind: input, shape index: {}]
  %s3 = inlined_call_operand.vmem [shape: f32[8,1], index: 3, kind: input, shape index: {}]
  %s4 = inlined_call_operand.vmem [shape: f32[8,1], index: 4, kind: input, shape index: {}]
  %s5 = inlined_call_operand.vmem [shape: f32[4,8], index: 5, kind: input, shape index: {}]
  %s6 = inlined_call_operand.vmem [shape: f32[2,4,2048], index: 6, kind: output, shape index: {0}]
  %s7 = inlined_call_operand.vmem [shape: f32[2,4,1], index: 7, kind: output, shape index: {1}]
  %s8 = inlined_call_operand.vmem [shape: f32[2,4,1], index: 8, kind: output, shape index: {2}]
  %9 = xla_tuple %s6, %s7, %s8
  %s10 = sld [smem:[#allocation0]]
  $region77: #{mlp_forward.4} parent=0
    _
  %s12 = ssub.s32 1, %s10
  %s13 = scalar_select 0, %s12, %s10
  loop: start=0, step=1, limit=4
  $region2: #{mlp_forward.4} parent=0 // loop_pre_header
    _
  $region3: #{mlp_forward.4} parent=0 // loop_header
    %s15 = sphi 0, %s19
    %p16 = scmp.ge.s32.totalorder %s15, 4
    %s22 = sphi 0, %s41
    %s23 = sphi 0, %s37
    %s24 = sphi 0, %s33
    %s25 = sphi 0, %s22
    %s26 = sphi 0, %s23
    %s27 = sphi 0, %s24
    %s28 = sphi 0, %s25
    %s29 = sphi 0, %s26
    %s30 = sphi 0, %s27
    %s48 = sphi 0, %s50
    %s51 = sphi 0, %s48
    %s52 = sphi 0, %s51
    %s68 = sphi 0, %s52
    %s72 = sphi 0, %s72
    %s74 = sphi 0, %s72
    %s75 = sphi 0, %s74
    %s89 = sphi 0, %s75
    %s93 = sphi 0, %s93
    %s95 = sphi 0, %s93
    %s96 = sphi 0, %s95
    %s110 = sphi 0, %s96
    %s114 = sphi 0, %s114
    %s116 = sphi 0, %s114
    %s117 = sphi 0, %s116
    %s131 = sphi 0, %s117
    %s135 = sphi 0, %s135
    %s137 = sphi 0, %s135
    %s138 = sphi 0, %s137
    %s152 = sphi 0, %s138
    %s156 = sphi 0, %s156
    %s158 = sphi 0, %s156
    %s159 = sphi 0, %s158
    %s173 = sphi 0, %s159
    %s183 = sphi 0, %s185
    %s186 = sphi 0, %s183
    %s187 = sphi 0, %s186
    %s203 = sphi 0, %s187
    %s213 = sphi 0, %s215
    %s216 = sphi 0, %s213
    %s217 = sphi 0, %s216
    %s233 = sphi 0, %s217
    %s243 = sphi 0, %s245
    %s246 = sphi 0, %s243
    %s247 = sphi 0, %s246
    %s263 = sphi 0, %s247
  $region4: #{mlp_forward.4} parent=0 // loop_header_branch
    %18 = sbr.rel (%p16) target = $region8
  $region5: #{mlp_forward.4} parent=0 // loop_body
    %s20 = ssub.s32 %s15, 1
    %s21 = ssub.s32 %s15, 2
    %s31 = sadd.s32 1, %s24
    %p32 = scmp.ge.s32.totalorder %s31, 1
    %s33 = scalar_select %p32, 0, %s31
    %s34 = sadd.s32 1, %s23
    %s35 = scalar_select %p32, %s34, %s23
    %p36 = scmp.ge.s32.totalorder %s35, 2
    %s37 = scalar_select %p36, 0, %s35
    %s38 = sadd.s32 1, %s22
    %s39 = scalar_select %p36, %s38, %s22
    %p40 = scmp.ge.s32.totalorder %s39, 1
    %s41 = scalar_select %p40, 0, %s39
    %s42 = sadd.s32 %s22, %s24
    %s43 = sadd.s32 %s41, %s33
    %s44 = ssub.s32 %s23, %s37
    %s45 = ssub.s32 %s42, %s43
    %s46 = sor.u32 %s44, %s45
    %p47 = scmp.eq.s32.totalorder %s46, 0
    %s49 = sadd.s32 %s48, 1
    %s50 = scalar_select %p47, %s48, %s49
    %p53 = pneg %p47
    %p54 = scmp.eq.s32.totalorder %s15, 1
    %p55 = por %p53, %p54
    %p56 = scmp.ne.s32.totalorder %s48, %s51
    %p57 = scmp.eq.s32.totalorder %s15, 0
    %p58 = por %p56, %p57
    %p59 = scmp.ne.s32.totalorder %s48, %s51
    %p60 = scmp.eq.s32.totalorder %s20, 1
    %p61 = por %p59, %p60
    %p62 = scmp.ne.s32.totalorder %s51, %s52
    %p63 = scmp.eq.s32.totalorder %s20, 0
    %p64 = por %p62, %p63
    %p65 = scmp.ne.s32.totalorder %s51, %s52
    %p66 = scmp.eq.s32.totalorder %s21, 1
    %p67 = por %p65, %p66
    %p69 = scmp.ne.s32.totalorder %s52, %s68
    %p70 = scmp.eq.s32.totalorder %s21, 0
    %p71 = por %p69, %p70
    %s73 = sadd.s32 %s72, 1
    %p76 = scmp.eq.s32.totalorder %s15, 1
    %p77 = scmp.ne.s32.totalorder %s72, %s74
    %p78 = scmp.eq.s32.totalorder %s15, 0
    %p79 = por %p77, %p78
    %p80 = scmp.ne.s32.totalorder %s72, %s74
    %p81 = scmp.eq.s32.totalorder %s20, 1
    %p82 = por %p80, %p81
    %p83 = scmp.ne.s32.totalorder %s74, %s75
    %p84 = scmp.eq.s32.totalorder %s20, 0
    %p85 = por %p83, %p84
    %p86 = scmp.ne.s32.totalorder %s74, %s75
    %p87 = scmp.eq.s32.totalorder %s21, 1
    %p88 = por %p86, %p87
    %p90 = scmp.ne.s32.totalorder %s75, %s89
    %p91 = scmp.eq.s32.totalorder %s21, 0
    %p92 = por %p90, %p91
    %s94 = sadd.s32 %s93, 1
    %p97 = scmp.eq.s32.totalorder %s15, 1
    %p98 = scmp.ne.s32.totalorder %s93, %s95
    %p99 = scmp.eq.s32.totalorder %s15, 0
    %p100 = por %p98, %p99
    %p101 = scmp.ne.s32.totalorder %s93, %s95
    %p102 = scmp.eq.s32.totalorder %s20, 1
    %p103 = por %p101, %p102
    %p104 = scmp.ne.s32.totalorder %s95, %s96
    %p105 = scmp.eq.s32.totalorder %s20, 0
    %p106 = por %p104, %p105
    %p107 = scmp.ne.s32.totalorder %s95, %s96
    %p108 = scmp.eq.s32.totalorder %s21, 1
    %p109 = por %p107, %p108
    %p111 = scmp.ne.s32.totalorder %s96, %s110
    %p112 = scmp.eq.s32.totalorder %s21, 0
    %p113 = por %p111, %p112
    %s115 = sadd.s32 %s114, 1
    %p118 = scmp.eq.s32.totalorder %s15, 1
    %p119 = scmp.ne.s32.totalorder %s114, %s116
    %p120 = scmp.eq.s32.totalorder %s15, 0
    %p121 = por %p119, %p120
    %p122 = scmp.ne.s32.totalorder %s114, %s116
    %p123 = scmp.eq.s32.totalorder %s20, 1
    %p124 = por %p122, %p123
    %p125 = scmp.ne.s32.totalorder %s116, %s117
    %p126 = scmp.eq.s32.totalorder %s20, 0
    %p127 = por %p125, %p126
    %p128 = scmp.ne.s32.totalorder %s116, %s117
    %p129 = scmp.eq.s32.totalorder %s21, 1
    %p130 = por %p128, %p129
    %p132 = scmp.ne.s32.totalorder %s117, %s131
    %p133 = scmp.eq.s32.totalorder %s21, 0
    %p134 = por %p132, %p133
    %s136 = sadd.s32 %s135, 1
    %p139 = scmp.eq.s32.totalorder %s15, 1
    %p140 = scmp.ne.s32.totalorder %s135, %s137
    %p141 = scmp.eq.s32.totalorder %s15, 0
    %p142 = por %p140, %p141
    %p143 = scmp.ne.s32.totalorder %s135, %s137
    %p144 = scmp.eq.s32.totalorder %s20, 1
    %p145 = por %p143, %p144
    %p146 = scmp.ne.s32.totalorder %s137, %s138
    %p147 = scmp.eq.s32.totalorder %s20, 0
    %p148 = por %p146, %p147
    %p149 = scmp.ne.s32.totalorder %s137, %s138
    %p150 = scmp.eq.s32.totalorder %s21, 1
    %p151 = por %p149, %p150
    %p153 = scmp.ne.s32.totalorder %s138, %s152
    %p154 = scmp.eq.s32.totalorder %s21, 0
    %p155 = por %p153, %p154
    %s157 = sadd.s32 %s156, 1
    %p160 = scmp.eq.s32.totalorder %s15, 1
    %p161 = scmp.ne.s32.totalorder %s156, %s158
    %p162 = scmp.eq.s32.totalorder %s15, 0
    %p163 = por %p161, %p162
    %p164 = scmp.ne.s32.totalorder %s156, %s158
    %p165 = scmp.eq.s32.totalorder %s20, 1
    %p166 = por %p164, %p165
    %p167 = scmp.ne.s32.totalorder %s158, %s159
    %p168 = scmp.eq.s32.totalorder %s20, 0
    %p169 = por %p167, %p168
    %p170 = scmp.ne.s32.totalorder %s158, %s159
    %p171 = scmp.eq.s32.totalorder %s21, 1
    %p172 = por %p170, %p171
    %p174 = scmp.ne.s32.totalorder %s159, %s173
    %p175 = scmp.eq.s32.totalorder %s21, 0
    %p176 = por %p174, %p175
    %s177 = sadd.s32 %s22, %s24
    %s178 = sadd.s32 %s41, %s33
    %s179 = ssub.s32 %s23, %s37
    %s180 = ssub.s32 %s177, %s178
    %s181 = sor.u32 %s179, %s180
    %p182 = scmp.eq.s32.totalorder %s181, 0
    %s184 = sadd.s32 %s183, 1
    %s185 = scalar_select %p182, %s183, %s184
    %p188 = pneg %p182
    %p189 = scmp.eq.s32.totalorder %s15, 1
    %p190 = por %p188, %p189
    %p191 = scmp.ne.s32.totalorder %s183, %s186
    %p192 = scmp.eq.s32.totalorder %s15, 0
    %p193 = por %p191, %p192
    %p194 = scmp.ne.s32.totalorder %s183, %s186
    %p195 = scmp.eq.s32.totalorder %s20, 1
    %p196 = por %p194, %p195
    %p197 = scmp.ne.s32.totalorder %s186, %s187
    %p198 = scmp.eq.s32.totalorder %s20, 0
    %p199 = por %p197, %p198
    %p200 = scmp.ne.s32.totalorder %s186, %s187
    %p201 = scmp.eq.s32.totalorder %s21, 1
    %p202 = por %p200, %p201
    %p204 = scmp.ne.s32.totalorder %s187, %s203
    %p205 = scmp.eq.s32.totalorder %s21, 0
    %p206 = por %p204, %p205
    %s207 = smul.u32 %s22, 2
    %s208 = sadd.s32 %s207, %s23
    %s209 = smul.u32 %s41, 2
    %s210 = sadd.s32 %s209, %s37
    %s211 = ssub.s32 %s208, %s210
    %p212 = scmp.eq.s32.totalorder %s211, 0
    %s214 = sadd.s32 %s213, 1
    %s215 = scalar_select %p212, %s213, %s214
    %p218 = pneg %p212
    %p219 = scmp.eq.s32.totalorder %s15, 1
    %p220 = por %p218, %p219
    %p221 = scmp.ne.s32.totalorder %s213, %s216
    %p222 = scmp.eq.s32.totalorder %s15, 0
    %p223 = por %p221, %p222
    %p224 = scmp.ne.s32.totalorder %s213, %s216
    %p225 = scmp.eq.s32.totalorder %s20, 1
    %p226 = por %p224, %p225
    %p227 = scmp.ne.s32.totalorder %s216, %s217
    %p228 = scmp.eq.s32.totalorder %s20, 0
    %p229 = por %p227, %p228
    %p230 = scmp.ne.s32.totalorder %s216, %s217
    %p231 = scmp.eq.s32.totalorder %s21, 1
    %p232 = por %p230, %p231
    %p234 = scmp.ne.s32.totalorder %s217, %s233
    %p235 = scmp.eq.s32.totalorder %s21, 0
    %p236 = por %p234, %p235
    %s237 = smul.u32 %s22, 2
    %s238 = sadd.s32 %s237, %s23
    %s239 = smul.u32 %s41, 2
    %s240 = sadd.s32 %s239, %s37
    %s241 = ssub.s32 %s238, %s240
    %p242 = scmp.eq.s32.totalorder %s241, 0
    %s244 = sadd.s32 %s243, 1
    %s245 = scalar_select %p242, %s243, %s244
    %p248 = pneg %p242
    %p249 = scmp.eq.s32.totalorder %s15, 1
    %p250 = por %p248, %p249
    %p251 = scmp.ne.s32.totalorder %s243, %s246
    %p252 = scmp.eq.s32.totalorder %s15, 0
    %p253 = por %p251, %p252
    %p254 = scmp.ne.s32.totalorder %s243, %s246
    %p255 = scmp.eq.s32.totalorder %s20, 1
    %p256 = por %p254, %p255
    %p257 = scmp.ne.s32.totalorder %s246, %s247
    %p258 = scmp.eq.s32.totalorder %s20, 0
    %p259 = por %p257, %p258
    %p260 = scmp.ne.s32.totalorder %s246, %s247
    %p261 = scmp.eq.s32.totalorder %s21, 1
    %p262 = por %p260, %p261
    %p264 = scmp.ne.s32.totalorder %s247, %s263
    %p265 = scmp.eq.s32.totalorder %s21, 0
    %p266 = por %p264, %p265
    %p267 = scmp.le.s32.totalorder 1, %s15
    %p268 = scmp.lt.s32.totalorder %s15, 3
    %p269 = pnand %p267, %p268
    %p270 = pneg %p269
    // Predicated region
    $region9: #{mlp_forward.4} parent=5 // pred_check
      _
    $region10: #{mlp_forward.4} parent=5 // pred_check_branch
      %272 = sbr.rel (%p269) target = $region12
    $region11: #{mlp_forward.4} parent=5 // pred_region
      %s273 = ssub.s32 %s15, 1
      // Predicated region
      $region13: #{mlp_forward.4} parent=11 // pred_check
        %p274 = pneg %p85
      $region14: #{mlp_forward.4} parent=11 // pred_check_branch
        %276 = sbr.rel (%p274) target = $region16
      $region15: #{mlp_forward.4} parent=11 // pred_region
        _
      $region16: #{mlp_forward.4} parent=11 // pred_fallthru
        _
      // Predicated region
      $region17: #{mlp_forward.4} parent=11 // pred_check
        %p277 = pneg %p106
      $region18: #{mlp_forward.4} parent=11 // pred_check_branch
        %279 = sbr.rel (%p277) target = $region20
      $region19: #{mlp_forward.4} parent=11 // pred_region
        _
      $region20: #{mlp_forward.4} parent=11 // pred_fallthru
        _
      // Predicated region
      $region21: #{mlp_forward.4} parent=11 // pred_check
        %p280 = pneg %p127
      $region22: #{mlp_forward.4} parent=11 // pred_check_branch
        %282 = sbr.rel (%p280) target = $region24
      $region23: #{mlp_forward.4} parent=11 // pred_region
        _
      $region24: #{mlp_forward.4} parent=11 // pred_fallthru
        _
      // Predicated region
      $region25: #{mlp_forward.4} parent=11 // pred_check
        %p283 = pneg %p148
      $region26: #{mlp_forward.4} parent=11 // pred_check_branch
        %285 = sbr.rel (%p283) target = $region28
      $region27: #{mlp_forward.4} parent=11 // pred_region
        _
      $region28: #{mlp_forward.4} parent=11 // pred_fallthru
        _
      // Predicated region
      $region29: #{mlp_forward.4} parent=11 // pred_check
        %p286 = pneg %p169
      $region30: #{mlp_forward.4} parent=11 // pred_check_branch
        %288 = sbr.rel (%p286) target = $region32
      $region31: #{mlp_forward.4} parent=11 // pred_region
        _
      $region32: #{mlp_forward.4} parent=11 // pred_fallthru
        _
    $region12: #{mlp_forward.4} parent=5 // pred_fallthru
      _
    %p289 = scmp.lt.s32.totalorder %s15, 2
    // Predicated region
    $region33: #{mlp_forward.4} parent=5 // pred_check
      %p290 = pneg %p289
    $region34: #{mlp_forward.4} parent=5 // pred_check_branch
      %292 = sbr.rel (%p290) target = $region36
    $region35: #{mlp_forward.4} parent=5 // pred_region
      // Predicated region
      $region37: #{mlp_forward.4} parent=35 // pred_check
        %p293 = pneg %p58
      $region38: #{mlp_forward.4} parent=35 // pred_check_branch
        %295 = sbr.rel (%p293) target = $region40
      $region39: #{mlp_forward.4} parent=35 // pred_region
        %s296 = sadd.s32 %s22, %s24
        %s297 = smul.u32 16, %s296
        %p298 = scmp.lt.s32.totalorder %s23, 1
        %s299 = scalar_select %p298, %s23, 1
        %p300 = scmp.lt.s32.totalorder %s297, 15
        %s301 = scalar_select %p300, %s297, 15
        %s302 = smul.addr %s299, 16
        %s303 = sadd.s32 %s301, %s302
        %s304 = smul.addr %s303, 4
        %s305 = scalar_lea.vmem %s0, %s304
        %s306 = sadd.s32 %s22, %s24
        %s307 = smul.u32 16, %s306
      $region40: #{mlp_forward.4} parent=35 // pred_fallthru
        _
    $region36: #{mlp_forward.4} parent=5 // pred_fallthru
      _
    %p308 = scmp.le.s32.totalorder 1, %s15
    %p309 = scmp.lt.s32.totalorder %s15, 3
    %p310 = pnand %p308, %p309
    %p311 = pneg %p310
    // Predicated region
    $region41: #{mlp_forward.4} parent=5 // pred_check
      _
    $region42: #{mlp_forward.4} parent=5 // pred_check_branch
      %313 = sbr.rel (%p310) target = $region44
    $region43: #{mlp_forward.4} parent=5 // pred_region
      %s314 = ssub.s32 %s15, 1
      %s315 = sadd.s32 %s25, %s27
      %s316 = smul.u32 16, %s315
      %p317 = scmp.lt.s32.totalorder %s26, 1
      %s318 = scalar_select %p317, %s26, 1
      %p319 = scmp.lt.s32.totalorder %s316, 15
      %s320 = scalar_select %p319, %s316, 15
      %s321 = smul.addr %s318, 16
      %s322 = sadd.s32 %s320, %s321
      %s323 = smul.addr %s322, 4
      %s324 = scalar_lea.vmem %s0, %s323
      %p325 = pneg %p64
      %p326 = pneg %p61
      %p327 = pneg %p85
      %p328 = pneg %p82
      %p329 = pneg %p106
      %p330 = pneg %p103
      %p331 = pneg %p127
      %p332 = pneg %p124
      %p333 = pneg %p148
      %p334 = pneg %p145
      %p335 = pneg %p169
      %p336 = pneg %p166
      %p337 = pneg %p199
      %p338 = pneg %p196
      %s339 = sadd.s32 %s25, %s27
      %s340 = smul.u32 16, %s339
      %p341 = scmp.lt.s32.totalorder %s26, 1
      %s342 = scalar_select %p341, %s26, 1
      %p343 = scmp.lt.s32.totalorder %s340, 15
      %s344 = scalar_select %p343, %s340, 15
      %s345 = smul.addr %s342, 16
      %s346 = sadd.s32 %s344, %s345
      %s347 = smul.addr %s346, 4
      %s348 = scalar_lea.vmem %s6, %s347
      %p349 = pneg %p229
      %p350 = pneg %p226
      %s351 = smul.u32 %s25, 2
      %s352 = sadd.s32 %s351, %s26
      %p353 = scmp.lt.s32.totalorder %s352, 1
      %s354 = scalar_select %p353, %s352, 1
      %s355 = smul.addr %s354, 4
      %s356 = scalar_lea.vmem %s7, %s355
      %p357 = pneg %p259
      %p358 = pneg %p256
      %s359 = smul.u32 %s25, 2
      %s360 = sadd.s32 %s359, %s26
      %p361 = scmp.lt.s32.totalorder %s360, 1
      %s362 = scalar_select %p361, %s360, 1
      %s363 = smul.addr %s362, 4
      %s364 = scalar_lea.vmem %s8, %s363
      %s365 = sadd.s32 %s25, %s27
      %s366 = smul.u32 16, %s365
      %p367 = scmp.lt.s32.totalorder %s26, 1
      %s368 = scalar_select %p367, %s26, 1
      %p369 = scmp.lt.s32.totalorder %s366, 15
      %s370 = scalar_select %p369, %s366, 15
      %s371 = smul.addr %s368, 16
      %s372 = sadd.s32 %s370, %s371
      %s373 = smul.addr %s372, 4
      %s374 = scalar_lea.vmem %s0, %s373
      %s375 = sadd.s32 %s25, %s27
      %s376 = smul.u32 16, %s375
      %s377 = sadd.s32 %s25, %s27
      %s378 = smul.u32 16, %s377
      %p379 = scmp.lt.s32.totalorder %s26, 1
      %s380 = scalar_select %p379, %s26, 1
      %p381 = scmp.lt.s32.totalorder %s378, 15
      %s382 = scalar_select %p381, %s378, 15
      %s383 = smul.addr %s380, 16
      %s384 = sadd.s32 %s382, %s383
      %s385 = smul.addr %s384, 4
      %s386 = scalar_lea.vmem %s6, %s385
      %s387 = sadd.s32 %s25, %s27
      %s388 = smul.u32 16, %s387
      %s389 = smul.u32 %s25, 2
      %s390 = sadd.s32 %s389, %s26
      %p391 = scmp.lt.s32.totalorder %s390, 1
      %s392 = scalar_select %p391, %s390, 1
      %s393 = smul.addr %s392, 4
      %s394 = scalar_lea.vmem %s7, %s393
      %s395 = smul.u32 %s25, 2
      %s396 = sadd.s32 %s395, %s26
      %s397 = smul.u32 %s25, 2
      %s398 = sadd.s32 %s397, %s26
      %p399 = scmp.lt.s32.totalorder %s398, 1
      %s400 = scalar_select %p399, %s398, 1
      %s401 = smul.addr %s400, 4
      %s402 = scalar_lea.vmem %s8, %s401
      %s403 = smul.u32 %s25, 2
      %s404 = sadd.s32 %s403, %s26
      %p405 = scmp.eq.s32.totalorder %s27, 0
      // Predicated region
      $region45: #{mlp_forward.4} parent=43 // pred_check
        %p406 = pneg %p405
      $region46: #{mlp_forward.4} parent=43 // pred_check_branch
        %408 = sbr.rel (%p406) target = $region48
      $region47: #{mlp_forward.4} parent=43 // pred_region
        %vm409 = vcmask 3072
        %410 = vst.msk [vmem:[%s394] sm:$0xf] %vm409, 0.0
        %411 = vst.msk [vmem:[%s402] sm:$0xf] %vm409, 0.0
      $region48: #{mlp_forward.4} parent=43 // pred_fallthru
        _
      %v412 = vld [vmem:[%s374] sm:$0xff]
      %v413 = vld [vmem:[%s374 + $0x8] sm:$0xff]
      %v414 = vld [vmem:[%s374 + $0x10] sm:$0xff]
      %v415 = vld [vmem:[%s374 + $0x18] sm:$0xff]
      %v416 = vld [vmem:[%s374 + $0x20] sm:$0xff]
      %v417 = vld [vmem:[%s374 + $0x28] sm:$0xff]
      %v418 = vld [vmem:[%s374 + $0x30] sm:$0xff]
      %v419 = vld [vmem:[%s374 + $0x38] sm:$0xff]
      %v420 = vld [vmem:[%s1] sm:$0xff]
      %v429 = vcombine.high %v412, %v412
      %v430 = vcombine.high %v413, %v413
      %v431 = vcombine.high %v414, %v414
      %v432 = vcombine.high %v415, %v415
      %v433 = vcombine.high %v416, %v416
      %v434 = vcombine.high %v417, %v417
      %v435 = vcombine.high %v418, %v418
      %v436 = vcombine.high %v419, %v419
      %vm437 = vcmask 31744
      %v439 = vsel %vm437, %v420, 0
      %vm441 = vcmask 1043456
      %v442 = vsel %vm441, %v412, 0
      %v444 = vsel %vm441, %v429, 0
      %v446 = vsel %vm441, %v413, 0
      %v448 = vsel %vm441, %v430, 0
      %v450 = vsel %vm441, %v414, 0
      %v452 = vsel %vm441, %v431, 0
      %v454 = vsel %vm441, %v415, 0
      %v456 = vsel %vm441, %v432, 0
      %v458 = vsel %vm441, %v416, 0
      %v460 = vsel %vm441, %v433, 0
      %v462 = vsel %vm441, %v417, 0
      %v464 = vsel %vm441, %v434, 0
      %v466 = vsel %vm441, %v418, 0
      %v468 = vsel %vm441, %v435, 0
      %v470 = vsel %vm441, %v419, 0
      %v472 = vsel %vm441, %v436, 0
      %474 = vmatprep.subr.mxu0 0.0
      %475 = vmatpush1.msra.mxu0 0.0
      %476 = vmatprep.subr.mxu0 0.0
      %477 = vmatpush1.msra.mxu0 0.0
      %478 = vmatprep.subr.mxu0 0.0
      %479 = vmatpush1.msra.mxu0 0.0
      %480 = vmatprep.subr.mxu0 0.0
      %481 = vmatpush1.msra.mxu0 0.0
      %482 = vmatprep.subr.mxu0 0.0
      %483 = vmatpush1.msra.mxu0 0.0
      %484 = vmatprep.subr.mxu0 0.0
      %485 = vmatpush1.msra.mxu0 0.0
      %486 = vmatprep.subr.mxu0 0.0
      %487 = vmatpush1.msra.mxu0 0.0
      %488 = vmatprep.subr.mxu0 0.0
      %489 = vmatpush1.msra.mxu0 0.0
      %490 = vmatprep.subr.mxu0 0.0
      %491 = vmatpush1.msra.mxu0 0.0
      %492 = vmatprep.subr.mxu0 0.0
      %493 = vmatpush1.msra.mxu0 0.0
      %494 = vmatprep.subr.mxu0 0.0
      %495 = vmatpush1.msra.mxu0 0.0
      %496 = vmatprep.subr.mxu0 0.0
      %497 = vmatpush1.msra.mxu0 0.0
      %498 = vmatprep.subr.mxu0 0.0
      %499 = vmatpush1.msra.mxu0 0.0
      %500 = vmatprep.subr.mxu0 0.0
      %501 = vmatpush1.msra.mxu0 0.0
      %502 = vmatprep.subr.mxu0 0.0
      %503 = vmatpush1.msra.mxu0 0.0
      %504 = vmatprep.subr.mxu0 %v444
      %505 = vmatpush1.msra.mxu0 %v442
      %506 = vmatprep.subr.mxu0 0.0
      %507 = vmatpush2.msra.mxu0 0.0
      %508 = vmatprep.subr.mxu0 0.0
      %509 = vmatpush2.msra.mxu0 0.0
      %510 = vmatprep.subr.mxu0 0.0
      %511 = vmatpush2.msra.mxu0 0.0
      %512 = vmatprep.subr.mxu0 0.0
      %513 = vmatpush2.msra.mxu0 0.0
      %514 = vmatprep.subr.mxu0 0.0
      %515 = vmatpush2.msra.mxu0 0.0
      %516 = vmatprep.subr.mxu0 0.0
      %517 = vmatpush2.msra.mxu0 0.0
      %518 = vmatprep.subr.mxu0 0.0
      %519 = vmatpush2.msra.mxu0 0.0
      %520 = vmatprep.subr.mxu0 0.0
      %521 = vmatpush2.msra.mxu0 0.0
      %522 = vmatprep.subr.mxu0 0.0
      %523 = vmatpush2.msra.mxu0 0.0
      %524 = vmatprep.subr.mxu0 0.0
      %525 = vmatpush2.msra.mxu0 0.0
      %526 = vmatprep.subr.mxu0 0.0
      %527 = vmatpush2.msra.mxu0 0.0
      %528 = vmatprep.subr.mxu0 0.0
      %529 = vmatpush2.msra.mxu0 0.0
      %530 = vmatprep.subr.mxu0 0.0
      %531 = vmatpush2.msra.mxu0 0.0
      %532 = vmatprep.subr.mxu0 0.0
      %533 = vmatpush2.msra.mxu0 0.0
      %534 = vmatprep.subr.mxu0 0.0
      %535 = vmatpush2.msra.mxu0 0.0
      %536 = vmatprep.subr.mxu0 0.0
      %537 = vmatpush2.msra.mxu0 0.0
      %538 = vmatprep.mubr.f32.mxu0 0.0
      %539 = vmatmul.mubr.f32.gmra.mxu0 %v439
      %v540 = vpop.f32.mrf.mxu0
      %v541 = vadd.f32 0.0, %v540
      %v542 = vpop.f32.mrf.mxu0
      %v543 = vadd.f32 0.0, %v542
      %544 = vdwg.mxu0
      %545 = vmatprep.subr.mxu0 0.0
      %546 = vmatpush1.msra.mxu0 0.0
      %547 = vmatprep.subr.mxu0 0.0
      %548 = vmatpush1.msra.mxu0 0.0
      %549 = vmatprep.subr.mxu0 0.0
      %550 = vmatpush1.msra.mxu0 0.0
      %551 = vmatprep.subr.mxu0 0.0
      %552 = vmatpush1.msra.mxu0 0.0
      %553 = vmatprep.subr.mxu0 0.0
      %554 = vmatpush1.msra.mxu0 0.0
      %555 = vmatprep.subr.mxu0 0.0
      %556 = vmatpush1.msra.mxu0 0.0
      %557 = vmatprep.subr.mxu0 0.0
      %558 = vmatpush1.msra.mxu0 0.0
      %559 = vmatprep.subr.mxu0 0.0
      %560 = vmatpush1.msra.mxu0 0.0
      %561 = vmatprep.subr.mxu0 0.0
      %562 = vmatpush1.msra.mxu0 0.0
      %563 = vmatprep.subr.mxu0 0.0
      %564 = vmatpush1.msra.mxu0 0.0
      %565 = vmatprep.subr.mxu0 0.0
      %566 = vmatpush1.msra.mxu0 0.0
      %567 = vmatprep.subr.mxu0 0.0
      %568 = vmatpush1.msra.mxu0 0.0
      %569 = vmatprep.subr.mxu0 0.0
      %570 = vmatpush1.msra.mxu0 0.0
      %571 = vmatprep.subr.mxu0 0.0
      %572 = vmatpush1.msra.mxu0 0.0
      %573 = vmatprep.subr.mxu0 0.0
      %574 = vmatpush1.msra.mxu0 0.0
      %575 = vmatprep.subr.mxu0 %v448
      %576 = vmatpush1.msra.mxu0 %v446
      %577 = vmatprep.subr.mxu0 0.0
      %578 = vmatpush2.msra.mxu0 0.0
      %579 = vmatprep.subr.mxu0 0.0
      %580 = vmatpush2.msra.mxu0 0.0
      %581 = vmatprep.subr.mxu0 0.0
      %582 = vmatpush2.msra.mxu0 0.0
      %583 = vmatprep.subr.mxu0 0.0
      %584 = vmatpush2.msra.mxu0 0.0
      %585 = vmatprep.subr.mxu0 0.0
      %586 = vmatpush2.msra.mxu0 0.0
      %587 = vmatprep.subr.mxu0 0.0
      %588 = vmatpush2.msra.mxu0 0.0
      %589 = vmatprep.subr.mxu0 0.0
      %590 = vmatpush2.msra.mxu0 0.0
      %591 = vmatprep.subr.mxu0 0.0
      %592 = vmatpush2.msra.mxu0 0.0
      %593 = vmatprep.subr.mxu0 0.0
      %594 = vmatpush2.msra.mxu0 0.0
      %595 = vmatprep.subr.mxu0 0.0
      %596 = vmatpush2.msra.mxu0 0.0
      %597 = vmatprep.subr.mxu0 0.0
      %598 = vmatpush2.msra.mxu0 0.0
      %599 = vmatprep.subr.mxu0 0.0
      %600 = vmatpush2.msra.mxu0 0.0
      %601 = vmatprep.subr.mxu0 0.0
      %602 = vmatpush2.msra.mxu0 0.0
      %603 = vmatprep.subr.mxu0 0.0
      %604 = vmatpush2.msra.mxu0 0.0
      %605 = vmatprep.subr.mxu0 0.0
      %606 = vmatpush2.msra.mxu0 0.0
      %607 = vmatprep.subr.mxu0 0.0
      %608 = vmatpush2.msra.mxu0 0.0
      %609 = vmatprep.mubr.f32.mxu0 0.0
      %610 = vmatmul.mubr.f32.gmra.mxu0 %v439
      %v611 = vpop.f32.mrf.mxu0
      %v612 = vadd.f32 0.0, %v611
      %v613 = vpop.f32.mrf.mxu0
      %v614 = vadd.f32 0.0, %v613
      %615 = vdwg.mxu0
      %616 = vmatprep.subr.mxu0 0.0
      %617 = vmatpush1.msra.mxu0 0.0
      %618 = vmatprep.subr.mxu0 0.0
      %619 = vmatpush1.msra.mxu0 0.0
      %620 = vmatprep.subr.mxu0 0.0
      %621 = vmatpush1.msra.mxu0 0.0
      %622 = vmatprep.subr.mxu0 0.0
      %623 = vmatpush1.msra.mxu0 0.0
      %624 = vmatprep.subr.mxu0 0.0
      %625 = vmatpush1.msra.mxu0 0.0
      %626 = vmatprep.subr.mxu0 0.0
      %627 = vmatpush1.msra.mxu0 0.0
      %628 = vmatprep.subr.mxu0 0.0
      %629 = vmatpush1.msra.mxu0 0.0
      %630 = vmatprep.subr.mxu0 0.0
      %631 = vmatpush1.msra.mxu0 0.0
      %632 = vmatprep.subr.mxu0 0.0
      %633 = vmatpush1.msra.mxu0 0.0
      %634 = vmatprep.subr.mxu0 0.0
      %635 = vmatpush1.msra.mxu0 0.0
      %636 = vmatprep.subr.mxu0 0.0
      %637 = vmatpush1.msra.mxu0 0.0
      %638 = vmatprep.subr.mxu0 0.0
      %639 = vmatpush1.msra.mxu0 0.0
      %640 = vmatprep.subr.mxu0 0.0
      %641 = vmatpush1.msra.mxu0 0.0
      %642 = vmatprep.subr.mxu0 0.0
      %643 = vmatpush1.msra.mxu0 0.0
      %644 = vmatprep.subr.mxu0 0.0
      %645 = vmatpush1.msra.mxu0 0.0
      %646 = vmatprep.subr.mxu0 %v452
      %647 = vmatpush1.msra.mxu0 %v450
      %648 = vmatprep.subr.mxu0 0.0
      %649 = vmatpush2.msra.mxu0 0.0
      %650 = vmatprep.subr.mxu0 0.0
      %651 = vmatpush2.msra.mxu0 0.0
      %652 = vmatprep.subr.mxu0 0.0
      %653 = vmatpush2.msra.mxu0 0.0
      %654 = vmatprep.subr.mxu0 0.0
      %655 = vmatpush2.msra.mxu0 0.0
      %656 = vmatprep.subr.mxu0 0.0
      %657 = vmatpush2.msra.mxu0 0.0
      %658 = vmatprep.subr.mxu0 0.0
      %659 = vmatpush2.msra.mxu0 0.0
      %660 = vmatprep.subr.mxu0 0.0
      %661 = vmatpush2.msra.mxu0 0.0
      %662 = vmatprep.subr.mxu0 0.0
      %663 = vmatpush2.msra.mxu0 0.0
      %664 = vmatprep.subr.mxu0 0.0
      %665 = vmatpush2.msra.mxu0 0.0
      %666 = vmatprep.subr.mxu0 0.0
      %667 = vmatpush2.msra.mxu0 0.0
      %668 = vmatprep.subr.mxu0 0.0
      %669 = vmatpush2.msra.mxu0 0.0
      %670 = vmatprep.subr.mxu0 0.0
      %671 = vmatpush2.msra.mxu0 0.0
      %672 = vmatprep.subr.mxu0 0.0
      %673 = vmatpush2.msra.mxu0 0.0
      %674 = vmatprep.subr.mxu0 0.0
      %675 = vmatpush2.msra.mxu0 0.0
      %676 = vmatprep.subr.mxu0 0.0
      %677 = vmatpush2.msra.mxu0 0.0
      %678 = vmatprep.subr.mxu0 0.0
      %679 = vmatpush2.msra.mxu0 0.0
      %680 = vmatprep.mubr.f32.mxu0 0.0
      %681 = vmatmul.mubr.f32.gmra.mxu0 %v439
      %v682 = vpop.f32.mrf.mxu0
      %v683 = vadd.f32 0.0, %v682
      %v684 = vpop.f32.mrf.mxu0
      %v685 = vadd.f32 0.0, %v684
      %686 = vdwg.mxu0
      %687 = vmatprep.subr.mxu0 0.0
      %688 = vmatpush1.msra.mxu0 0.0
      %689 = vmatprep.subr.mxu0 0.0
      %690 = vmatpush1.msra.mxu0 0.0
      %691 = vmatprep.subr.mxu0 0.0
      %692 = vmatpush1.msra.mxu0 0.0
      %693 = vmatprep.subr.mxu0 0.0
      %694 = vmatpush1.msra.mxu0 0.0
      %695 = vmatprep.subr.mxu0 0.0
      %696 = vmatpush1.msra.mxu0 0.0
      %697 = vmatprep.subr.mxu0 0.0
      %698 = vmatpush1.msra.mxu0 0.0
      %699 = vmatprep.subr.mxu0 0.0
      %700 = vmatpush1.msra.mxu0 0.0
      %701 = vmatprep.subr.mxu0 0.0
      %702 = vmatpush1.msra.mxu0 0.0
      %703 = vmatprep.subr.mxu0 0.0
      %704 = vmatpush1.msra.mxu0 0.0
      %705 = vmatprep.subr.mxu0 0.0
      %706 = vmatpush1.msra.mxu0 0.0
      %707 = vmatprep.subr.mxu0 0.0
      %708 = vmatpush1.msra.mxu0 0.0
      %709 = vmatprep.subr.mxu0 0.0
      %710 = vmatpush1.msra.mxu0 0.0
      %711 = vmatprep.subr.mxu0 0.0
      %712 = vmatpush1.msra.mxu0 0.0
      %713 = vmatprep.subr.mxu0 0.0
      %714 = vmatpush1.msra.mxu0 0.0
      %715 = vmatprep.subr.mxu0 0.0
      %716 = vmatpush1.msra.mxu0 0.0
      %717 = vmatprep.subr.mxu0 %v456
      %718 = vmatpush1.msra.mxu0 %v454
      %719 = vmatprep.subr.mxu0 0.0
      %720 = vmatpush2.msra.mxu0 0.0
      %721 = vmatprep.subr.mxu0 0.0
      %722 = vmatpush2.msra.mxu0 0.0
      %723 = vmatprep.subr.mxu0 0.0
      %724 = vmatpush2.msra.mxu0 0.0
      %725 = vmatprep.subr.mxu0 0.0
      %726 = vmatpush2.msra.mxu0 0.0
      %727 = vmatprep.subr.mxu0 0.0
      %728 = vmatpush2.msra.mxu0 0.0
      %729 = vmatprep.subr.mxu0 0.0
      %730 = vmatpush2.msra.mxu0 0.0
      %731 = vmatprep.subr.mxu0 0.0
      %732 = vmatpush2.msra.mxu0 0.0
      %733 = vmatprep.subr.mxu0 0.0
      %734 = vmatpush2.msra.mxu0 0.0
      %735 = vmatprep.subr.mxu0 0.0
      %736 = vmatpush2.msra.mxu0 0.0
      %737 = vmatprep.subr.mxu0 0.0
      %738 = vmatpush2.msra.mxu0 0.0
      %739 = vmatprep.subr.mxu0 0.0
      %740 = vmatpush2.msra.mxu0 0.0
      %741 = vmatprep.subr.mxu0 0.0
      %742 = vmatpush2.msra.mxu0 0.0
      %743 = vmatprep.subr.mxu0 0.0
      %744 = vmatpush2.msra.mxu0 0.0
      %745 = vmatprep.subr.mxu0 0.0
      %746 = vmatpush2.msra.mxu0 0.0
      %747 = vmatprep.subr.mxu0 0.0
      %748 = vmatpush2.msra.mxu0 0.0
      %749 = vmatprep.subr.mxu0 0.0
      %750 = vmatpush2.msra.mxu0 0.0
      %751 = vmatprep.mubr.f32.mxu0 0.0
      %752 = vmatmul.mubr.f32.gmra.mxu0 %v439
      %v753 = vpop.f32.mrf.mxu0
      %v754 = vadd.f32 0.0, %v753
      %v755 = vpop.f32.mrf.mxu0
      %v756 = vadd.f32 0.0, %v755
      %757 = vdwg.mxu0
      %758 = vmatprep.subr.mxu0 0.0
      %759 = vmatpush1.msra.mxu0 0.0
      %760 = vmatprep.subr.mxu0 0.0
      %761 = vmatpush1.msra.mxu0 0.0
      %762 = vmatprep.subr.mxu0 0.0
      %763 = vmatpush1.msra.mxu0 0.0
      %764 = vmatprep.subr.mxu0 0.0
      %765 = vmatpush1.msra.mxu0 0.0
      %766 = vmatprep.subr.mxu0 0.0
      %767 = vmatpush1.msra.mxu0 0.0
      %768 = vmatprep.subr.mxu0 0.0
      %769 = vmatpush1.msra.mxu0 0.0
      %770 = vmatprep.subr.mxu0 0.0
      %771 = vmatpush1.msra.mxu0 0.0
      %772 = vmatprep.subr.mxu0 0.0
      %773 = vmatpush1.msra.mxu0 0.0
      %774 = vmatprep.subr.mxu0 0.0
      %775 = vmatpush1.msra.mxu0 0.0
      %776 = vmatprep.subr.mxu0 0.0
      %777 = vmatpush1.msra.mxu0 0.0
      %778 = vmatprep.subr.mxu0 0.0
      %779 = vmatpush1.msra.mxu0 0.0
      %780 = vmatprep.subr.mxu0 0.0
      %781 = vmatpush1.msra.mxu0 0.0
      %782 = vmatprep.subr.mxu0 0.0
      %783 = vmatpush1.msra.mxu0 0.0
      %784 = vmatprep.subr.mxu0 0.0
      %785 = vmatpush1.msra.mxu0 0.0
      %786 = vmatprep.subr.mxu0 0.0
      %787 = vmatpush1.msra.mxu0 0.0
      %788 = vmatprep.subr.mxu0 %v460
      %789 = vmatpush1.msra.mxu0 %v458
      %790 = vmatprep.subr.mxu0 0.0
      %791 = vmatpush2.msra.mxu0 0.0
      %792 = vmatprep.subr.mxu0 0.0
      %793 = vmatpush2.msra.mxu0 0.0
      %794 = vmatprep.subr.mxu0 0.0
      %795 = vmatpush2.msra.mxu0 0.0
      %796 = vmatprep.subr.mxu0 0.0
      %797 = vmatpush2.msra.mxu0 0.0
      %798 = vmatprep.subr.mxu0 0.0
      %799 = vmatpush2.msra.mxu0 0.0
      %800 = vmatprep.subr.mxu0 0.0
      %801 = vmatpush2.msra.mxu0 0.0
      %802 = vmatprep.subr.mxu0 0.0
      %803 = vmatpush2.msra.mxu0 0.0
      %804 = vmatprep.subr.mxu0 0.0
      %805 = vmatpush2.msra.mxu0 0.0
      %806 = vmatprep.subr.mxu0 0.0
      %807 = vmatpush2.msra.mxu0 0.0
      %808 = vmatprep.subr.mxu0 0.0
      %809 = vmatpush2.msra.mxu0 0.0
      %810 = vmatprep.subr.mxu0 0.0
      %811 = vmatpush2.msra.mxu0 0.0
      %812 = vmatprep.subr.mxu0 0.0
      %813 = vmatpush2.msra.mxu0 0.0
      %814 = vmatprep.subr.mxu0 0.0
      %815 = vmatpush2.msra.mxu0 0.0
      %816 = vmatprep.subr.mxu0 0.0
      %817 = vmatpush2.msra.mxu0 0.0
      %818 = vmatprep.subr.mxu0 0.0
      %819 = vmatpush2.msra.mxu0 0.0
      %820 = vmatprep.subr.mxu0 0.0
      %821 = vmatpush2.msra.mxu0 0.0
      %822 = vmatprep.mubr.f32.mxu0 0.0
      %823 = vmatmul.mubr.f32.gmra.mxu0 %v439
      %v824 = vpop.f32.mrf.mxu0
      %v825 = vadd.f32 0.0, %v824
      %v826 = vpop.f32.mrf.mxu0
      %v827 = vadd.f32 0.0, %v826
      %828 = vdwg.mxu0
      %829 = vmatprep.subr.mxu0 0.0
      %830 = vmatpush1.msra.mxu0 0.0
      %831 = vmatprep.subr.mxu0 0.0
      %832 = vmatpush1.msra.mxu0 0.0
      %833 = vmatprep.subr.mxu0 0.0
      %834 = vmatpush1.msra.mxu0 0.0
      %835 = vmatprep.subr.mxu0 0.0
      %836 = vmatpush1.msra.mxu0 0.0
      %837 = vmatprep.subr.mxu0 0.0
      %838 = vmatpush1.msra.mxu0 0.0
      %839 = vmatprep.subr.mxu0 0.0
      %840 = vmatpush1.msra.mxu0 0.0
      %841 = vmatprep.subr.mxu0 0.0
      %842 = vmatpush1.msra.mxu0 0.0
      %843 = vmatprep.subr.mxu0 0.0
      %844 = vmatpush1.msra.mxu0 0.0
      %845 = vmatprep.subr.mxu0 0.0
      %846 = vmatpush1.msra.mxu0 0.0
      %847 = vmatprep.subr.mxu0 0.0
      %848 = vmatpush1.msra.mxu0 0.0
      %849 = vmatprep.subr.mxu0 0.0
      %850 = vmatpush1.msra.mxu0 0.0
      %851 = vmatprep.subr.mxu0 0.0
      %852 = vmatpush1.msra.mxu0 0.0
      %853 = vmatprep.subr.mxu0 0.0
      %854 = vmatpush1.msra.mxu0 0.0
      %855 = vmatprep.subr.mxu0 0.0
      %856 = vmatpush1.msra.mxu0 0.0
      %857 = vmatprep.subr.mxu0 0.0
      %858 = vmatpush1.msra.mxu0 0.0
      %859 = vmatprep.subr.mxu0 %v464
      %860 = vmatpush1.msra.mxu0 %v462
      %861 = vmatprep.subr.mxu0 0.0
      %862 = vmatpush2.msra.mxu0 0.0
      %863 = vmatprep.subr.mxu0 0.0
      %864 = vmatpush2.msra.mxu0 0.0
      %865 = vmatprep.subr.mxu0 0.0
      %866 = vmatpush2.msra.mxu0 0.0
      %867 = vmatprep.subr.mxu0 0.0
      %868 = vmatpush2.msra.mxu0 0.0
      %869 = vmatprep.subr.mxu0 0.0
      %870 = vmatpush2.msra.mxu0 0.0
      %871 = vmatprep.subr.mxu0 0.0
      %872 = vmatpush2.msra.mxu0 0.0
      %873 = vmatprep.subr.mxu0 0.0
      %874 = vmatpush2.msra.mxu0 0.0
      %875 = vmatprep.subr.mxu0 0.0
      %876 = vmatpush2.msra.mxu0 0.0
      %877 = vmatprep.subr.mxu0 0.0
      %878 = vmatpush2.msra.mxu0 0.0
      %879 = vmatprep.subr.mxu0 0.0
      %880 = vmatpush2.msra.mxu0 0.0
      %881 = vmatprep.subr.mxu0 0.0
      %882 = vmatpush2.msra.mxu0 0.0
      %883 = vmatprep.subr.mxu0 0.0
      %884 = vmatpush2.msra.mxu0 0.0
      %885 = vmatprep.subr.mxu0 0.0
      %886 = vmatpush2.msra.mxu0 0.0
      %887 = vmatprep.subr.mxu0 0.0
      %888 = vmatpush2.msra.mxu0 0.0
      %889 = vmatprep.subr.mxu0 0.0
      %890 = vmatpush2.msra.mxu0 0.0
      %891 = vmatprep.subr.mxu0 0.0
      %892 = vmatpush2.msra.mxu0 0.0
      %893 = vmatprep.mubr.f32.mxu0 0.0
      %894 = vmatmul.mubr.f32.gmra.mxu0 %v439
      %v895 = vpop.f32.mrf.mxu0
      %v896 = vadd.f32 0.0, %v895
      %v897 = vpop.f32.mrf.mxu0
      %v898 = vadd.f32 0.0, %v897
      %899 = vdwg.mxu0
      %900 = vmatprep.subr.mxu0 0.0
      %901 = vmatpush1.msra.mxu0 0.0
      %902 = vmatprep.subr.mxu0 0.0
      %903 = vmatpush1.msra.mxu0 0.0
      %904 = vmatprep.subr.mxu0 0.0
      %905 = vmatpush1.msra.mxu0 0.0
      %906 = vmatprep.subr.mxu0 0.0
      %907 = vmatpush1.msra.mxu0 0.0
      %908 = vmatprep.subr.mxu0 0.0
      %909 = vmatpush1.msra.mxu0 0.0
      %910 = vmatprep.subr.mxu0 0.0
      %911 = vmatpush1.msra.mxu0 0.0
      %912 = vmatprep.subr.mxu0 0.0
      %913 = vmatpush1.msra.mxu0 0.0
      %914 = vmatprep.subr.mxu0 0.0
      %915 = vmatpush1.msra.mxu0 0.0
      %916 = vmatprep.subr.mxu0 0.0
      %917 = vmatpush1.msra.mxu0 0.0
      %918 = vmatprep.subr.mxu0 0.0
      %919 = vmatpush1.msra.mxu0 0.0
      %920 = vmatprep.subr.mxu0 0.0
      %921 = vmatpush1.msra.mxu0 0.0
      %922 = vmatprep.subr.mxu0 0.0
      %923 = vmatpush1.msra.mxu0 0.0
      %924 = vmatprep.subr.mxu0 0.0
      %925 = vmatpush1.msra.mxu0 0.0
      %926 = vmatprep.subr.mxu0 0.0
      %927 = vmatpush1.msra.mxu0 0.0
      %928 = vmatprep.subr.mxu0 0.0
      %929 = vmatpush1.msra.mxu0 0.0
      %930 = vmatprep.subr.mxu0 %v468
      %931 = vmatpush1.msra.mxu0 %v466
      %932 = vmatprep.subr.mxu0 0.0
      %933 = vmatpush2.msra.mxu0 0.0
      %934 = vmatprep.subr.mxu0 0.0
      %935 = vmatpush2.msra.mxu0 0.0
      %936 = vmatprep.subr.mxu0 0.0
      %937 = vmatpush2.msra.mxu0 0.0
      %938 = vmatprep.subr.mxu0 0.0
      %939 = vmatpush2.msra.mxu0 0.0
      %940 = vmatprep.subr.mxu0 0.0
      %941 = vmatpush2.msra.mxu0 0.0
      %942 = vmatprep.subr.mxu0 0.0
      %943 = vmatpush2.msra.mxu0 0.0
      %944 = vmatprep.subr.mxu0 0.0
      %945 = vmatpush2.msra.mxu0 0.0
      %946 = vmatprep.subr.mxu0 0.0
      %947 = vmatpush2.msra.mxu0 0.0
      %948 = vmatprep.subr.mxu0 0.0
      %949 = vmatpush2.msra.mxu0 0.0
      %950 = vmatprep.subr.mxu0 0.0
      %951 = vmatpush2.msra.mxu0 0.0
      %952 = vmatprep.subr.mxu0 0.0
      %953 = vmatpush2.msra.mxu0 0.0
      %954 = vmatprep.subr.mxu0 0.0
      %955 = vmatpush2.msra.mxu0 0.0
      %956 = vmatprep.subr.mxu0 0.0
      %957 = vmatpush2.msra.mxu0 0.0
      %958 = vmatprep.subr.mxu0 0.0
      %959 = vmatpush2.msra.mxu0 0.0
      %960 = vmatprep.subr.mxu0 0.0
      %961 = vmatpush2.msra.mxu0 0.0
      %962 = vmatprep.subr.mxu0 0.0
      %963 = vmatpush2.msra.mxu0 0.0
      %964 = vmatprep.mubr.f32.mxu0 0.0
      %965 = vmatmul.mubr.f32.gmra.mxu0 %v439
      %v966 = vpop.f32.mrf.mxu0
      %v967 = vadd.f32 0.0, %v966
      %v968 = vpop.f32.mrf.mxu0
      %v969 = vadd.f32 0.0, %v968
      %970 = vdwg.mxu0
      %971 = vmatprep.subr.mxu0 0.0
      %972 = vmatpush1.msra.mxu0 0.0
      %973 = vmatprep.subr.mxu0 0.0
      %974 = vmatpush1.msra.mxu0 0.0
      %975 = vmatprep.subr.mxu0 0.0
      %976 = vmatpush1.msra.mxu0 0.0
      %977 = vmatprep.subr.mxu0 0.0
      %978 = vmatpush1.msra.mxu0 0.0
      %979 = vmatprep.subr.mxu0 0.0
      %980 = vmatpush1.msra.mxu0 0.0
      %981 = vmatprep.subr.mxu0 0.0
      %982 = vmatpush1.msra.mxu0 0.0
      %983 = vmatprep.subr.mxu0 0.0
      %984 = vmatpush1.msra.mxu0 0.0
      %985 = vmatprep.subr.mxu0 0.0
      %986 = vmatpush1.msra.mxu0 0.0
      %987 = vmatprep.subr.mxu0 0.0
      %988 = vmatpush1.msra.mxu0 0.0
      %989 = vmatprep.subr.mxu0 0.0
      %990 = vmatpush1.msra.mxu0 0.0
      %991 = vmatprep.subr.mxu0 0.0
      %992 = vmatpush1.msra.mxu0 0.0
      %993 = vmatprep.subr.mxu0 0.0
      %994 = vmatpush1.msra.mxu0 0.0
      %995 = vmatprep.subr.mxu0 0.0
      %996 = vmatpush1.msra.mxu0 0.0
      %997 = vmatprep.subr.mxu0 0.0
      %998 = vmatpush1.msra.mxu0 0.0
      %999 = vmatprep.subr.mxu0 0.0
      %1000 = vmatpush1.msra.mxu0 0.0
      %1001 = vmatprep.subr.mxu0 %v472
      %1002 = vmatpush1.msra.mxu0 %v470
      %1003 = vmatprep.subr.mxu0 0.0
      %1004 = vmatpush2.msra.mxu0 0.0
      %1005 = vmatprep.subr.mxu0 0.0
      %1006 = vmatpush2.msra.mxu0 0.0
      %1007 = vmatprep.subr.mxu0 0.0
      %1008 = vmatpush2.msra.mxu0 0.0
      %1009 = vmatprep.subr.mxu0 0.0
      %1010 = vmatpush2.msra.mxu0 0.0
      %1011 = vmatprep.subr.mxu0 0.0
      %1012 = vmatpush2.msra.mxu0 0.0
      %1013 = vmatprep.subr.mxu0 0.0
      %1014 = vmatpush2.msra.mxu0 0.0
      %1015 = vmatprep.subr.mxu0 0.0
      %1016 = vmatpush2.msra.mxu0 0.0
      %1017 = vmatprep.subr.mxu0 0.0
      %1018 = vmatpush2.msra.mxu0 0.0
      %1019 = vmatprep.subr.mxu0 0.0
      %1020 = vmatpush2.msra.mxu0 0.0
      %1021 = vmatprep.subr.mxu0 0.0
      %1022 = vmatpush2.msra.mxu0 0.0
      %1023 = vmatprep.subr.mxu0 0.0
      %1024 = vmatpush2.msra.mxu0 0.0
      %1025 = vmatprep.subr.mxu0 0.0
      %1026 = vmatpush2.msra.mxu0 0.0
      %1027 = vmatprep.subr.mxu0 0.0
      %1028 = vmatpush2.msra.mxu0 0.0
      %1029 = vmatprep.subr.mxu0 0.0
      %1030 = vmatpush2.msra.mxu0 0.0
      %1031 = vmatprep.subr.mxu0 0.0
      %1032 = vmatpush2.msra.mxu0 0.0
      %1033 = vmatprep.subr.mxu0 0.0
      %1034 = vmatpush2.msra.mxu0 0.0
      %1035 = vmatprep.mubr.f32.mxu0 0.0
      %1036 = vmatmul.mubr.f32.gmra.mxu0 %v439
      %v1037 = vpop.f32.mrf.mxu0
      %v1038 = vadd.f32 0.0, %v1037
      %v1039 = vpop.f32.mrf.mxu0
      %v1040 = vadd.f32 0.0, %v1039
      %1041 = vdwg.mxu0
      %v1042 = vld [vmem:[%s2] sm:$0xff]
      %1044 = vset.pattern.permute.xlu0 0
      %1045 = vperm.xlu0 %1044, %v1042
      %v1046 = vpop.permute.xlu0 %1045
      %v1048 = vmul.f32 %v1046, %v541
      %v1049 = vmul.f32 %v1046, %v543
      %v1050 = vmul.f32 %v1046, %v612
      %v1051 = vmul.f32 %v1046, %v614
      %v1052 = vmul.f32 %v1046, %v683
      %v1053 = vmul.f32 %v1046, %v685
      %v1054 = vmul.f32 %v1046, %v754
      %v1055 = vmul.f32 %v1046, %v756
      %v1056 = vmul.f32 %v1046, %v825
      %v1057 = vmul.f32 %v1046, %v827
      %v1058 = vmul.f32 %v1046, %v896
      %v1059 = vmul.f32 %v1046, %v898
      %v1060 = vmul.f32 %v1046, %v967
      %v1061 = vmul.f32 %v1046, %v969
      %v1062 = vmul.f32 %v1046, %v1038
      %v1063 = vmul.f32 %v1046, %v1040
      %v1064 = vld [vmem:[%s3] sm:$0xff]
      %1066 = vset.pattern.permute.xlu0 0
      %1067 = vperm.xlu0 %1066, %v1064
      %v1068 = vpop.permute.xlu0 %1067
      %v1070 = vadd.f32 %v1048, %v1068
      %v1071 = vadd.f32 %v1049, %v1068
      %v1072 = vadd.f32 %v1050, %v1068
      %v1073 = vadd.f32 %v1051, %v1068
      %v1074 = vadd.f32 %v1052, %v1068
      %v1075 = vadd.f32 %v1053, %v1068
      %v1076 = vadd.f32 %v1054, %v1068
      %v1077 = vadd.f32 %v1055, %v1068
      %v1078 = vadd.f32 %v1056, %v1068
      %v1079 = vadd.f32 %v1057, %v1068
      %v1080 = vadd.f32 %v1058, %v1068
      %v1081 = vadd.f32 %v1059, %v1068
      %v1082 = vadd.f32 %v1060, %v1068
      %v1083 = vadd.f32 %v1061, %v1068
      %v1084 = vadd.f32 %v1062, %v1068
      %v1085 = vadd.f32 %v1063, %v1068
      %vm1086 = vcmp.gt.f32.partialorder %v1070, 0.0
      %vm1087 = vcmp.gt.f32.partialorder %v1071, 0.0
      %vm1088 = vcmp.gt.f32.partialorder %v1072, 0.0
      %vm1089 = vcmp.gt.f32.partialorder %v1073, 0.0
      %vm1090 = vcmp.gt.f32.partialorder %v1074, 0.0
      %vm1091 = vcmp.gt.f32.partialorder %v1075, 0.0
      %vm1092 = vcmp.gt.f32.partialorder %v1076, 0.0
      %vm1093 = vcmp.gt.f32.partialorder %v1077, 0.0
      %vm1094 = vcmp.gt.f32.partialorder %v1078, 0.0
      %vm1095 = vcmp.gt.f32.partialorder %v1079, 0.0
      %vm1096 = vcmp.gt.f32.partialorder %v1080, 0.0
      %vm1097 = vcmp.gt.f32.partialorder %v1081, 0.0
      %vm1098 = vcmp.gt.f32.partialorder %v1082, 0.0
      %vm1099 = vcmp.gt.f32.partialorder %v1083, 0.0
      %vm1100 = vcmp.gt.f32.partialorder %v1084, 0.0
      %vm1101 = vcmp.gt.f32.partialorder %v1085, 0.0
      %v1102 = vld [vmem:[%s4] sm:$0xff]
      %1104 = vset.pattern.permute.xlu0 0
      %1105 = vperm.xlu0 %1104, %v1102
      %v1106 = vpop.permute.xlu0 %1105
      %v1108 = vmul.f32 %v1106, %v1070
      %v1109 = vmul.f32 %v1106, %v1071
      %v1110 = vmul.f32 %v1106, %v1072
      %v1111 = vmul.f32 %v1106, %v1073
      %v1112 = vmul.f32 %v1106, %v1074
      %v1113 = vmul.f32 %v1106, %v1075
      %v1114 = vmul.f32 %v1106, %v1076
      %v1115 = vmul.f32 %v1106, %v1077
      %v1116 = vmul.f32 %v1106, %v1078
      %v1117 = vmul.f32 %v1106, %v1079
      %v1118 = vmul.f32 %v1106, %v1080
      %v1119 = vmul.f32 %v1106, %v1081
      %v1120 = vmul.f32 %v1106, %v1082
      %v1121 = vmul.f32 %v1106, %v1083
      %v1122 = vmul.f32 %v1106, %v1084
      %v1123 = vmul.f32 %v1106, %v1085
      %v1124 = vsel %vm1086, %v1070, %v1108
      %v1125 = vsel %vm1087, %v1071, %v1109
      %v1126 = vsel %vm1088, %v1072, %v1110
      %v1127 = vsel %vm1089, %v1073, %v1111
      %v1128 = vsel %vm1090, %v1074, %v1112
      %v1129 = vsel %vm1091, %v1075, %v1113
      %v1130 = vsel %vm1092, %v1076, %v1114
      %v1131 = vsel %vm1093, %v1077, %v1115
      %v1132 = vsel %vm1094, %v1078, %v1116
      %v1133 = vsel %vm1095, %v1079, %v1117
      %v1134 = vsel %vm1096, %v1080, %v1118
      %v1135 = vsel %vm1097, %v1081, %v1119
      %v1136 = vsel %vm1098, %v1082, %v1120
      %v1137 = vsel %vm1099, %v1083, %v1121
      %v1138 = vsel %vm1100, %v1084, %v1122
      %v1139 = vsel %vm1101, %v1085, %v1123
      %v1140 = vld [vmem:[%s5] sm:$0xf]
      %vm1141 = vcmask 64512
      %v1143 = vsel %vm1141, %v1140, 0
      %1145 = vmatprep.subr.mxu0 0.0
      %1146 = vmatpush1.msra.mxu0 0.0
      %1147 = vmatprep.subr.mxu0 0.0
      %1148 = vmatpush1.msra.mxu0 0.0
      %1149 = vmatprep.subr.mxu0 0.0
      %1150 = vmatpush1.msra.mxu0 0.0
      %1151 = vmatprep.subr.mxu0 0.0
      %1152 = vmatpush1.msra.mxu0 0.0
      %1153 = vmatprep.subr.mxu0 0.0
      %1154 = vmatpush1.msra.mxu0 0.0
      %1155 = vmatprep.subr.mxu0 0.0
      %1156 = vmatpush1.msra.mxu0 0.0
      %1157 = vmatprep.subr.mxu0 0.0
      %1158 = vmatpush1.msra.mxu0 0.0
      %1159 = vmatprep.subr.mxu0 0.0
      %1160 = vmatpush1.msra.mxu0 0.0
      %1161 = vmatprep.subr.mxu0 0.0
      %1162 = vmatpush1.msra.mxu0 0.0
      %1163 = vmatprep.subr.mxu0 0.0
      %1164 = vmatpush1.msra.mxu0 0.0
      %1165 = vmatprep.subr.mxu0 0.0
      %1166 = vmatpush1.msra.mxu0 0.0
      %1167 = vmatprep.subr.mxu0 0.0
      %1168 = vmatpush1.msra.mxu0 0.0
      %1169 = vmatprep.subr.mxu0 0.0
      %1170 = vmatpush1.msra.mxu0 0.0
      %1171 = vmatprep.subr.mxu0 0.0
      %1172 = vmatpush1.msra.mxu0 0.0
      %1173 = vmatprep.subr.mxu0 0.0
      %1174 = vmatpush1.msra.mxu0 0.0
      %1175 = vmatprep.subr.mxu0 %v1125
      %1176 = vmatpush1.msra.mxu0 %v1124
      %1177 = vmatprep.subr.mxu0 0.0
      %1178 = vmatpush2.msra.mxu0 0.0
      %1179 = vmatprep.subr.mxu0 0.0
      %1180 = vmatpush2.msra.mxu0 0.0
      %1181 = vmatprep.subr.mxu0 0.0
      %1182 = vmatpush2.msra.mxu0 0.0
      %1183 = vmatprep.subr.mxu0 0.0
      %1184 = vmatpush2.msra.mxu0 0.0
      %1185 = vmatprep.subr.mxu0 0.0
      %1186 = vmatpush2.msra.mxu0 0.0
      %1187 = vmatprep.subr.mxu0 0.0
      %1188 = vmatpush2.msra.mxu0 0.0
      %1189 = vmatprep.subr.mxu0 0.0
      %1190 = vmatpush2.msra.mxu0 0.0
      %1191 = vmatprep.subr.mxu0 0.0
      %1192 = vmatpush2.msra.mxu0 0.0
      %1193 = vmatprep.subr.mxu0 0.0
      %1194 = vmatpush2.msra.mxu0 0.0
      %1195 = vmatprep.subr.mxu0 0.0
      %1196 = vmatpush2.msra.mxu0 0.0
      %1197 = vmatprep.subr.mxu0 0.0
      %1198 = vmatpush2.msra.mxu0 0.0
      %1199 = vmatprep.subr.mxu0 0.0
      %1200 = vmatpush2.msra.mxu0 0.0
      %1201 = vmatprep.subr.mxu0 0.0
      %1202 = vmatpush2.msra.mxu0 0.0
      %1203 = vmatprep.subr.mxu0 0.0
      %1204 = vmatpush2.msra.mxu0 0.0
      %1205 = vmatprep.subr.mxu0 0.0
      %1206 = vmatpush2.msra.mxu0 0.0
      %1207 = vmatprep.subr.mxu0 0.0
      %1208 = vmatpush2.msra.mxu0 0.0
      %1209 = vmatprep.mubr.f32.mxu0 0.0
      %1210 = vmatmul.mubr.f32.gmra.mxu0 %v1143
      %v1211 = vpop.f32.mrf.mxu0
      %v1212 = vadd.f32 0.0, %v1211
      %v1213 = vpop.f32.mrf.mxu0
      %v1214 = vadd.f32 0.0, %v1213
      %1215 = vdwg.mxu0
      %1216 = vmatprep.subr.mxu0 0.0
      %1217 = vmatpush1.msra.mxu0 0.0
      %1218 = vmatprep.subr.mxu0 0.0
      %1219 = vmatpush1.msra.mxu0 0.0
      %1220 = vmatprep.subr.mxu0 0.0
      %1221 = vmatpush1.msra.mxu0 0.0
      %1222 = vmatprep.subr.mxu0 0.0
      %1223 = vmatpush1.msra.mxu0 0.0
      %1224 = vmatprep.subr.mxu0 0.0
      %1225 = vmatpush1.msra.mxu0 0.0
      %1226 = vmatprep.subr.mxu0 0.0
      %1227 = vmatpush1.msra.mxu0 0.0
      %1228 = vmatprep.subr.mxu0 0.0
      %1229 = vmatpush1.msra.mxu0 0.0
      %1230 = vmatprep.subr.mxu0 0.0
      %1231 = vmatpush1.msra.mxu0 0.0
      %1232 = vmatprep.subr.mxu0 0.0
      %1233 = vmatpush1.msra.mxu0 0.0
      %1234 = vmatprep.subr.mxu0 0.0
      %1235 = vmatpush1.msra.mxu0 0.0
      %1236 = vmatprep.subr.mxu0 0.0
      %1237 = vmatpush1.msra.mxu0 0.0
      %1238 = vmatprep.subr.mxu0 0.0
      %1239 = vmatpush1.msra.mxu0 0.0
      %1240 = vmatprep.subr.mxu0 0.0
      %1241 = vmatpush1.msra.mxu0 0.0
      %1242 = vmatprep.subr.mxu0 0.0
      %1243 = vmatpush1.msra.mxu0 0.0
      %1244 = vmatprep.subr.mxu0 0.0
      %1245 = vmatpush1.msra.mxu0 0.0
      %1246 = vmatprep.subr.mxu0 %v1127
      %1247 = vmatpush1.msra.mxu0 %v1126
      %1248 = vmatprep.subr.mxu0 0.0
      %1249 = vmatpush2.msra.mxu0 0.0
      %1250 = vmatprep.subr.mxu0 0.0
      %1251 = vmatpush2.msra.mxu0 0.0
      %1252 = vmatprep.subr.mxu0 0.0
      %1253 = vmatpush2.msra.mxu0 0.0
      %1254 = vmatprep.subr.mxu0 0.0
      %1255 = vmatpush2.msra.mxu0 0.0
      %1256 = vmatprep.subr.mxu0 0.0
      %1257 = vmatpush2.msra.mxu0 0.0
      %1258 = vmatprep.subr.mxu0 0.0
      %1259 = vmatpush2.msra.mxu0 0.0
      %1260 = vmatprep.subr.mxu0 0.0
      %1261 = vmatpush2.msra.mxu0 0.0
      %1262 = vmatprep.subr.mxu0 0.0
      %1263 = vmatpush2.msra.mxu0 0.0
      %1264 = vmatprep.subr.mxu0 0.0
      %1265 = vmatpush2.msra.mxu0 0.0
      %1266 = vmatprep.subr.mxu0 0.0
      %1267 = vmatpush2.msra.mxu0 0.0
      %1268 = vmatprep.subr.mxu0 0.0
      %1269 = vmatpush2.msra.mxu0 0.0
      %1270 = vmatprep.subr.mxu0 0.0
      %1271 = vmatpush2.msra.mxu0 0.0
      %1272 = vmatprep.subr.mxu0 0.0
      %1273 = vmatpush2.msra.mxu0 0.0
      %1274 = vmatprep.subr.mxu0 0.0
      %1275 = vmatpush2.msra.mxu0 0.0
      %1276 = vmatprep.subr.mxu0 0.0
      %1277 = vmatpush2.msra.mxu0 0.0
      %1278 = vmatprep.subr.mxu0 0.0
      %1279 = vmatpush2.msra.mxu0 0.0
      %1280 = vmatprep.mubr.f32.mxu0 0.0
      %1281 = vmatmul.mubr.f32.gmra.mxu0 %v1143
      %v1282 = vpop.f32.mrf.mxu0
      %v1283 = vadd.f32 0.0, %v1282
      %v1284 = vpop.f32.mrf.mxu0
      %v1285 = vadd.f32 0.0, %v1284
      %1286 = vdwg.mxu0
      %1287 = vmatprep.subr.mxu0 0.0
      %1288 = vmatpush1.msra.mxu0 0.0
      %1289 = vmatprep.subr.mxu0 0.0
      %1290 = vmatpush1.msra.mxu0 0.0
      %1291 = vmatprep.subr.mxu0 0.0
      %1292 = vmatpush1.msra.mxu0 0.0
      %1293 = vmatprep.subr.mxu0 0.0
      %1294 = vmatpush1.msra.mxu0 0.0
      %1295 = vmatprep.subr.mxu0 0.0
      %1296 = vmatpush1.msra.mxu0 0.0
      %1297 = vmatprep.subr.mxu0 0.0
      %1298 = vmatpush1.msra.mxu0 0.0
      %1299 = vmatprep.subr.mxu0 0.0
      %1300 = vmatpush1.msra.mxu0 0.0
      %1301 = vmatprep.subr.mxu0 0.0
      %1302 = vmatpush1.msra.mxu0 0.0
      %1303 = vmatprep.subr.mxu0 0.0
      %1304 = vmatpush1.msra.mxu0 0.0
      %1305 = vmatprep.subr.mxu0 0.0
      %1306 = vmatpush1.msra.mxu0 0.0
      %1307 = vmatprep.subr.mxu0 0.0
      %1308 = vmatpush1.msra.mxu0 0.0
      %1309 = vmatprep.subr.mxu0 0.0
      %1310 = vmatpush1.msra.mxu0 0.0
      %1311 = vmatprep.subr.mxu0 0.0
      %1312 = vmatpush1.msra.mxu0 0.0
      %1313 = vmatprep.subr.mxu0 0.0
      %1314 = vmatpush1.msra.mxu0 0.0
      %1315 = vmatprep.subr.mxu0 0.0
      %1316 = vmatpush1.msra.mxu0 0.0
      %1317 = vmatprep.subr.mxu0 %v1129
      %1318 = vmatpush1.msra.mxu0 %v1128
      %1319 = vmatprep.subr.mxu0 0.0
      %1320 = vmatpush2.msra.mxu0 0.0
      %1321 = vmatprep.subr.mxu0 0.0
      %1322 = vmatpush2.msra.mxu0 0.0
      %1323 = vmatprep.subr.mxu0 0.0
      %1324 = vmatpush2.msra.mxu0 0.0
      %1325 = vmatprep.subr.mxu0 0.0
      %1326 = vmatpush2.msra.mxu0 0.0
      %1327 = vmatprep.subr.mxu0 0.0
      %1328 = vmatpush2.msra.mxu0 0.0
      %1329 = vmatprep.subr.mxu0 0.0
      %1330 = vmatpush2.msra.mxu0 0.0
      %1331 = vmatprep.subr.mxu0 0.0
      %1332 = vmatpush2.msra.mxu0 0.0
      %1333 = vmatprep.subr.mxu0 0.0
      %1334 = vmatpush2.msra.mxu0 0.0
      %1335 = vmatprep.subr.mxu0 0.0
      %1336 = vmatpush2.msra.mxu0 0.0
      %1337 = vmatprep.subr.mxu0 0.0
      %1338 = vmatpush2.msra.mxu0 0.0
      %1339 = vmatprep.subr.mxu0 0.0
      %1340 = vmatpush2.msra.mxu0 0.0
      %1341 = vmatprep.subr.mxu0 0.0
      %1342 = vmatpush2.msra.mxu0 0.0
      %1343 = vmatprep.subr.mxu0 0.0
      %1344 = vmatpush2.msra.mxu0 0.0
      %1345 = vmatprep.subr.mxu0 0.0
      %1346 = vmatpush2.msra.mxu0 0.0
      %1347 = vmatprep.subr.mxu0 0.0
      %1348 = vmatpush2.msra.mxu0 0.0
      %1349 = vmatprep.subr.mxu0 0.0
      %1350 = vmatpush2.msra.mxu0 0.0
      %1351 = vmatprep.mubr.f32.mxu0 0.0
      %1352 = vmatmul.mubr.f32.gmra.mxu0 %v1143
      %v1353 = vpop.f32.mrf.mxu0
      %v1354 = vadd.f32 0.0, %v1353
      %v1355 = vpop.f32.mrf.mxu0
      %v1356 = vadd.f32 0.0, %v1355
      %1357 = vdwg.mxu0
      %1358 = vmatprep.subr.mxu0 0.0
      %1359 = vmatpush1.msra.mxu0 0.0
      %1360 = vmatprep.subr.mxu0 0.0
      %1361 = vmatpush1.msra.mxu0 0.0
      %1362 = vmatprep.subr.mxu0 0.0
      %1363 = vmatpush1.msra.mxu0 0.0
      %1364 = vmatprep.subr.mxu0 0.0
      %1365 = vmatpush1.msra.mxu0 0.0
      %1366 = vmatprep.subr.mxu0 0.0
      %1367 = vmatpush1.msra.mxu0 0.0
      %1368 = vmatprep.subr.mxu0 0.0
      %1369 = vmatpush1.msra.mxu0 0.0
      %1370 = vmatprep.subr.mxu0 0.0
      %1371 = vmatpush1.msra.mxu0 0.0
      %1372 = vmatprep.subr.mxu0 0.0
      %1373 = vmatpush1.msra.mxu0 0.0
      %1374 = vmatprep.subr.mxu0 0.0
      %1375 = vmatpush1.msra.mxu0 0.0
      %1376 = vmatprep.subr.mxu0 0.0
      %1377 = vmatpush1.msra.mxu0 0.0
      %1378 = vmatprep.subr.mxu0 0.0
      %1379 = vmatpush1.msra.mxu0 0.0
      %1380 = vmatprep.subr.mxu0 0.0
      %1381 = vmatpush1.msra.mxu0 0.0
      %1382 = vmatprep.subr.mxu0 0.0
      %1383 = vmatpush1.msra.mxu0 0.0
      %1384 = vmatprep.subr.mxu0 0.0
      %1385 = vmatpush1.msra.mxu0 0.0
      %1386 = vmatprep.subr.mxu0 0.0
      %1387 = vmatpush1.msra.mxu0 0.0
      %1388 = vmatprep.subr.mxu0 %v1131
      %1389 = vmatpush1.msra.mxu0 %v1130
      %1390 = vmatprep.subr.mxu0 0.0
      %1391 = vmatpush2.msra.mxu0 0.0
      %1392 = vmatprep.subr.mxu0 0.0
      %1393 = vmatpush2.msra.mxu0 0.0
      %1394 = vmatprep.subr.mxu0 0.0
      %1395 = vmatpush2.msra.mxu0 0.0
      %1396 = vmatprep.subr.mxu0 0.0
      %1397 = vmatpush2.msra.mxu0 0.0
      %1398 = vmatprep.subr.mxu0 0.0
      %1399 = vmatpush2.msra.mxu0 0.0
      %1400 = vmatprep.subr.mxu0 0.0
      %1401 = vmatpush2.msra.mxu0 0.0
      %1402 = vmatprep.subr.mxu0 0.0
      %1403 = vmatpush2.msra.mxu0 0.0
      %1404 = vmatprep.subr.mxu0 0.0
      %1405 = vmatpush2.msra.mxu0 0.0
      %1406 = vmatprep.subr.mxu0 0.0
      %1407 = vmatpush2.msra.mxu0 0.0
      %1408 = vmatprep.subr.mxu0 0.0
      %1409 = vmatpush2.msra.mxu0 0.0
      %1410 = vmatprep.subr.mxu0 0.0
      %1411 = vmatpush2.msra.mxu0 0.0
      %1412 = vmatprep.subr.mxu0 0.0
      %1413 = vmatpush2.msra.mxu0 0.0
      %1414 = vmatprep.subr.mxu0 0.0
      %1415 = vmatpush2.msra.mxu0 0.0
      %1416 = vmatprep.subr.mxu0 0.0
      %1417 = vmatpush2.msra.mxu0 0.0
      %1418 = vmatprep.subr.mxu0 0.0
      %1419 = vmatpush2.msra.mxu0 0.0
      %1420 = vmatprep.subr.mxu0 0.0
      %1421 = vmatpush2.msra.mxu0 0.0
      %1422 = vmatprep.mubr.f32.mxu0 0.0
      %1423 = vmatmul.mubr.f32.gmra.mxu0 %v1143
      %v1424 = vpop.f32.mrf.mxu0
      %v1425 = vadd.f32 0.0, %v1424
      %v1426 = vpop.f32.mrf.mxu0
      %v1427 = vadd.f32 0.0, %v1426
      %1428 = vdwg.mxu0
      %1429 = vmatprep.subr.mxu0 0.0
      %1430 = vmatpush1.msra.mxu0 0.0
      %1431 = vmatprep.subr.mxu0 0.0
      %1432 = vmatpush1.msra.mxu0 0.0
      %1433 = vmatprep.subr.mxu0 0.0
      %1434 = vmatpush1.msra.mxu0 0.0
      %1435 = vmatprep.subr.mxu0 0.0
      %1436 = vmatpush1.msra.mxu0 0.0
      %1437 = vmatprep.subr.mxu0 0.0
      %1438 = vmatpush1.msra.mxu0 0.0
      %1439 = vmatprep.subr.mxu0 0.0
      %1440 = vmatpush1.msra.mxu0 0.0
      %1441 = vmatprep.subr.mxu0 0.0
      %1442 = vmatpush1.msra.mxu0 0.0
      %1443 = vmatprep.subr.mxu0 0.0
      %1444 = vmatpush1.msra.mxu0 0.0
      %1445 = vmatprep.subr.mxu0 0.0
      %1446 = vmatpush1.msra.mxu0 0.0
      %1447 = vmatprep.subr.mxu0 0.0
      %1448 = vmatpush1.msra.mxu0 0.0
      %1449 = vmatprep.subr.mxu0 0.0
      %1450 = vmatpush1.msra.mxu0 0.0
      %1451 = vmatprep.subr.mxu0 0.0
      %1452 = vmatpush1.msra.mxu0 0.0
      %1453 = vmatprep.subr.mxu0 0.0
      %1454 = vmatpush1.msra.mxu0 0.0
      %1455 = vmatprep.subr.mxu0 0.0
      %1456 = vmatpush1.msra.mxu0 0.0
      %1457 = vmatprep.subr.mxu0 0.0
      %1458 = vmatpush1.msra.mxu0 0.0
      %1459 = vmatprep.subr.mxu0 %v1133
      %1460 = vmatpush1.msra.mxu0 %v1132
      %1461 = vmatprep.subr.mxu0 0.0
      %1462 = vmatpush2.msra.mxu0 0.0
      %1463 = vmatprep.subr.mxu0 0.0
      %1464 = vmatpush2.msra.mxu0 0.0
      %1465 = vmatprep.subr.mxu0 0.0
      %1466 = vmatpush2.msra.mxu0 0.0
      %1467 = vmatprep.subr.mxu0 0.0
      %1468 = vmatpush2.msra.mxu0 0.0
      %1469 = vmatprep.subr.mxu0 0.0
      %1470 = vmatpush2.msra.mxu0 0.0
      %1471 = vmatprep.subr.mxu0 0.0
      %1472 = vmatpush2.msra.mxu0 0.0
      %1473 = vmatprep.subr.mxu0 0.0
      %1474 = vmatpush2.msra.mxu0 0.0
      %1475 = vmatprep.subr.mxu0 0.0
      %1476 = vmatpush2.msra.mxu0 0.0
      %1477 = vmatprep.subr.mxu0 0.0
      %1478 = vmatpush2.msra.mxu0 0.0
      %1479 = vmatprep.subr.mxu0 0.0
      %1480 = vmatpush2.msra.mxu0 0.0
      %1481 = vmatprep.subr.mxu0 0.0
      %1482 = vmatpush2.msra.mxu0 0.0
      %1483 = vmatprep.subr.mxu0 0.0
      %1484 = vmatpush2.msra.mxu0 0.0
      %1485 = vmatprep.subr.mxu0 0.0
      %1486 = vmatpush2.msra.mxu0 0.0
      %1487 = vmatprep.subr.mxu0 0.0
      %1488 = vmatpush2.msra.mxu0 0.0
      %1489 = vmatprep.subr.mxu0 0.0
      %1490 = vmatpush2.msra.mxu0 0.0
      %1491 = vmatprep.subr.mxu0 0.0
      %1492 = vmatpush2.msra.mxu0 0.0
      %1493 = vmatprep.mubr.f32.mxu0 0.0
      %1494 = vmatmul.mubr.f32.gmra.mxu0 %v1143
      %v1495 = vpop.f32.mrf.mxu0
      %v1496 = vadd.f32 0.0, %v1495
      %v1497 = vpop.f32.mrf.mxu0
      %v1498 = vadd.f32 0.0, %v1497
      %1499 = vdwg.mxu0
      %1500 = vmatprep.subr.mxu0 0.0
      %1501 = vmatpush1.msra.mxu0 0.0
      %1502 = vmatprep.subr.mxu0 0.0
      %1503 = vmatpush1.msra.mxu0 0.0
      %1504 = vmatprep.subr.mxu0 0.0
      %1505 = vmatpush1.msra.mxu0 0.0
      %1506 = vmatprep.subr.mxu0 0.0
      %1507 = vmatpush1.msra.mxu0 0.0
      %1508 = vmatprep.subr.mxu0 0.0
      %1509 = vmatpush1.msra.mxu0 0.0
      %1510 = vmatprep.subr.mxu0 0.0
      %1511 = vmatpush1.msra.mxu0 0.0
      %1512 = vmatprep.subr.mxu0 0.0
      %1513 = vmatpush1.msra.mxu0 0.0
      %1514 = vmatprep.subr.mxu0 0.0
      %1515 = vmatpush1.msra.mxu0 0.0
      %1516 = vmatprep.subr.mxu0 0.0
      %1517 = vmatpush1.msra.mxu0 0.0
      %1518 = vmatprep.subr.mxu0 0.0
      %1519 = vmatpush1.msra.mxu0 0.0
      %1520 = vmatprep.subr.mxu0 0.0
      %1521 = vmatpush1.msra.mxu0 0.0
      %1522 = vmatprep.subr.mxu0 0.0
      %1523 = vmatpush1.msra.mxu0 0.0
      %1524 = vmatprep.subr.mxu0 0.0
      %1525 = vmatpush1.msra.mxu0 0.0
      %1526 = vmatprep.subr.mxu0 0.0
      %1527 = vmatpush1.msra.mxu0 0.0
      %1528 = vmatprep.subr.mxu0 0.0
      %1529 = vmatpush1.msra.mxu0 0.0
      %1530 = vmatprep.subr.mxu0 %v1135
      %1531 = vmatpush1.msra.mxu0 %v1134
      %1532 = vmatprep.subr.mxu0 0.0
      %1533 = vmatpush2.msra.mxu0 0.0
      %1534 = vmatprep.subr.mxu0 0.0
      %1535 = vmatpush2.msra.mxu0 0.0
      %1536 = vmatprep.subr.mxu0 0.0
      %1537 = vmatpush2.msra.mxu0 0.0
      %1538 = vmatprep.subr.mxu0 0.0
      %1539 = vmatpush2.msra.mxu0 0.0
      %1540 = vmatprep.subr.mxu0 0.0
      %1541 = vmatpush2.msra.mxu0 0.0
      %1542 = vmatprep.subr.mxu0 0.0
      %1543 = vmatpush2.msra.mxu0 0.0
      %1544 = vmatprep.subr.mxu0 0.0
      %1545 = vmatpush2.msra.mxu0 0.0
      %1546 = vmatprep.subr.mxu0 0.0
      %1547 = vmatpush2.msra.mxu0 0.0
      %1548 = vmatprep.subr.mxu0 0.0
      %1549 = vmatpush2.msra.mxu0 0.0
      %1550 = vmatprep.subr.mxu0 0.0
      %1551 = vmatpush2.msra.mxu0 0.0
      %1552 = vmatprep.subr.mxu0 0.0
      %1553 = vmatpush2.msra.mxu0 0.0
      %1554 = vmatprep.subr.mxu0 0.0
      %1555 = vmatpush2.msra.mxu0 0.0
      %1556 = vmatprep.subr.mxu0 0.0
      %1557 = vmatpush2.msra.mxu0 0.0
      %1558 = vmatprep.subr.mxu0 0.0
      %1559 = vmatpush2.msra.mxu0 0.0
      %1560 = vmatprep.subr.mxu0 0.0
      %1561 = vmatpush2.msra.mxu0 0.0
      %1562 = vmatprep.subr.mxu0 0.0
      %1563 = vmatpush2.msra.mxu0 0.0
      %1564 = vmatprep.mubr.f32.mxu0 0.0
      %1565 = vmatmul.mubr.f32.gmra.mxu0 %v1143
      %v1566 = vpop.f32.mrf.mxu0
      %v1567 = vadd.f32 0.0, %v1566
      %v1568 = vpop.f32.mrf.mxu0
      %v1569 = vadd.f32 0.0, %v1568
      %1570 = vdwg.mxu0
      %1571 = vmatprep.subr.mxu0 0.0
      %1572 = vmatpush1.msra.mxu0 0.0
      %1573 = vmatprep.subr.mxu0 0.0
      %1574 = vmatpush1.msra.mxu0 0.0
      %1575 = vmatprep.subr.mxu0 0.0
      %1576 = vmatpush1.msra.mxu0 0.0
      %1577 = vmatprep.subr.mxu0 0.0
      %1578 = vmatpush1.msra.mxu0 0.0
      %1579 = vmatprep.subr.mxu0 0.0
      %1580 = vmatpush1.msra.mxu0 0.0
      %1581 = vmatprep.subr.mxu0 0.0
      %1582 = vmatpush1.msra.mxu0 0.0
      %1583 = vmatprep.subr.mxu0 0.0
      %1584 = vmatpush1.msra.mxu0 0.0
      %1585 = vmatprep.subr.mxu0 0.0
      %1586 = vmatpush1.msra.mxu0 0.0
      %1587 = vmatprep.subr.mxu0 0.0
      %1588 = vmatpush1.msra.mxu0 0.0
      %1589 = vmatprep.subr.mxu0 0.0
      %1590 = vmatpush1.msra.mxu0 0.0
      %1591 = vmatprep.subr.mxu0 0.0
      %1592 = vmatpush1.msra.mxu0 0.0
      %1593 = vmatprep.subr.mxu0 0.0
      %1594 = vmatpush1.msra.mxu0 0.0
      %1595 = vmatprep.subr.mxu0 0.0
      %1596 = vmatpush1.msra.mxu0 0.0
      %1597 = vmatprep.subr.mxu0 0.0
      %1598 = vmatpush1.msra.mxu0 0.0
      %1599 = vmatprep.subr.mxu0 0.0
      %1600 = vmatpush1.msra.mxu0 0.0
      %1601 = vmatprep.subr.mxu0 %v1137
      %1602 = vmatpush1.msra.mxu0 %v1136
      %1603 = vmatprep.subr.mxu0 0.0
      %1604 = vmatpush2.msra.mxu0 0.0
      %1605 = vmatprep.subr.mxu0 0.0
      %1606 = vmatpush2.msra.mxu0 0.0
      %1607 = vmatprep.subr.mxu0 0.0
      %1608 = vmatpush2.msra.mxu0 0.0
      %1609 = vmatprep.subr.mxu0 0.0
      %1610 = vmatpush2.msra.mxu0 0.0
      %1611 = vmatprep.subr.mxu0 0.0
      %1612 = vmatpush2.msra.mxu0 0.0
      %1613 = vmatprep.subr.mxu0 0.0
      %1614 = vmatpush2.msra.mxu0 0.0
      %1615 = vmatprep.subr.mxu0 0.0
      %1616 = vmatpush2.msra.mxu0 0.0
      %1617 = vmatprep.subr.mxu0 0.0
      %1618 = vmatpush2.msra.mxu0 0.0
      %1619 = vmatprep.subr.mxu0 0.0
      %1620 = vmatpush2.msra.mxu0 0.0
      %1621 = vmatprep.subr.mxu0 0.0
      %1622 = vmatpush2.msra.mxu0 0.0
      %1623 = vmatprep.subr.mxu0 0.0
      %1624 = vmatpush2.msra.mxu0 0.0
      %1625 = vmatprep.subr.mxu0 0.0
      %1626 = vmatpush2.msra.mxu0 0.0
      %1627 = vmatprep.subr.mxu0 0.0
      %1628 = vmatpush2.msra.mxu0 0.0
      %1629 = vmatprep.subr.mxu0 0.0
      %1630 = vmatpush2.msra.mxu0 0.0
      %1631 = vmatprep.subr.mxu0 0.0
      %1632 = vmatpush2.msra.mxu0 0.0
      %1633 = vmatprep.subr.mxu0 0.0
      %1634 = vmatpush2.msra.mxu0 0.0
      %1635 = vmatprep.mubr.f32.mxu0 0.0
      %1636 = vmatmul.mubr.f32.gmra.mxu0 %v1143
      %v1637 = vpop.f32.mrf.mxu0
      %v1638 = vadd.f32 0.0, %v1637
      %v1639 = vpop.f32.mrf.mxu0
      %v1640 = vadd.f32 0.0, %v1639
      %1641 = vdwg.mxu0
      %1642 = vmatprep.subr.mxu0 0.0
      %1643 = vmatpush1.msra.mxu0 0.0
      %1644 = vmatprep.subr.mxu0 0.0
      %1645 = vmatpush1.msra.mxu0 0.0
      %1646 = vmatprep.subr.mxu0 0.0
      %1647 = vmatpush1.msra.mxu0 0.0
      %1648 = vmatprep.subr.mxu0 0.0
      %1649 = vmatpush1.msra.mxu0 0.0
      %1650 = vmatprep.subr.mxu0 0.0
      %1651 = vmatpush1.msra.mxu0 0.0
      %1652 = vmatprep.subr.mxu0 0.0
      %1653 = vmatpush1.msra.mxu0 0.0
      %1654 = vmatprep.subr.mxu0 0.0
      %1655 = vmatpush1.msra.mxu0 0.0
      %1656 = vmatprep.subr.mxu0 0.0
      %1657 = vmatpush1.msra.mxu0 0.0
      %1658 = vmatprep.subr.mxu0 0.0
      %1659 = vmatpush1.msra.mxu0 0.0
      %1660 = vmatprep.subr.mxu0 0.0
      %1661 = vmatpush1.msra.mxu0 0.0
      %1662 = vmatprep.subr.mxu0 0.0
      %1663 = vmatpush1.msra.mxu0 0.0
      %1664 = vmatprep.subr.mxu0 0.0
      %1665 = vmatpush1.msra.mxu0 0.0
      %1666 = vmatprep.subr.mxu0 0.0
      %1667 = vmatpush1.msra.mxu0 0.0
      %1668 = vmatprep.subr.mxu0 0.0
      %1669 = vmatpush1.msra.mxu0 0.0
      %1670 = vmatprep.subr.mxu0 0.0
      %1671 = vmatpush1.msra.mxu0 0.0
      %1672 = vmatprep.subr.mxu0 %v1139
      %1673 = vmatpush1.msra.mxu0 %v1138
      %1674 = vmatprep.subr.mxu0 0.0
      %1675 = vmatpush2.msra.mxu0 0.0
      %1676 = vmatprep.subr.mxu0 0.0
      %1677 = vmatpush2.msra.mxu0 0.0
      %1678 = vmatprep.subr.mxu0 0.0
      %1679 = vmatpush2.msra.mxu0 0.0
      %1680 = vmatprep.subr.mxu0 0.0
      %1681 = vmatpush2.msra.mxu0 0.0
      %1682 = vmatprep.subr.mxu0 0.0
      %1683 = vmatpush2.msra.mxu0 0.0
      %1684 = vmatprep.subr.mxu0 0.0
      %1685 = vmatpush2.msra.mxu0 0.0
      %1686 = vmatprep.subr.mxu0 0.0
      %1687 = vmatpush2.msra.mxu0 0.0
      %1688 = vmatprep.subr.mxu0 0.0
      %1689 = vmatpush2.msra.mxu0 0.0
      %1690 = vmatprep.subr.mxu0 0.0
      %1691 = vmatpush2.msra.mxu0 0.0
      %1692 = vmatprep.subr.mxu0 0.0
      %1693 = vmatpush2.msra.mxu0 0.0
      %1694 = vmatprep.subr.mxu0 0.0
      %1695 = vmatpush2.msra.mxu0 0.0
      %1696 = vmatprep.subr.mxu0 0.0
      %1697 = vmatpush2.msra.mxu0 0.0
      %1698 = vmatprep.subr.mxu0 0.0
      %1699 = vmatpush2.msra.mxu0 0.0
      %1700 = vmatprep.subr.mxu0 0.0
      %1701 = vmatpush2.msra.mxu0 0.0
      %1702 = vmatprep.subr.mxu0 0.0
      %1703 = vmatpush2.msra.mxu0 0.0
      %1704 = vmatprep.subr.mxu0 0.0
      %1705 = vmatpush2.msra.mxu0 0.0
      %1706 = vmatprep.mubr.f32.mxu0 0.0
      %1707 = vmatmul.mubr.f32.gmra.mxu0 %v1143
      %v1708 = vpop.f32.mrf.mxu0
      %v1709 = vadd.f32 0.0, %v1708
      %v1710 = vpop.f32.mrf.mxu0
      %v1711 = vadd.f32 0.0, %v1710
      %1712 = vdwg.mxu0
      %v1729 = vcombine.low %v1212, %v1214
      %v1730 = vcombine.low %v1283, %v1285
      %v1731 = vcombine.low %v1354, %v1356
      %v1732 = vcombine.low %v1425, %v1427
      %v1733 = vcombine.low %v1496, %v1498
      %v1734 = vcombine.low %v1567, %v1569
      %v1735 = vcombine.low %v1638, %v1640
      %v1736 = vcombine.low %v1709, %v1711
      %1745 = vst [vmem:[%s386] sm:$0xff] %v1729
      %1746 = vst [vmem:[%s386 + $0x8] sm:$0xff] %v1730
      %1747 = vst [vmem:[%s386 + $0x10] sm:$0xff] %v1731
      %1748 = vst [vmem:[%s386 + $0x18] sm:$0xff] %v1732
      %1749 = vst [vmem:[%s386 + $0x20] sm:$0xff] %v1733
      %1750 = vst [vmem:[%s386 + $0x28] sm:$0xff] %v1734
      %1751 = vst [vmem:[%s386 + $0x30] sm:$0xff] %v1735
      %1752 = vst [vmem:[%s386 + $0x38] sm:$0xff] %v1736
      %v1753 = vld [vmem:[%s394] sm:$0xf]
      %v1754 = vsel %vm441, %v1212, 0.0
      %v1755 = vsel %vm441, %v1214, 0.0
      %v1756 = vadd.f32 %v1754, %v1755
      %v1757 = vsel %vm441, %v1283, 0.0
      %v1758 = vadd.f32 %v1756, %v1757
      %v1759 = vsel %vm441, %v1285, 0.0
      %v1760 = vadd.f32 %v1758, %v1759
      %v1761 = vsel %vm441, %v1354, 0.0
      %v1762 = vadd.f32 %v1760, %v1761
      %v1763 = vsel %vm441, %v1356, 0.0
      %v1764 = vadd.f32 %v1762, %v1763
      %v1765 = vsel %vm441, %v1425, 0.0
      %v1766 = vadd.f32 %v1764, %v1765
      %v1767 = vsel %vm441, %v1427, 0.0
      %v1768 = vadd.f32 %v1766, %v1767
      %v1769 = vsel %vm441, %v1496, 0.0
      %v1770 = vadd.f32 %v1768, %v1769
      %v1771 = vsel %vm441, %v1498, 0.0
      %v1772 = vadd.f32 %v1770, %v1771
      %v1773 = vsel %vm441, %v1567, 0.0
      %v1774 = vadd.f32 %v1772, %v1773
      %v1775 = vsel %vm441, %v1569, 0.0
      %v1776 = vadd.f32 %v1774, %v1775
      %v1777 = vsel %vm441, %v1638, 0.0
      %v1778 = vadd.f32 %v1776, %v1777
      %v1779 = vsel %vm441, %v1640, 0.0
      %v1780 = vadd.f32 %v1778, %v1779
      %v1781 = vsel %vm441, %v1709, 0.0
      %v1782 = vadd.f32 %v1780, %v1781
      %v1783 = vsel %vm441, %v1711, 0.0
      %v1784 = vadd.f32 %v1782, %v1783
      %1785 = vadd.xlane.f32.xlu0 %v1784
      %v1786 = vpop.xlane.xlu0 %1785
      %v1787 = vadd.f32 %v1753, %v1786
      %vm1788 = vcmask 3072
      %1789 = vst.msk [vmem:[%s394] sm:$0xf] %vm1788, %v1787
      %v1790 = vld [vmem:[%s402] sm:$0xf]
      %v1791 = vmul.f32 %v1212, %v1212
      %v1792 = vmul.f32 %v1214, %v1214
      %v1793 = vmul.f32 %v1283, %v1283
      %v1794 = vmul.f32 %v1285, %v1285
      %v1795 = vmul.f32 %v1354, %v1354
      %v1796 = vmul.f32 %v1356, %v1356
      %v1797 = vmul.f32 %v1425, %v1425
      %v1798 = vmul.f32 %v1427, %v1427
      %v1799 = vmul.f32 %v1496, %v1496
      %v1800 = vmul.f32 %v1498, %v1498
      %v1801 = vmul.f32 %v1567, %v1567
      %v1802 = vmul.f32 %v1569, %v1569
      %v1803 = vmul.f32 %v1638, %v1638
      %v1804 = vmul.f32 %v1640, %v1640
      %v1805 = vmul.f32 %v1709, %v1709
      %v1806 = vmul.f32 %v1711, %v1711
      %v1807 = vsel %vm441, %v1791, 0.0
      %v1808 = vsel %vm441, %v1792, 0.0
      %v1809 = vadd.f32 %v1807, %v1808
      %v1810 = vsel %vm441, %v1793, 0.0
      %v1811 = vadd.f32 %v1809, %v1810
      %v1812 = vsel %vm441, %v1794, 0.0
      %v1813 = vadd.f32 %v1811, %v1812
      %v1814 = vsel %vm441, %v1795, 0.0
      %v1815 = vadd.f32 %v1813, %v1814
      %v1816 = vsel %vm441, %v1796, 0.0
      %v1817 = vadd.f32 %v1815, %v1816
      %v1818 = vsel %vm441, %v1797, 0.0
      %v1819 = vadd.f32 %v1817, %v1818
      %v1820 = vsel %vm441, %v1798, 0.0
      %v1821 = vadd.f32 %v1819, %v1820
      %v1822 = vsel %vm441, %v1799, 0.0
      %v1823 = vadd.f32 %v1821, %v1822
      %v1824 = vsel %vm441, %v1800, 0.0
      %v1825 = vadd.f32 %v1823, %v1824
      %v1826 = vsel %vm441, %v1801, 0.0
      %v1827 = vadd.f32 %v1825, %v1826
      %v1828 = vsel %vm441, %v1802, 0.0
      %v1829 = vadd.f32 %v1827, %v1828
      %v1830 = vsel %vm441, %v1803, 0.0
      %v1831 = vadd.f32 %v1829, %v1830
      %v1832 = vsel %vm441, %v1804, 0.0
      %v1833 = vadd.f32 %v1831, %v1832
      %v1834 = vsel %vm441, %v1805, 0.0
      %v1835 = vadd.f32 %v1833, %v1834
      %v1836 = vsel %vm441, %v1806, 0.0
      %v1837 = vadd.f32 %v1835, %v1836
      %1838 = vadd.xlane.f32.xlu0 %v1837
      %v1839 = vpop.xlane.xlu0 %1838
      %v1840 = vadd.f32 %v1790, %v1839
      %1841 = vst.msk [vmem:[%s402] sm:$0xf] %vm1788, %v1840
      %s1842 = sadd.s32 %s25, %s27
      %s1843 = smul.u32 16, %s1842
      %p1844 = scmp.lt.s32.totalorder %s26, 1
      %s1845 = scalar_select %p1844, %s26, 1
      %p1846 = scmp.lt.s32.totalorder %s1843, 15
      %s1847 = scalar_select %p1846, %s1843, 15
      %s1848 = smul.addr %s1845, 16
      %s1849 = sadd.s32 %s1847, %s1848
      %s1850 = smul.addr %s1849, 4
      %s1851 = scalar_lea.vmem %s6, %s1850
      %s1852 = smul.u32 %s25, 2
      %s1853 = sadd.s32 %s1852, %s26
      %p1854 = scmp.lt.s32.totalorder %s1853, 1
      %s1855 = scalar_select %p1854, %s1853, 1
      %s1856 = smul.addr %s1855, 4
      %s1857 = scalar_lea.vmem %s7, %s1856
      %s1858 = smul.u32 %s25, 2
      %s1859 = sadd.s32 %s1858, %s26
      %p1860 = scmp.lt.s32.totalorder %s1859, 1
      %s1861 = scalar_select %p1860, %s1859, 1
      %s1862 = smul.addr %s1861, 4
      %s1863 = scalar_lea.vmem %s8, %s1862
      // Predicated region
      $region49: #{mlp_forward.4} parent=43 // pred_check
        %p1864 = pneg %p196
      $region50: #{mlp_forward.4} parent=43 // pred_check_branch
        %1866 = sbr.rel (%p1864) target = $region52
      $region51: #{mlp_forward.4} parent=43 // pred_region
        %s1867 = sadd.s32 %s25, %s27
        %s1868 = smul.u32 16, %s1867
      $region52: #{mlp_forward.4} parent=43 // pred_fallthru
        _
      // Predicated region
      $region53: #{mlp_forward.4} parent=43 // pred_check
        %p1869 = pneg %p226
      $region54: #{mlp_forward.4} parent=43 // pred_check_branch
        %1871 = sbr.rel (%p1869) target = $region56
      $region55: #{mlp_forward.4} parent=43 // pred_region
        %s1872 = smul.u32 %s25, 2
        %s1873 = sadd.s32 %s1872, %s26
      $region56: #{mlp_forward.4} parent=43 // pred_fallthru
        _
      // Predicated region
      $region57: #{mlp_forward.4} parent=43 // pred_check
        %p1874 = pneg %p256
      $region58: #{mlp_forward.4} parent=43 // pred_check_branch
        %1876 = sbr.rel (%p1874) target = $region60
      $region59: #{mlp_forward.4} parent=43 // pred_region
        %s1877 = smul.u32 %s25, 2
        %s1878 = sadd.s32 %s1877, %s26
      $region60: #{mlp_forward.4} parent=43 // pred_fallthru
        _
    $region44: #{mlp_forward.4} parent=5 // pred_fallthru
      _
    %p1879 = scmp.le.s32.totalorder 2, %s15
    // Predicated region
    $region61: #{mlp_forward.4} parent=5 // pred_check
      %p1880 = pneg %p1879
    $region62: #{mlp_forward.4} parent=5 // pred_check_branch
      %1882 = sbr.rel (%p1880) target = $region64
    $region63: #{mlp_forward.4} parent=5 // pred_region
      %s1883 = ssub.s32 %s15, 2
      // Predicated region
      $region65: #{mlp_forward.4} parent=63 // pred_check
        %p1884 = pneg %p202
      $region66: #{mlp_forward.4} parent=63 // pred_check_branch
        %1886 = sbr.rel (%p1884) target = $region68
      $region67: #{mlp_forward.4} parent=63 // pred_region
        %s1887 = sadd.s32 %s28, %s30
        %s1888 = smul.u32 16, %s1887
        %p1889 = scmp.lt.s32.totalorder %s29, 1
        %s1890 = scalar_select %p1889, %s29, 1
        %p1891 = scmp.lt.s32.totalorder %s1888, 15
        %s1892 = scalar_select %p1891, %s1888, 15
        %s1893 = smul.addr %s1890, 16
        %s1894 = sadd.s32 %s1892, %s1893
        %s1895 = smul.addr %s1894, 4
        %s1896 = scalar_lea.vmem %s6, %s1895
      $region68: #{mlp_forward.4} parent=63 // pred_fallthru
        _
      // Predicated region
      $region69: #{mlp_forward.4} parent=63 // pred_check
        %p1897 = pneg %p232
      $region70: #{mlp_forward.4} parent=63 // pred_check_branch
        %1899 = sbr.rel (%p1897) target = $region72
      $region71: #{mlp_forward.4} parent=63 // pred_region
        %s1900 = smul.u32 %s28, 2
        %s1901 = sadd.s32 %s1900, %s29
        %p1902 = scmp.lt.s32.totalorder %s1901, 1
        %s1903 = scalar_select %p1902, %s1901, 1
        %s1904 = smul.addr %s1903, 4
        %s1905 = scalar_lea.vmem %s7, %s1904
      $region72: #{mlp_forward.4} parent=63 // pred_fallthru
        _
      // Predicated region
      $region73: #{mlp_forward.4} parent=63 // pred_check
        %p1906 = pneg %p262
      $region74: #{mlp_forward.4} parent=63 // pred_check_branch
        %1908 = sbr.rel (%p1906) target = $region76
      $region75: #{mlp_forward.4} parent=63 // pred_region
        %s1909 = smul.u32 %s28, 2
        %s1910 = sadd.s32 %s1909, %s29
        %p1911 = scmp.lt.s32.totalorder %s1910, 1
        %s1912 = scalar_select %p1911, %s1910, 1
        %s1913 = smul.addr %s1912, 4
        %s1914 = scalar_lea.vmem %s8, %s1913
      $region76: #{mlp_forward.4} parent=63 // pred_fallthru
        _
    $region64: #{mlp_forward.4} parent=5 // pred_fallthru
      _
  $region6: #{mlp_forward.4} parent=0 // loop_footer
    %s19 = sadd.s32 1, %s15
  $region7: #{mlp_forward.4} parent=0 // loop_footer_branch
    %14 = sbr.rel target = $region3
  $region8: #{mlp_forward.4} parent=0 // loop_exit
    _

// kernel: mlp_forward.5
$region0: #{mlp_forward.5}
  #allocation0 [shape = 'u32[]', space=smem, size = 0x4, offset = 0x4, fixed_abs, tag = 'smem constant byte address 0x4 - core index']
  #allocation1 [shape = 'u32[144,128]{1,0:T(1,128)}', space=vmem, size = 0x12000, scoped, tag = 'internal scratch']
  %s0 = inlined_call_operand.vmem [shape: f32[2,4,2048], index: 0, kind: input, shape index: {}, may-alias: {0,3}]
  %s1 = inlined_call_operand.vmem [shape: f32[4,1], index: 1, kind: input, shape index: {}]
  %s2 = inlined_call_operand.vmem [shape: f32[4,1], index: 2, kind: input, shape index: {}]
  %s3 = inlined_call_operand.vmem [shape: f32[2,4,2048], index: 3, kind: output, shape index: {}, may-alias: {0,3}]
  %s4 = sld [smem:[#allocation0]]
  $region45: #{mlp_forward.5} parent=0
    _
  %s6 = ssub.s32 1, %s4
  %s7 = scalar_select 0, %s6, %s4
  loop: start=0, step=1, limit=4
  $region2: #{mlp_forward.5} parent=0 // loop_pre_header
    _
  $region3: #{mlp_forward.5} parent=0 // loop_header
    %s9 = sphi 0, %s13
    %p10 = scmp.ge.s32.totalorder %s9, 4
    %s16 = sphi 0, %s28
    %s17 = sphi 0, %s24
    %s18 = sphi 0, %s16
    %s19 = sphi 0, %s17
    %s20 = sphi 0, %s18
    %s21 = sphi 0, %s19
    %s33 = sphi 0, %s35
    %s36 = sphi 0, %s33
    %s37 = sphi 0, %s36
    %s53 = sphi 0, %s37
    %s57 = sphi 0, %s57
    %s59 = sphi 0, %s57
    %s60 = sphi 0, %s59
    %s74 = sphi 0, %s60
    %s78 = sphi 0, %s78
    %s80 = sphi 0, %s78
    %s81 = sphi 0, %s80
    %s95 = sphi 0, %s81
    %s103 = sphi 0, %s105
    %s106 = sphi 0, %s103
    %s107 = sphi 0, %s106
    %s123 = sphi 0, %s107
  $region4: #{mlp_forward.5} parent=0 // loop_header_branch
    %12 = sbr.rel (%p10) target = $region8
  $region5: #{mlp_forward.5} parent=0 // loop_body
    %s14 = ssub.s32 %s9, 1
    %s15 = ssub.s32 %s9, 2
    %s22 = sadd.s32 1, %s17
    %p23 = scmp.ge.s32.totalorder %s22, 1
    %s24 = scalar_select %p23, 0, %s22
    %s25 = sadd.s32 1, %s16
    %s26 = scalar_select %p23, %s25, %s16
    %p27 = scmp.ge.s32.totalorder %s26, 2
    %s28 = scalar_select %p27, 0, %s26
    %s29 = ssub.s32 %s16, %s28
    %s30 = ssub.s32 %s17, %s24
    %s31 = sor.u32 %s29, %s30
    %p32 = scmp.eq.s32.totalorder %s31, 0
    %s34 = sadd.s32 %s33, 1
    %s35 = scalar_select %p32, %s33, %s34
    %p38 = pneg %p32
    %p39 = scmp.eq.s32.totalorder %s9, 1
    %p40 = por %p38, %p39
    %p41 = scmp.ne.s32.totalorder %s33, %s36
    %p42 = scmp.eq.s32.totalorder %s9, 0
    %p43 = por %p41, %p42
    %p44 = scmp.ne.s32.totalorder %s33, %s36
    %p45 = scmp.eq.s32.totalorder %s14, 1
    %p46 = por %p44, %p45
    %p47 = scmp.ne.s32.totalorder %s36, %s37
    %p48 = scmp.eq.s32.totalorder %s14, 0
    %p49 = por %p47, %p48
    %p50 = scmp.ne.s32.totalorder %s36, %s37
    %p51 = scmp.eq.s32.totalorder %s15, 1
    %p52 = por %p50, %p51
    %p54 = scmp.ne.s32.totalorder %s37, %s53
    %p55 = scmp.eq.s32.totalorder %s15, 0
    %p56 = por %p54, %p55
    %s58 = sadd.s32 %s57, 1
    %p61 = scmp.eq.s32.totalorder %s9, 1
    %p62 = scmp.ne.s32.totalorder %s57, %s59
    %p63 = scmp.eq.s32.totalorder %s9, 0
    %p64 = por %p62, %p63
    %p65 = scmp.ne.s32.totalorder %s57, %s59
    %p66 = scmp.eq.s32.totalorder %s14, 1
    %p67 = por %p65, %p66
    %p68 = scmp.ne.s32.totalorder %s59, %s60
    %p69 = scmp.eq.s32.totalorder %s14, 0
    %p70 = por %p68, %p69
    %p71 = scmp.ne.s32.totalorder %s59, %s60
    %p72 = scmp.eq.s32.totalorder %s15, 1
    %p73 = por %p71, %p72
    %p75 = scmp.ne.s32.totalorder %s60, %s74
    %p76 = scmp.eq.s32.totalorder %s15, 0
    %p77 = por %p75, %p76
    %s79 = sadd.s32 %s78, 1
    %p82 = scmp.eq.s32.totalorder %s9, 1
    %p83 = scmp.ne.s32.totalorder %s78, %s80
    %p84 = scmp.eq.s32.totalorder %s9, 0
    %p85 = por %p83, %p84
    %p86 = scmp.ne.s32.totalorder %s78, %s80
    %p87 = scmp.eq.s32.totalorder %s14, 1
    %p88 = por %p86, %p87
    %p89 = scmp.ne.s32.totalorder %s80, %s81
    %p90 = scmp.eq.s32.totalorder %s14, 0
    %p91 = por %p89, %p90
    %p92 = scmp.ne.s32.totalorder %s80, %s81
    %p93 = scmp.eq.s32.totalorder %s15, 1
    %p94 = por %p92, %p93
    %p96 = scmp.ne.s32.totalorder %s81, %s95
    %p97 = scmp.eq.s32.totalorder %s15, 0
    %p98 = por %p96, %p97
    %s99 = ssub.s32 %s16, %s28
    %s100 = ssub.s32 %s17, %s24
    %s101 = sor.u32 %s99, %s100
    %p102 = scmp.eq.s32.totalorder %s101, 0
    %s104 = sadd.s32 %s103, 1
    %s105 = scalar_select %p102, %s103, %s104
    %p108 = pneg %p102
    %p109 = scmp.eq.s32.totalorder %s9, 1
    %p110 = por %p108, %p109
    %p111 = scmp.ne.s32.totalorder %s103, %s106
    %p112 = scmp.eq.s32.totalorder %s9, 0
    %p113 = por %p111, %p112
    %p114 = scmp.ne.s32.totalorder %s103, %s106
    %p115 = scmp.eq.s32.totalorder %s14, 1
    %p116 = por %p114, %p115
    %p117 = scmp.ne.s32.totalorder %s106, %s107
    %p118 = scmp.eq.s32.totalorder %s14, 0
    %p119 = por %p117, %p118
    %p120 = scmp.ne.s32.totalorder %s106, %s107
    %p121 = scmp.eq.s32.totalorder %s15, 1
    %p122 = por %p120, %p121
    %p124 = scmp.ne.s32.totalorder %s107, %s123
    %p125 = scmp.eq.s32.totalorder %s15, 0
    %p126 = por %p124, %p125
    %p127 = scmp.le.s32.totalorder 1, %s9
    %p128 = scmp.lt.s32.totalorder %s9, 3
    %p129 = pnand %p127, %p128
    %p130 = pneg %p129
    // Predicated region
    $region9: #{mlp_forward.5} parent=5 // pred_check
      _
    $region10: #{mlp_forward.5} parent=5 // pred_check_branch
      %132 = sbr.rel (%p129) target = $region12
    $region11: #{mlp_forward.5} parent=5 // pred_region
      %s133 = ssub.s32 %s9, 1
      // Predicated region
      $region13: #{mlp_forward.5} parent=11 // pred_check
        %p134 = pneg %p70
      $region14: #{mlp_forward.5} parent=11 // pred_check_branch
        %136 = sbr.rel (%p134) target = $region16
      $region15: #{mlp_forward.5} parent=11 // pred_region
        _
      $region16: #{mlp_forward.5} parent=11 // pred_fallthru
        _
      // Predicated region
      $region17: #{mlp_forward.5} parent=11 // pred_check
        %p137 = pneg %p91
      $region18: #{mlp_forward.5} parent=11 // pred_check_branch
        %139 = sbr.rel (%p137) target = $region20
      $region19: #{mlp_forward.5} parent=11 // pred_region
        _
      $region20: #{mlp_forward.5} parent=11 // pred_fallthru
        _
    $region12: #{mlp_forward.5} parent=5 // pred_fallthru
      _
    %p140 = scmp.lt.s32.totalorder %s9, 2
    // Predicated region
    $region21: #{mlp_forward.5} parent=5 // pred_check
      %p141 = pneg %p140
    $region22: #{mlp_forward.5} parent=5 // pred_check_branch
      %143 = sbr.rel (%p141) target = $region24
    $region23: #{mlp_forward.5} parent=5 // pred_region
      // Predicated region
      $region25: #{mlp_forward.5} parent=23 // pred_check
        %p144 = pneg %p43
      $region26: #{mlp_forward.5} parent=23 // pred_check_branch
        %146 = sbr.rel (%p144) target = $region28
      $region27: #{mlp_forward.5} parent=23 // pred_region
        %s147 = smul.u32 16, %s17
        %p148 = scmp.lt.s32.totalorder %s16, 1
        %s149 = scalar_select %p148, %s16, 1
        %p150 = scmp.lt.s32.totalorder %s147, 15
        %s151 = scalar_select %p150, %s147, 15
        %s152 = smul.addr %s149, 16
        %s153 = sadd.s32 %s151, %s152
        %s154 = smul.addr %s153, 4
        %s155 = scalar_lea.vmem %s0, %s154
        %s156 = smul.u32 16, %s17
      $region28: #{mlp_forward.5} parent=23 // pred_fallthru
        _
    $region24: #{mlp_forward.5} parent=5 // pred_fallthru
      _
    %p157 = scmp.le.s32.totalorder 1, %s9
    %p158 = scmp.lt.s32.totalorder %s9, 3
    %p159 = pnand %p157, %p158
    %p160 = pneg %p159
    // Predicated region
    $region29: #{mlp_forward.5} parent=5 // pred_check
      _
    $region30: #{mlp_forward.5} parent=5 // pred_check_branch
      %162 = sbr.rel (%p159) target = $region32
    $region31: #{mlp_forward.5} parent=5 // pred_region
      %s163 = ssub.s32 %s9, 1
      %s164 = smul.u32 16, %s19
      %p165 = scmp.lt.s32.totalorder %s18, 1
      %s166 = scalar_select %p165, %s18, 1
      %p167 = scmp.lt.s32.totalorder %s164, 15
      %s168 = scalar_select %p167, %s164, 15
      %s169 = smul.addr %s166, 16
      %s170 = sadd.s32 %s168, %s169
      %s171 = smul.addr %s170, 4
      %s172 = scalar_lea.vmem %s0, %s171
      %p173 = pneg %p49
      %p174 = pneg %p46
      %p175 = pneg %p70
      %p176 = pneg %p67
      %p177 = pneg %p91
      %p178 = pneg %p88
      %p179 = pneg %p119
      %p180 = pneg %p116
      %s181 = smul.u32 16, %s19
      %p182 = scmp.lt.s32.totalorder %s18, 1
      %s183 = scalar_select %p182, %s18, 1
      %p184 = scmp.lt.s32.totalorder %s181, 15
      %s185 = scalar_select %p184, %s181, 15
      %s186 = smul.addr %s183, 16
      %s187 = sadd.s32 %s185, %s186
      %s188 = smul.addr %s187, 4
      %s189 = scalar_lea.vmem %s3, %s188
      %s190 = smul.u32 16, %s19
      %p191 = scmp.lt.s32.totalorder %s18, 1
      %s192 = scalar_select %p191, %s18, 1
      %p193 = scmp.lt.s32.totalorder %s190, 15
      %s194 = scalar_select %p193, %s190, 15
      %s195 = smul.addr %s192, 16
      %s196 = sadd.s32 %s194, %s195
      %s197 = smul.addr %s196, 4
      %s198 = scalar_lea.vmem %s0, %s197
      %s199 = smul.u32 16, %s19
      %s200 = smul.u32 16, %s19
      %p201 = scmp.lt.s32.totalorder %s18, 1
      %s202 = scalar_select %p201, %s18, 1
      %p203 = scmp.lt.s32.totalorder %s200, 15
      %s204 = scalar_select %p203, %s200, 15
      %s205 = smul.addr %s202, 16
      %s206 = sadd.s32 %s204, %s205
      %s207 = smul.addr %s206, 4
      %s208 = scalar_lea.vmem %s3, %s207
      %s209 = smul.u32 16, %s19
      %v210 = vld [vmem:[%s198] sm:$0xff]
      %v211 = vld [vmem:[%s198 + $0x8] sm:$0xff]
      %v212 = vld [vmem:[%s198 + $0x10] sm:$0xff]
      %v213 = vld [vmem:[%s198 + $0x18] sm:$0xff]
      %v214 = vld [vmem:[%s198 + $0x20] sm:$0xff]
      %v215 = vld [vmem:[%s198 + $0x28] sm:$0xff]
      %v216 = vld [vmem:[%s198 + $0x30] sm:$0xff]
      %v217 = vld [vmem:[%s198 + $0x38] sm:$0xff]
      %v218 = vld [vmem:[%s1] sm:$0xf]
      %220 = vset.pattern.permute.xlu0 0
      %221 = vperm.xlu0 %220, %v218
      %v222 = vpop.permute.xlu0 %221
      %v232 = vcombine.high %v210, %v210
      %v233 = vcombine.high %v211, %v211
      %v234 = vcombine.high %v212, %v212
      %v235 = vcombine.high %v213, %v213
      %v236 = vcombine.high %v214, %v214
      %v237 = vcombine.high %v215, %v215
      %v238 = vcombine.high %v216, %v216
      %v239 = vcombine.high %v217, %v217
      %v248 = vmul.f32 %v222, %v210
      %v249 = vmul.f32 %v222, %v232
      %v250 = vmul.f32 %v222, %v211
      %v251 = vmul.f32 %v222, %v233
      %v252 = vmul.f32 %v222, %v212
      %v253 = vmul.f32 %v222, %v234
      %v254 = vmul.f32 %v222, %v213
      %v255 = vmul.f32 %v222, %v235
      %v256 = vmul.f32 %v222, %v214
      %v257 = vmul.f32 %v222, %v236
      %v258 = vmul.f32 %v222, %v215
      %v259 = vmul.f32 %v222, %v237
      %v260 = vmul.f32 %v222, %v216
      %v261 = vmul.f32 %v222, %v238
      %v262 = vmul.f32 %v222, %v217
      %v263 = vmul.f32 %v222, %v239
      %v264 = vld [vmem:[%s2] sm:$0xf]
      %266 = vset.pattern.permute.xlu0 0
      %267 = vperm.xlu0 %266, %v264
      %v268 = vpop.permute.xlu0 %267
      %v270 = vadd.f32 %v248, %v268
      %v271 = vadd.f32 %v249, %v268
      %v272 = vadd.f32 %v250, %v268
      %v273 = vadd.f32 %v251, %v268
      %v274 = vadd.f32 %v252, %v268
      %v275 = vadd.f32 %v253, %v268
      %v276 = vadd.f32 %v254, %v268
      %v277 = vadd.f32 %v255, %v268
      %v278 = vadd.f32 %v256, %v268
      %v279 = vadd.f32 %v257, %v268
      %v280 = vadd.f32 %v258, %v268
      %v281 = vadd.f32 %v259, %v268
      %v282 = vadd.f32 %v260, %v268
      %v283 = vadd.f32 %v261, %v268
      %v284 = vadd.f32 %v262, %v268
      %v285 = vadd.f32 %v263, %v268
      %v302 = vcombine.low %v270, %v271
      %v303 = vcombine.low %v272, %v273
      %v304 = vcombine.low %v274, %v275
      %v305 = vcombine.low %v276, %v277
      %v306 = vcombine.low %v278, %v279
      %v307 = vcombine.low %v280, %v281
      %v308 = vcombine.low %v282, %v283
      %v309 = vcombine.low %v284, %v285
      %318 = vst [vmem:[%s208] sm:$0xff] %v302
      %319 = vst [vmem:[%s208 + $0x8] sm:$0xff] %v303
      %320 = vst [vmem:[%s208 + $0x10] sm:$0xff] %v304
      %321 = vst [vmem:[%s208 + $0x18] sm:$0xff] %v305
      %322 = vst [vmem:[%s208 + $0x20] sm:$0xff] %v306
      %323 = vst [vmem:[%s208 + $0x28] sm:$0xff] %v307
      %324 = vst [vmem:[%s208 + $0x30] sm:$0xff] %v308
      %325 = vst [vmem:[%s208 + $0x38] sm:$0xff] %v309
      %s326 = smul.u32 16, %s19
      %p327 = scmp.lt.s32.totalorder %s18, 1
      %s328 = scalar_select %p327, %s18, 1
      %p329 = scmp.lt.s32.totalorder %s326, 15
      %s330 = scalar_select %p329, %s326, 15
      %s331 = smul.addr %s328, 16
      %s332 = sadd.s32 %s330, %s331
      %s333 = smul.addr %s332, 4
      %s334 = scalar_lea.vmem %s3, %s333
      // Predicated region
      $region33: #{mlp_forward.5} parent=31 // pred_check
        %p335 = pneg %p116
      $region34: #{mlp_forward.5} parent=31 // pred_check_branch
        %337 = sbr.rel (%p335) target = $region36
      $region35: #{mlp_forward.5} parent=31 // pred_region
        %s338 = smul.u32 16, %s19
      $region36: #{mlp_forward.5} parent=31 // pred_fallthru
        _
    $region32: #{mlp_forward.5} parent=5 // pred_fallthru
      _
    %p339 = scmp.le.s32.totalorder 2, %s9
    // Predicated region
    $region37: #{mlp_forward.5} parent=5 // pred_check
      %p340 = pneg %p339
    $region38: #{mlp_forward.5} parent=5 // pred_check_branch
      %342 = sbr.rel (%p340) target = $region40
    $region39: #{mlp_forward.5} parent=5 // pred_region
      %s343 = ssub.s32 %s9, 2
      // Predicated region
      $region41: #{mlp_forward.5} parent=39 // pred_check
        %p344 = pneg %p122
      $region42: #{mlp_forward.5} parent=39 // pred_check_branch
        %346 = sbr.rel (%p344) target = $region44
      $region43: #{mlp_forward.5} parent=39 // pred_region
        %s347 = smul.u32 16, %s21
        %p348 = scmp.lt.s32.totalorder %s20, 1
        %s349 = scalar_select %p348, %s20, 1
        %p350 = scmp.lt.s32.totalorder %s347, 15
        %s351 = scalar_select %p350, %s347, 15
        %s352 = smul.addr %s349, 16
        %s353 = sadd.s32 %s351, %s352
        %s354 = smul.addr %s353, 4
        %s355 = scalar_lea.vmem %s3, %s354
      $region44: #{mlp_forward.5} parent=39 // pred_fallthru
        _
    $region40: #{mlp_forward.5} parent=5 // pred_fallthru
      _
  $region6: #{mlp_forward.5} parent=0 // loop_footer
    %s13 = sadd.s32 1, %s9
  $region7: #{mlp_forward.5} parent=0 // loop_footer_branch
    %8 = sbr.rel target = $region3
  $region8: #{mlp_forward.5} parent=0 // loop_exit
    _

</llo_original>
